<compile_context>
chip_gen: v5e
topology: v5e:2x2
jax: 0.10.0
libtpu: 0.0.40
codegen_flags: <defaults>
</compile_context>

<pallas_src>
import numpy as np

import jax
import jax.numpy as jnp
from jax import lax
from jax.experimental import pallas as pl
from jax.experimental.pallas import tpu as pltpu  # noqa: F401  (TPU backend assumed)

# ----------------------------- model hyper-parameters (small, deterministic) -----------------
V = 64           # n_vocab
D = 32           # dim (hidden_size)
DEPTH = 2        # depth (num_hidden_layers / num mixer blocks)
L = 8            # length (tokenized_length == sequence length)
NH = 4           # llama num_attention_heads
HD = D // NH     # llama head_dim
FF = 4 * D       # intermediate_size / FeedForward inner dim
B = 2            # batch
NT = B * L       # total tokens

_RMS_EPS = 1e-6
_LN_EPS = 1e-5
_NEG = -1e30

_CT = (((1,), (1,)), ((), ()))   # x(M,K) · w(N,K)^T -> (M,N)   (PyTorch Linear)
_CN = (((1,), (0,)), ((), ()))   # a(M,K) · b(K,N)   -> (M,N)


def _matT(x, w):
    return lax.dot_general(x, w, _CT, preferred_element_type=jnp.float32)


def _mat(a, b):
    return lax.dot_general(a, b, _CN, preferred_element_type=jnp.float32)


def _rmsnorm(h, w):
    var = jnp.mean(h * h, axis=-1, keepdims=True)
    return h * lax.rsqrt(var + _RMS_EPS) * w


def _layernorm(h, g, b):
    mu = jnp.mean(h, axis=-1, keepdims=True)
    var = jnp.mean((h - mu) ** 2, axis=-1, keepdims=True)
    return (h - mu) * lax.rsqrt(var + _LN_EPS) * g + b


def _erf(x):
    # TODO(synk): Mosaic has no native erf lowering; Abramowitz–Stegun 7.1.26 (|err| < 1.5e-7,
    # i.e. exact within f32) using only exp/mul/add, all of which lower to VPU/EUP.
    a1, a2, a3, a4, a5 = 0.254829592, -0.284496736, 1.421413741, -1.453152027, 1.061405429
    p = 0.3275911
    sgn = jnp.where(x >= 0.0, 1.0, -1.0)
    ax = jnp.abs(x)
    t = 1.0 / (1.0 + p * ax)
    poly = ((((a5 * t + a4) * t + a3) * t + a2) * t + a1) * t
    return sgn * (1.0 - poly * jnp.exp(-ax * ax))


def _gelu(x):
    return 0.5 * x * (1.0 + _erf(x * 0.7071067811865476))


# ----------------------------- the single fused Pallas kernel --------------------------------
def _forward_kernel(ids_ref, labels_ref, embed_ref, cos_ref, sin_ref, rot_ref,
                    attn_bias_ref, sel_ref,
                    e_ln1, e_wqkv, e_wo, e_ln2, e_wgu, e_wd, e_norm,
                    d_ln1g, d_ln1b, d_conv_mat, d_conv_b, d_ln2g, d_ln2b,
                    d_ff1w, d_ff1b, d_ff2w, d_ff2b,
                    lm_head_ref,
                    loss_ref, logits_ref):
    ids = ids_ref[...]                                          # (NT, 1) int32
    labels = labels_ref[...]                                    # (NT, 1) int32
    vocab_iota = lax.broadcasted_iota(jnp.int32, (NT, V), 1)

    # ---- embedding (one-hot matmul keeps the gather on the MXU, inside the kernel) ----
    one_hot = (vocab_iota == ids).astype(jnp.float32)           # (NT, V)
    x = _mat(one_hot, embed_ref[...])                           # (NT, D)

    cos = cos_ref[...]                                          # (NT, D) per-head tiled
    sin = sin_ref[...]
    rot = rot_ref[...]                                          # (D, D) rotate-half matrix
    attn_bias = attn_bias_ref[...]                              # (NT, NT) causal + batch-block
    scale = HD ** -0.5

    # ---------------- encoder: Llama layers ----------------
    for layer in range(DEPTH):
        hn = _rmsnorm(x, e_ln1[layer])
        qkv = _matT(hn, e_wqkv[layer])                          # (NT, 3D) fused q/k/v proj
        q = qkv[:, :D]
        k = qkv[:, D:2 * D]
        v = qkv[:, 2 * D:]
        q = q * cos + _mat(q, rot) * sin                        # RoPE (rotate-half via matmul)
        k = k * cos + _mat(k, rot) * sin
        heads = []
        for h in range(NH):                                     # unrolled; both batches at once
            lo, hi = h * HD, (h + 1) * HD
            qh, kh, vh = q[:, lo:hi], k[:, lo:hi], v[:, lo:hi]
            s = _matT(qh, kh) * scale + attn_bias               # (NT, NT)
            m = jnp.max(s, axis=-1, keepdims=True)
            p = jnp.exp(s - m)
            den = jnp.sum(p, axis=-1, keepdims=True)
            heads.append(_mat(p, vh) / den)                     # (NT, HD)
        attn = jnp.concatenate(heads, axis=-1)                  # (NT, D)
        x = x + _matT(attn, e_wo[layer])

        hn = _rmsnorm(x, e_ln2[layer])
        gu = _matT(hn, e_wgu[layer])                            # (NT, 2*FF) fused gate/up
        g, u = gu[:, :FF], gu[:, FF:]
        x = x + _matT(g * jax.nn.sigmoid(g) * u, e_wd[layer])

    x = _rmsnorm(x, e_norm[...])

    # ---------------- bottleneck: last-token embedding repeated along the sequence ----------
    x = _mat(sel_ref[...], x)                                   # (NT, D)

    # ---------------- decoder: causal mixer blocks ----------------
    for layer in range(DEPTH):
        ln1 = _layernorm(x, d_ln1g[layer], d_ln1b[layer])
        y1 = _mat(d_conv_mat[layer], ln1) + d_conv_b[layer] + x     # tril token-mix + residual
        ln2 = _layernorm(y1, d_ln2g[layer], d_ln2b[layer])
        hmid = _gelu(_matT(ln2, d_ff1w[layer]) + d_ff1b[layer])     # (NT, FF)
        x = y1 + _matT(hmid, d_ff2w[layer]) + d_ff2b[layer]

    # ---------------- lm head + cross-entropy ----------------
    logits = _matT(x, lm_head_ref[...])                         # (NT, V)
    logits_ref[...] = logits
    m = jnp.max(logits, axis=-1, keepdims=True)
    lse = m + jnp.log(jnp.sum(jnp.exp(logits - m), axis=-1, keepdims=True))
    logp = logits - lse
    lab_oh = (vocab_iota == labels).astype(jnp.float32)
    nll = -jnp.sum(logp * lab_oh, axis=-1, keepdims=True)       # (NT, 1)
    loss_ref[...] = jnp.sum(nll, axis=0, keepdims=True) * (1.0 / NT)


# ----------------------------- static tables (RoPE, masks) ------------------------------------
def _static_tables():
    inv_freq = 1.0 / (10000.0 ** (np.arange(0, HD, 2, dtype=np.float32) / HD))
    pos = np.arange(L, dtype=np.float32)
    freqs = pos[:, None] * inv_freq[None, :]                    # (L, HD//2)
    emb = np.concatenate([freqs, freqs], axis=-1)               # (L, HD)
    cos = np.tile(np.cos(emb), (B, NH)).astype(np.float32)      # (NT, D)
    sin = np.tile(np.sin(emb), (B, NH)).astype(np.float32)

    rot = np.zeros((D, D), np.float32)                          # per-head rotate-half matrix
    for h in range(NH):
        for j in range(HD // 2):
            rot[h * HD + HD // 2 + j, h * HD + j] = -1.0        # out first half = -x2
            rot[h * HD + j, h * HD + HD // 2 + j] = 1.0         # out second half = x1

    r = np.arange(NT)[:, None]
    c = np.arange(NT)[None, :]
    valid = (r // L == c // L) & (c % L <= r % L)               # same batch, causal
    attn_bias = np.where(valid, 0.0, _NEG).astype(np.float32)   # (NT, NT)
    sel = (c == (r // L) * L + (L - 1)).astype(np.float32)      # pick last token of each batch

    return (jnp.asarray(cos), jnp.asarray(sin), jnp.asarray(rot),
            jnp.asarray(attn_bias), jnp.asarray(sel))


# ----------------------------- wrapper -----------------------------------------------------------
def forward(params, input_ids, labels):
    ids = input_ids.reshape(NT, 1).astype(jnp.int32)
    labs = labels.reshape(NT, 1).astype(jnp.int32)

    enc, dec = params['enc'], params['dec']

    # causal (tril) token-mixing conv as a block-diagonal (NT, NT) matrix — computed once here.
    tril_w = jnp.tril(dec['conv_w'])                                          # (DEPTH, L, L)
    eye_b = jnp.eye(B, dtype=jnp.float32)
    conv_mat = jnp.einsum('bc,dij->dbicj', eye_b, tril_w).reshape(DEPTH, NT, NT)
    conv_bias = jnp.tile(dec['conv_b'], (1, B)).reshape(DEPTH, NT, 1)

    loss, logits = pl.pallas_call(
        _forward_kernel,
        out_shape=(jax.ShapeDtypeStruct((1, 1), jnp.float32),
                   jax.ShapeDtypeStruct((NT, V), jnp.float32)),
    )(ids, labs, params['embed'], params['cos'], params['sin'], params['rot'],
      params['attn_bias'], params['sel'],
      enc['ln1'], enc['wqkv'], enc['wo'], enc['ln2'], enc['wgu'], enc['wd'], enc['norm'],
      dec['ln1_g'], dec['ln1_b'], conv_mat, conv_bias, dec['ln2_g'], dec['ln2_b'],
      dec['ff1_w'], dec['ff1_b'], dec['ff2_w'], dec['ff2_b'],
      params['lm_head'])

    output = logits.reshape(B, L, V).transpose(0, 2, 1)          # 'b t e -> b e t'
    return loss[0, 0], output


# ----------------------------- deterministic parameter init -----------------------------------
def init_params(key):
    def nrm(k, shape, scale=0.02):
        return scale * jax.random.normal(k, shape, dtype=jnp.float32)

    keys = iter(jax.random.split(key, 64))
    enc = {
        'ln1': jnp.ones((DEPTH, 1, D), jnp.float32),
        'wqkv': nrm(next(keys), (DEPTH, 3 * D, D)),     # wq;wk;wv stacked along out dim
        'wo': nrm(next(keys), (DEPTH, D, D)),
        'ln2': jnp.ones((DEPTH, 1, D), jnp.float32),
        'wgu': nrm(next(keys), (DEPTH, 2 * FF, D)),     # gate;up stacked along out dim
        'wd': nrm(next(keys), (DEPTH, D, FF)),
        'norm': jnp.ones((1, D), jnp.float32),
    }
    dec = {
        'ln1_g': jnp.ones((DEPTH, 1, D), jnp.float32),
        'ln1_b': jnp.zeros((DEPTH, 1, D), jnp.float32),
        'conv_w': nrm(next(keys), (DEPTH, L, L)),
        'conv_b': nrm(next(keys), (DEPTH, L)),
        'ln2_g': jnp.ones((DEPTH, 1, D), jnp.float32),
        'ln2_b': jnp.zeros((DEPTH, 1, D), jnp.float32),
        'ff1_w': nrm(next(keys), (DEPTH, FF, D)),
        'ff1_b': jnp.zeros((DEPTH, 1, FF), jnp.float32),
        'ff2_w': nrm(next(keys), (DEPTH, D, FF)),
        'ff2_b': jnp.zeros((DEPTH, 1, D), jnp.float32),
    }
    cos, sin, rot, attn_bias, sel = _static_tables()
    return {'embed': nrm(next(keys), (V, D)), 'enc': enc, 'dec': dec,
            'lm_head': nrm(next(keys), (V, D)),
            'cos': cos, 'sin': sin, 'rot': rot, 'attn_bias': attn_bias, 'sel': sel}


# ----------------------------- main ------------------------------------------------------------
if __name__ == "__main__":
    key = jax.random.PRNGKey(0)
    pkey, dkey = jax.random.split(key)
    params = init_params(pkey)
    input_ids = jax.random.randint(dkey, (B, L), 0, V, dtype=jnp.int32)
    labels = input_ids  # autoencoding objective

    loss, output = jax.jit(forward)(params, input_ids, labels)
    jax.block_until_ready((loss, output))

    assert output.shape == (B, V, L), output.shape
    assert bool(jnp.isfinite(loss)), float(loss)
    print("KERNEL_OK")
</pallas_src>

<mosaic_0001>
module attributes {stable_mosaic.version = 11 : i64} {
  func.func @_forward_kernel(%arg0: memref<16x1xi32, #tpu.memory_space<vmem>>, %arg1: memref<16x1xi32, #tpu.memory_space<vmem>>, %arg2: memref<64x32xf32, #tpu.memory_space<vmem>>, %arg3: memref<16x32xf32, #tpu.memory_space<vmem>>, %arg4: memref<16x32xf32, #tpu.memory_space<vmem>>, %arg5: memref<32x32xf32, #tpu.memory_space<vmem>>, %arg6: memref<16x16xf32, #tpu.memory_space<vmem>>, %arg7: memref<16x16xf32, #tpu.memory_space<vmem>>, %arg8: memref<2x1x32xf32, #tpu.memory_space<vmem>>, %arg9: memref<2x96x32xf32, #tpu.memory_space<vmem>>, %arg10: memref<2x32x32xf32, #tpu.memory_space<vmem>>, %arg11: memref<2x1x32xf32, #tpu.memory_space<vmem>>, %arg12: memref<2x256x32xf32, #tpu.memory_space<vmem>>, %arg13: memref<2x32x128xf32, #tpu.memory_space<vmem>>, %arg14: memref<1x32xf32, #tpu.memory_space<vmem>>, %arg15: memref<2x1x32xf32, #tpu.memory_space<vmem>>, %arg16: memref<2x1x32xf32, #tpu.memory_space<vmem>>, %arg17: memref<2x16x16xf32, #tpu.memory_space<vmem>>, %arg18: memref<2x16x1xf32, #tpu.memory_space<vmem>>, %arg19: memref<2x1x32xf32, #tpu.memory_space<vmem>>, %arg20: memref<2x1x32xf32, #tpu.memory_space<vmem>>, %arg21: memref<2x128x32xf32, #tpu.memory_space<vmem>>, %arg22: memref<2x1x128xf32, #tpu.memory_space<vmem>>, %arg23: memref<2x32x128xf32, #tpu.memory_space<vmem>>, %arg24: memref<2x1x32xf32, #tpu.memory_space<vmem>>, %arg25: memref<64x32xf32, #tpu.memory_space<vmem>>, %arg26: memref<1x1xf32, #tpu.memory_space<vmem>>, %arg27: memref<16x64xf32, #tpu.memory_space<vmem>>) attributes {dimension_semantics = [], scalar_prefetch = 0 : i64, scratch_operands = 0 : i64, tpu.core_type = #tpu.core_type<tc>} {
    %c0 = arith.constant 0 : index
    %c0_0 = arith.constant 0 : index
    %0 = vector.load %arg0[%c0, %c0_0] : memref<16x1xi32, #tpu.memory_space<vmem>>, vector<16x1xi32>
    %c0_1 = arith.constant 0 : index
    %c0_2 = arith.constant 0 : index
    %1 = vector.load %arg1[%c0_1, %c0_2] : memref<16x1xi32, #tpu.memory_space<vmem>>, vector<16x1xi32>
    %2 = tpu.iota {dimensions = array<i32: 1>} : vector<16x64xi32>
    %3 = vector.broadcast %0 : vector<16x1xi32> to vector<16x64xi32>
    %4 = arith.cmpi eq, %2, %3 : vector<16x64xi32>
    %5 = arith.extui %4 : vector<16x64xi1> to vector<16x64xi32>
    %6 = arith.sitofp %5 : vector<16x64xi32> to vector<16x64xf32>
    %c0_3 = arith.constant 0 : index
    %c0_4 = arith.constant 0 : index
    %7 = vector.load %arg2[%c0_3, %c0_4] : memref<64x32xf32, #tpu.memory_space<vmem>>, vector<64x32xf32>
    %cst = arith.constant dense<0.000000e+00> : vector<16x32xf32>
    %8 = tpu.matmul %6, %7, %cst {dimension_numbers = #tpu.dot_dimension_numbers<[1], [0], [0], [1], [0, 0, 1, 1], [], []>} : vector<16x64xf32>, vector<64x32xf32>, vector<16x32xf32> -> vector<16x32xf32>
    %c0_5 = arith.constant 0 : index
    %c0_6 = arith.constant 0 : index
    %9 = vector.load %arg3[%c0_5, %c0_6] : memref<16x32xf32, #tpu.memory_space<vmem>>, vector<16x32xf32>
    %c0_7 = arith.constant 0 : index
    %c0_8 = arith.constant 0 : index
    %10 = vector.load %arg4[%c0_7, %c0_8] : memref<16x32xf32, #tpu.memory_space<vmem>>, vector<16x32xf32>
    %c0_9 = arith.constant 0 : index
    %c0_10 = arith.constant 0 : index
    %11 = vector.load %arg5[%c0_9, %c0_10] : memref<32x32xf32, #tpu.memory_space<vmem>>, vector<32x32xf32>
    %c0_11 = arith.constant 0 : index
    %c0_12 = arith.constant 0 : index
    %12 = vector.load %arg6[%c0_11, %c0_12] : memref<16x16xf32, #tpu.memory_space<vmem>>, vector<16x16xf32>
    %c0_13 = arith.constant 0 : index
    %c0_14 = arith.constant 0 : index
    %c0_15 = arith.constant 0 : index
    %13 = vector.load %arg8[%c0_13, %c0_14, %c0_15] : memref<2x1x32xf32, #tpu.memory_space<vmem>>, vector<1x1x32xf32>
    %14 = vector.shape_cast %13 : vector<1x1x32xf32> to vector<1x32xf32>
    %15 = arith.mulf %8, %8 : vector<16x32xf32>
    %cst_16 = arith.constant dense<0.000000e+00> : vector<16xf32>
    %16 = vector.multi_reduction <add>, %15, %cst_16 [1] : vector<16x32xf32> to vector<16xf32>
    %17 = vector.shape_cast %16 : vector<16xf32> to vector<16x1xf32>
    %cst_17 = arith.constant 3.200000e+01 : f32
    %18 = vector.broadcast %cst_17 : f32 to vector<16x1xf32>
    %19 = arith.divf %17, %18 : vector<16x1xf32>
    %cst_18 = arith.constant 9.99999997E-7 : f32
    %20 = vector.broadcast %cst_18 : f32 to vector<16x1xf32>
    %21 = arith.addf %19, %20 : vector<16x1xf32>
    %22 = math.rsqrt %21 : vector<16x1xf32>
    %23 = vector.broadcast %22 : vector<16x1xf32> to vector<16x32xf32>
    %24 = arith.mulf %8, %23 : vector<16x32xf32>
    %25 = vector.broadcast %14 : vector<1x32xf32> to vector<16x32xf32>
    %26 = arith.mulf %24, %25 : vector<16x32xf32>
    %c0_19 = arith.constant 0 : index
    %c0_20 = arith.constant 0 : index
    %c0_21 = arith.constant 0 : index
    %27 = vector.load %arg9[%c0_19, %c0_20, %c0_21] : memref<2x96x32xf32, #tpu.memory_space<vmem>>, vector<1x96x32xf32>
    %28 = vector.shape_cast %27 : vector<1x96x32xf32> to vector<96x32xf32>
    %cst_22 = arith.constant dense<0.000000e+00> : vector<16x96xf32>
    %29 = tpu.matmul %26, %28, %cst_22 {dimension_numbers = #tpu.dot_dimension_numbers<[1], [1], [0], [0], [0, 0, 1, 0], [], []>} : vector<16x32xf32>, vector<96x32xf32>, vector<16x96xf32> -> vector<16x96xf32>
    %30 = vector.extract_strided_slice %29 {offsets = [0, 0], sizes = [16, 32], strides = [1, 1]} : vector<16x96xf32> to vector<16x32xf32>
    %31 = vector.extract_strided_slice %29 {offsets = [0, 32], sizes = [16, 32], strides = [1, 1]} : vector<16x96xf32> to vector<16x32xf32>
    %32 = vector.extract_strided_slice %29 {offsets = [0, 64], sizes = [16, 32], strides = [1, 1]} : vector<16x96xf32> to vector<16x32xf32>
    %33 = arith.mulf %30, %9 : vector<16x32xf32>
    %cst_23 = arith.constant dense<0.000000e+00> : vector<16x32xf32>
    %34 = tpu.matmul %30, %11, %cst_23 {dimension_numbers = #tpu.dot_dimension_numbers<[1], [0], [0], [1], [0, 0, 1, 1], [], []>} : vector<16x32xf32>, vector<32x32xf32>, vector<16x32xf32> -> vector<16x32xf32>
    %35 = arith.mulf %34, %10 : vector<16x32xf32>
    %36 = arith.addf %33, %35 : vector<16x32xf32>
    %37 = arith.mulf %31, %9 : vector<16x32xf32>
    %cst_24 = arith.constant dense<0.000000e+00> : vector<16x32xf32>
    %38 = tpu.matmul %31, %11, %cst_24 {dimension_numbers = #tpu.dot_dimension_numbers<[1], [0], [0], [1], [0, 0, 1, 1], [], []>} : vector<16x32xf32>, vector<32x32xf32>, vector<16x32xf32> -> vector<16x32xf32>
    %39 = arith.mulf %38, %10 : vector<16x32xf32>
    %40 = arith.addf %37, %39 : vector<16x32xf32>
    %41 = vector.extract_strided_slice %36 {offsets = [0, 0], sizes = [16, 8], strides = [1, 1]} : vector<16x32xf32> to vector<16x8xf32>
    %42 = vector.extract_strided_slice %40 {offsets = [0, 0], sizes = [16, 8], strides = [1, 1]} : vector<16x32xf32> to vector<16x8xf32>
    %43 = vector.extract_strided_slice %32 {offsets = [0, 0], sizes = [16, 8], strides = [1, 1]} : vector<16x32xf32> to vector<16x8xf32>
    %cst_25 = arith.constant dense<0.000000e+00> : vector<16x16xf32>
    %44 = tpu.matmul %41, %42, %cst_25 {dimension_numbers = #tpu.dot_dimension_numbers<[1], [1], [0], [0], [0, 0, 1, 0], [], []>} : vector<16x8xf32>, vector<16x8xf32>, vector<16x16xf32> -> vector<16x16xf32>
    %cst_26 = arith.constant 0.353553385 : f32
    %45 = vector.broadcast %cst_26 : f32 to vector<16x16xf32>
    %46 = arith.mulf %44, %45 : vector<16x16xf32>
    %47 = arith.addf %46, %12 : vector<16x16xf32>
    %cst_27 = arith.constant dense<0xFF800000> : vector<16xf32>
    %48 = vector.multi_reduction <maximumf>, %47, %cst_27 [1] : vector<16x16xf32> to vector<16xf32>
    %49 = vector.shape_cast %48 : vector<16xf32> to vector<16x1xf32>
    %50 = vector.broadcast %49 : vector<16x1xf32> to vector<16x16xf32>
    %51 = arith.subf %47, %50 : vector<16x16xf32>
    %52 = math.exp %51 : vector<16x16xf32>
    %cst_28 = arith.constant dense<0.000000e+00> : vector<16xf32>
    %53 = vector.multi_reduction <add>, %52, %cst_28 [1] : vector<16x16xf32> to vector<16xf32>
    %54 = vector.shape_cast %53 : vector<16xf32> to vector<16x1xf32>
    %cst_29 = arith.constant dense<0.000000e+00> : vector<16x8xf32>
    %55 = tpu.matmul %52, %43, %cst_29 {dimension_numbers = #tpu.dot_dimension_numbers<[1], [0], [0], [1], [0, 0, 1, 1], [], []>} : vector<16x16xf32>, vector<16x8xf32>, vector<16x8xf32> -> vector<16x8xf32>
    %56 = vector.broadcast %54 : vector<16x1xf32> to vector<16x8xf32>
    %57 = arith.divf %55, %56 : vector<16x8xf32>
    %58 = vector.extract_strided_slice %36 {offsets = [0, 8], sizes = [16, 8], strides = [1, 1]} : vector<16x32xf32> to vector<16x8xf32>
    %59 = vector.extract_strided_slice %40 {offsets = [0, 8], sizes = [16, 8], strides = [1, 1]} : vector<16x32xf32> to vector<16x8xf32>
    %60 = vector.extract_strided_slice %32 {offsets = [0, 8], sizes = [16, 8], strides = [1, 1]} : vector<16x32xf32> to vector<16x8xf32>
    %cst_30 = arith.constant dense<0.000000e+00> : vector<16x16xf32>
    %61 = tpu.matmul %58, %59, %cst_30 {dimension_numbers = #tpu.dot_dimension_numbers<[1], [1], [0], [0], [0, 0, 1, 0], [], []>} : vector<16x8xf32>, vector<16x8xf32>, vector<16x16xf32> -> vector<16x16xf32>
    %cst_31 = arith.constant 0.353553385 : f32
    %62 = vector.broadcast %cst_31 : f32 to vector<16x16xf32>
    %63 = arith.mulf %61, %62 : vector<16x16xf32>
    %64 = arith.addf %63, %12 : vector<16x16xf32>
    %cst_32 = arith.constant dense<0xFF800000> : vector<16xf32>
    %65 = vector.multi_reduction <maximumf>, %64, %cst_32 [1] : vector<16x16xf32> to vector<16xf32>
    %66 = vector.shape_cast %65 : vector<16xf32> to vector<16x1xf32>
    %67 = vector.broadcast %66 : vector<16x1xf32> to vector<16x16xf32>
    %68 = arith.subf %64, %67 : vector<16x16xf32>
    %69 = math.exp %68 : vector<16x16xf32>
    %cst_33 = arith.constant dense<0.000000e+00> : vector<16xf32>
    %70 = vector.multi_reduction <add>, %69, %cst_33 [1] : vector<16x16xf32> to vector<16xf32>
    %71 = vector.shape_cast %70 : vector<16xf32> to vector<16x1xf32>
    %cst_34 = arith.constant dense<0.000000e+00> : vector<16x8xf32>
    %72 = tpu.matmul %69, %60, %cst_34 {dimension_numbers = #tpu.dot_dimension_numbers<[1], [0], [0], [1], [0, 0, 1, 1], [], []>} : vector<16x16xf32>, vector<16x8xf32>, vector<16x8xf32> -> vector<16x8xf32>
    %73 = vector.broadcast %71 : vector<16x1xf32> to vector<16x8xf32>
    %74 = arith.divf %72, %73 : vector<16x8xf32>
    %75 = vector.extract_strided_slice %36 {offsets = [0, 16], sizes = [16, 8], strides = [1, 1]} : vector<16x32xf32> to vector<16x8xf32>
    %76 = vector.extract_strided_slice %40 {offsets = [0, 16], sizes = [16, 8], strides = [1, 1]} : vector<16x32xf32> to vector<16x8xf32>
    %77 = vector.extract_strided_slice %32 {offsets = [0, 16], sizes = [16, 8], strides = [1, 1]} : vector<16x32xf32> to vector<16x8xf32>
    %cst_35 = arith.constant dense<0.000000e+00> : vector<16x16xf32>
    %78 = tpu.matmul %75, %76, %cst_35 {dimension_numbers = #tpu.dot_dimension_numbers<[1], [1], [0], [0], [0, 0, 1, 0], [], []>} : vector<16x8xf32>, vector<16x8xf32>, vector<16x16xf32> -> vector<16x16xf32>
    %cst_36 = arith.constant 0.353553385 : f32
    %79 = vector.broadcast %cst_36 : f32 to vector<16x16xf32>
    %80 = arith.mulf %78, %79 : vector<16x16xf32>
    %81 = arith.addf %80, %12 : vector<16x16xf32>
    %cst_37 = arith.constant dense<0xFF800000> : vector<16xf32>
    %82 = vector.multi_reduction <maximumf>, %81, %cst_37 [1] : vector<16x16xf32> to vector<16xf32>
    %83 = vector.shape_cast %82 : vector<16xf32> to vector<16x1xf32>
    %84 = vector.broadcast %83 : vector<16x1xf32> to vector<16x16xf32>
    %85 = arith.subf %81, %84 : vector<16x16xf32>
    %86 = math.exp %85 : vector<16x16xf32>
    %cst_38 = arith.constant dense<0.000000e+00> : vector<16xf32>
    %87 = vector.multi_reduction <add>, %86, %cst_38 [1] : vector<16x16xf32> to vector<16xf32>
    %88 = vector.shape_cast %87 : vector<16xf32> to vector<16x1xf32>
    %cst_39 = arith.constant dense<0.000000e+00> : vector<16x8xf32>
    %89 = tpu.matmul %86, %77, %cst_39 {dimension_numbers = #tpu.dot_dimension_numbers<[1], [0], [0], [1], [0, 0, 1, 1], [], []>} : vector<16x16xf32>, vector<16x8xf32>, vector<16x8xf32> -> vector<16x8xf32>
    %90 = vector.broadcast %88 : vector<16x1xf32> to vector<16x8xf32>
    %91 = arith.divf %89, %90 : vector<16x8xf32>
    %92 = vector.extract_strided_slice %36 {offsets = [0, 24], sizes = [16, 8], strides = [1, 1]} : vector<16x32xf32> to vector<16x8xf32>
    %93 = vector.extract_strided_slice %40 {offsets = [0, 24], sizes = [16, 8], strides = [1, 1]} : vector<16x32xf32> to vector<16x8xf32>
    %94 = vector.extract_strided_slice %32 {offsets = [0, 24], sizes = [16, 8], strides = [1, 1]} : vector<16x32xf32> to vector<16x8xf32>
    %cst_40 = arith.constant dense<0.000000e+00> : vector<16x16xf32>
    %95 = tpu.matmul %92, %93, %cst_40 {dimension_numbers = #tpu.dot_dimension_numbers<[1], [1], [0], [0], [0, 0, 1, 0], [], []>} : vector<16x8xf32>, vector<16x8xf32>, vector<16x16xf32> -> vector<16x16xf32>
    %cst_41 = arith.constant 0.353553385 : f32
    %96 = vector.broadcast %cst_41 : f32 to vector<16x16xf32>
    %97 = arith.mulf %95, %96 : vector<16x16xf32>
    %98 = arith.addf %97, %12 : vector<16x16xf32>
    %cst_42 = arith.constant dense<0xFF800000> : vector<16xf32>
    %99 = vector.multi_reduction <maximumf>, %98, %cst_42 [1] : vector<16x16xf32> to vector<16xf32>
    %100 = vector.shape_cast %99 : vector<16xf32> to vector<16x1xf32>
    %101 = vector.broadcast %100 : vector<16x1xf32> to vector<16x16xf32>
    %102 = arith.subf %98, %101 : vector<16x16xf32>
    %103 = math.exp %102 : vector<16x16xf32>
    %cst_43 = arith.constant dense<0.000000e+00> : vector<16xf32>
    %104 = vector.multi_reduction <add>, %103, %cst_43 [1] : vector<16x16xf32> to vector<16xf32>
    %105 = vector.shape_cast %104 : vector<16xf32> to vector<16x1xf32>
    %cst_44 = arith.constant dense<0.000000e+00> : vector<16x8xf32>
    %106 = tpu.matmul %103, %94, %cst_44 {dimension_numbers = #tpu.dot_dimension_numbers<[1], [0], [0], [1], [0, 0, 1, 1], [], []>} : vector<16x16xf32>, vector<16x8xf32>, vector<16x8xf32> -> vector<16x8xf32>
    %107 = vector.broadcast %105 : vector<16x1xf32> to vector<16x8xf32>
    %108 = arith.divf %106, %107 : vector<16x8xf32>
    %109 = tpu.concatenate %57, %74, %91, %108 in 1 : vector<16x8xf32>, vector<16x8xf32>, vector<16x8xf32>, vector<16x8xf32> -> vector<16x32xf32>
    %c0_45 = arith.constant 0 : index
    %c0_46 = arith.constant 0 : index
    %c0_47 = arith.constant 0 : index
    %110 = vector.load %arg10[%c0_45, %c0_46, %c0_47] : memref<2x32x32xf32, #tpu.memory_space<vmem>>, vector<1x32x32xf32>
    %111 = vector.shape_cast %110 : vector<1x32x32xf32> to vector<32x32xf32>
    %cst_48 = arith.constant dense<0.000000e+00> : vector<16x32xf32>
    %112 = tpu.matmul %109, %111, %cst_48 {dimension_numbers = #tpu.dot_dimension_numbers<[1], [1], [0], [0], [0, 0, 1, 0], [], []>} : vector<16x32xf32>, vector<32x32xf32>, vector<16x32xf32> -> vector<16x32xf32>
    %113 = arith.addf %8, %112 : vector<16x32xf32>
    %c0_49 = arith.constant 0 : index
    %c0_50 = arith.constant 0 : index
    %c0_51 = arith.constant 0 : index
    %114 = vector.load %arg11[%c0_49, %c0_50, %c0_51] : memref<2x1x32xf32, #tpu.memory_space<vmem>>, vector<1x1x32xf32>
    %115 = vector.shape_cast %114 : vector<1x1x32xf32> to vector<1x32xf32>
    %116 = arith.mulf %113, %113 : vector<16x32xf32>
    %cst_52 = arith.constant dense<0.000000e+00> : vector<16xf32>
    %117 = vector.multi_reduction <add>, %116, %cst_52 [1] : vector<16x32xf32> to vector<16xf32>
    %118 = vector.shape_cast %117 : vector<16xf32> to vector<16x1xf32>
    %cst_53 = arith.constant 3.200000e+01 : f32
    %119 = vector.broadcast %cst_53 : f32 to vector<16x1xf32>
    %120 = arith.divf %118, %119 : vector<16x1xf32>
    %cst_54 = arith.constant 9.99999997E-7 : f32
    %121 = vector.broadcast %cst_54 : f32 to vector<16x1xf32>
    %122 = arith.addf %120, %121 : vector<16x1xf32>
    %123 = math.rsqrt %122 : vector<16x1xf32>
    %124 = vector.broadcast %123 : vector<16x1xf32> to vector<16x32xf32>
    %125 = arith.mulf %113, %124 : vector<16x32xf32>
    %126 = vector.broadcast %115 : vector<1x32xf32> to vector<16x32xf32>
    %127 = arith.mulf %125, %126 : vector<16x32xf32>
    %c0_55 = arith.constant 0 : index
    %c0_56 = arith.constant 0 : index
    %c0_57 = arith.constant 0 : index
    %128 = vector.load %arg12[%c0_55, %c0_56, %c0_57] : memref<2x256x32xf32, #tpu.memory_space<vmem>>, vector<1x256x32xf32>
    %129 = vector.shape_cast %128 : vector<1x256x32xf32> to vector<256x32xf32>
    %cst_58 = arith.constant dense<0.000000e+00> : vector<16x256xf32>
    %130 = tpu.matmul %127, %129, %cst_58 {dimension_numbers = #tpu.dot_dimension_numbers<[1], [1], [0], [0], [0, 0, 1, 0], [], []>} : vector<16x32xf32>, vector<256x32xf32>, vector<16x256xf32> -> vector<16x256xf32>
    %131 = vector.extract_strided_slice %130 {offsets = [0, 0], sizes = [16, 128], strides = [1, 1]} : vector<16x256xf32> to vector<16x128xf32>
    %132 = vector.extract_strided_slice %130 {offsets = [0, 128], sizes = [16, 128], strides = [1, 1]} : vector<16x256xf32> to vector<16x128xf32>
    %133 = arith.negf %131 : vector<16x128xf32>
    %134 = math.exp %133 : vector<16x128xf32>
    %cst_59 = arith.constant 1.000000e+00 : f32
    %135 = vector.broadcast %cst_59 : f32 to vector<16x128xf32>
    %136 = arith.addf %135, %134 : vector<16x128xf32>
    %137 = arith.divf %135, %136 : vector<16x128xf32>
    %138 = arith.mulf %131, %137 : vector<16x128xf32>
    %139 = arith.mulf %138, %132 : vector<16x128xf32>
    %c0_60 = arith.constant 0 : index
    %c0_61 = arith.constant 0 : index
    %c0_62 = arith.constant 0 : index
    %140 = vector.load %arg13[%c0_60, %c0_61, %c0_62] : memref<2x32x128xf32, #tpu.memory_space<vmem>>, vector<1x32x128xf32>
    %141 = vector.shape_cast %140 : vector<1x32x128xf32> to vector<32x128xf32>
    %cst_63 = arith.constant dense<0.000000e+00> : vector<16x32xf32>
    %142 = tpu.matmul %139, %141, %cst_63 {dimension_numbers = #tpu.dot_dimension_numbers<[1], [1], [0], [0], [0, 0, 1, 0], [], []>} : vector<16x128xf32>, vector<32x128xf32>, vector<16x32xf32> -> vector<16x32xf32>
    %143 = arith.addf %113, %142 : vector<16x32xf32>
    %c1 = arith.constant 1 : index
    %c0_64 = arith.constant 0 : index
    %c0_65 = arith.constant 0 : index
    %144 = vector.load %arg8[%c1, %c0_64, %c0_65] : memref<2x1x32xf32, #tpu.memory_space<vmem>>, vector<1x1x32xf32>
    %145 = vector.shape_cast %144 : vector<1x1x32xf32> to vector<1x32xf32>
    %146 = arith.mulf %143, %143 : vector<16x32xf32>
    %cst_66 = arith.constant dense<0.000000e+00> : vector<16xf32>
    %147 = vector.multi_reduction <add>, %146, %cst_66 [1] : vector<16x32xf32> to vector<16xf32>
    %148 = vector.shape_cast %147 : vector<16xf32> to vector<16x1xf32>
    %cst_67 = arith.constant 3.200000e+01 : f32
    %149 = vector.broadcast %cst_67 : f32 to vector<16x1xf32>
    %150 = arith.divf %148, %149 : vector<16x1xf32>
    %cst_68 = arith.constant 9.99999997E-7 : f32
    %151 = vector.broadcast %cst_68 : f32 to vector<16x1xf32>
    %152 = arith.addf %150, %151 : vector<16x1xf32>
    %153 = math.rsqrt %152 : vector<16x1xf32>
    %154 = vector.broadcast %153 : vector<16x1xf32> to vector<16x32xf32>
    %155 = arith.mulf %143, %154 : vector<16x32xf32>
    %156 = vector.broadcast %145 : vector<1x32xf32> to vector<16x32xf32>
    %157 = arith.mulf %155, %156 : vector<16x32xf32>
    %c1_69 = arith.constant 1 : index
    %c0_70 = arith.constant 0 : index
    %c0_71 = arith.constant 0 : index
    %158 = vector.load %arg9[%c1_69, %c0_70, %c0_71] : memref<2x96x32xf32, #tpu.memory_space<vmem>>, vector<1x96x32xf32>
    %159 = vector.shape_cast %158 : vector<1x96x32xf32> to vector<96x32xf32>
    %cst_72 = arith.constant dense<0.000000e+00> : vector<16x96xf32>
    %160 = tpu.matmul %157, %159, %cst_72 {dimension_numbers = #tpu.dot_dimension_numbers<[1], [1], [0], [0], [0, 0, 1, 0], [], []>} : vector<16x32xf32>, vector<96x32xf32>, vector<16x96xf32> -> vector<16x96xf32>
    %161 = vector.extract_strided_slice %160 {offsets = [0, 0], sizes = [16, 32], strides = [1, 1]} : vector<16x96xf32> to vector<16x32xf32>
    %162 = vector.extract_strided_slice %160 {offsets = [0, 32], sizes = [16, 32], strides = [1, 1]} : vector<16x96xf32> to vector<16x32xf32>
    %163 = vector.extract_strided_slice %160 {offsets = [0, 64], sizes = [16, 32], strides = [1, 1]} : vector<16x96xf32> to vector<16x32xf32>
    %164 = arith.mulf %161, %9 : vector<16x32xf32>
    %cst_73 = arith.constant dense<0.000000e+00> : vector<16x32xf32>
    %165 = tpu.matmul %161, %11, %cst_73 {dimension_numbers = #tpu.dot_dimension_numbers<[1], [0], [0], [1], [0, 0, 1, 1], [], []>} : vector<16x32xf32>, vector<32x32xf32>, vector<16x32xf32> -> vector<16x32xf32>
    %166 = arith.mulf %165, %10 : vector<16x32xf32>
    %167 = arith.addf %164, %166 : vector<16x32xf32>
    %168 = arith.mulf %162, %9 : vector<16x32xf32>
    %cst_74 = arith.constant dense<0.000000e+00> : vector<16x32xf32>
    %169 = tpu.matmul %162, %11, %cst_74 {dimension_numbers = #tpu.dot_dimension_numbers<[1], [0], [0], [1], [0, 0, 1, 1], [], []>} : vector<16x32xf32>, vector<32x32xf32>, vector<16x32xf32> -> vector<16x32xf32>
    %170 = arith.mulf %169, %10 : vector<16x32xf32>
    %171 = arith.addf %168, %170 : vector<16x32xf32>
    %172 = vector.extract_strided_slice %167 {offsets = [0, 0], sizes = [16, 8], strides = [1, 1]} : vector<16x32xf32> to vector<16x8xf32>
    %173 = vector.extract_strided_slice %171 {offsets = [0, 0], sizes = [16, 8], strides = [1, 1]} : vector<16x32xf32> to vector<16x8xf32>
    %174 = vector.extract_strided_slice %163 {offsets = [0, 0], sizes = [16, 8], strides = [1, 1]} : vector<16x32xf32> to vector<16x8xf32>
    %cst_75 = arith.constant dense<0.000000e+00> : vector<16x16xf32>
    %175 = tpu.matmul %172, %173, %cst_75 {dimension_numbers = #tpu.dot_dimension_numbers<[1], [1], [0], [0], [0, 0, 1, 0], [], []>} : vector<16x8xf32>, vector<16x8xf32>, vector<16x16xf32> -> vector<16x16xf32>
    %cst_76 = arith.constant 0.353553385 : f32
    %176 = vector.broadcast %cst_76 : f32 to vector<16x16xf32>
    %177 = arith.mulf %175, %176 : vector<16x16xf32>
    %178 = arith.addf %177, %12 : vector<16x16xf32>
    %cst_77 = arith.constant dense<0xFF800000> : vector<16xf32>
    %179 = vector.multi_reduction <maximumf>, %178, %cst_77 [1] : vector<16x16xf32> to vector<16xf32>
    %180 = vector.shape_cast %179 : vector<16xf32> to vector<16x1xf32>
    %181 = vector.broadcast %180 : vector<16x1xf32> to vector<16x16xf32>
    %182 = arith.subf %178, %181 : vector<16x16xf32>
    %183 = math.exp %182 : vector<16x16xf32>
    %cst_78 = arith.constant dense<0.000000e+00> : vector<16xf32>
    %184 = vector.multi_reduction <add>, %183, %cst_78 [1] : vector<16x16xf32> to vector<16xf32>
    %185 = vector.shape_cast %184 : vector<16xf32> to vector<16x1xf32>
    %cst_79 = arith.constant dense<0.000000e+00> : vector<16x8xf32>
    %186 = tpu.matmul %183, %174, %cst_79 {dimension_numbers = #tpu.dot_dimension_numbers<[1], [0], [0], [1], [0, 0, 1, 1], [], []>} : vector<16x16xf32>, vector<16x8xf32>, vector<16x8xf32> -> vector<16x8xf32>
    %187 = vector.broadcast %185 : vector<16x1xf32> to vector<16x8xf32>
    %188 = arith.divf %186, %187 : vector<16x8xf32>
    %189 = vector.extract_strided_slice %167 {offsets = [0, 8], sizes = [16, 8], strides = [1, 1]} : vector<16x32xf32> to vector<16x8xf32>
    %190 = vector.extract_strided_slice %171 {offsets = [0, 8], sizes = [16, 8], strides = [1, 1]} : vector<16x32xf32> to vector<16x8xf32>
    %191 = vector.extract_strided_slice %163 {offsets = [0, 8], sizes = [16, 8], strides = [1, 1]} : vector<16x32xf32> to vector<16x8xf32>
    %cst_80 = arith.constant dense<0.000000e+00> : vector<16x16xf32>
    %192 = tpu.matmul %189, %190, %cst_80 {dimension_numbers = #tpu.dot_dimension_numbers<[1], [1], [0], [0], [0, 0, 1, 0], [], []>} : vector<16x8xf32>, vector<16x8xf32>, vector<16x16xf32> -> vector<16x16xf32>
    %cst_81 = arith.constant 0.353553385 : f32
    %193 = vector.broadcast %cst_81 : f32 to vector<16x16xf32>
    %194 = arith.mulf %192, %193 : vector<16x16xf32>
    %195 = arith.addf %194, %12 : vector<16x16xf32>
    %cst_82 = arith.constant dense<0xFF800000> : vector<16xf32>
    %196 = vector.multi_reduction <maximumf>, %195, %cst_82 [1] : vector<16x16xf32> to vector<16xf32>
    %197 = vector.shape_cast %196 : vector<16xf32> to vector<16x1xf32>
    %198 = vector.broadcast %197 : vector<16x1xf32> to vector<16x16xf32>
    %199 = arith.subf %195, %198 : vector<16x16xf32>
    %200 = math.exp %199 : vector<16x16xf32>
    %cst_83 = arith.constant dense<0.000000e+00> : vector<16xf32>
    %201 = vector.multi_reduction <add>, %200, %cst_83 [1] : vector<16x16xf32> to vector<16xf32>
    %202 = vector.shape_cast %201 : vector<16xf32> to vector<16x1xf32>
    %cst_84 = arith.constant dense<0.000000e+00> : vector<16x8xf32>
    %203 = tpu.matmul %200, %191, %cst_84 {dimension_numbers = #tpu.dot_dimension_numbers<[1], [0], [0], [1], [0, 0, 1, 1], [], []>} : vector<16x16xf32>, vector<16x8xf32>, vector<16x8xf32> -> vector<16x8xf32>
    %204 = vector.broadcast %202 : vector<16x1xf32> to vector<16x8xf32>
    %205 = arith.divf %203, %204 : vector<16x8xf32>
    %206 = vector.extract_strided_slice %167 {offsets = [0, 16], sizes = [16, 8], strides = [1, 1]} : vector<16x32xf32> to vector<16x8xf32>
    %207 = vector.extract_strided_slice %171 {offsets = [0, 16], sizes = [16, 8], strides = [1, 1]} : vector<16x32xf32> to vector<16x8xf32>
    %208 = vector.extract_strided_slice %163 {offsets = [0, 16], sizes = [16, 8], strides = [1, 1]} : vector<16x32xf32> to vector<16x8xf32>
    %cst_85 = arith.constant dense<0.000000e+00> : vector<16x16xf32>
    %209 = tpu.matmul %206, %207, %cst_85 {dimension_numbers = #tpu.dot_dimension_numbers<[1], [1], [0], [0], [0, 0, 1, 0], [], []>} : vector<16x8xf32>, vector<16x8xf32>, vector<16x16xf32> -> vector<16x16xf32>
    %cst_86 = arith.constant 0.353553385 : f32
    %210 = vector.broadcast %cst_86 : f32 to vector<16x16xf32>
    %211 = arith.mulf %209, %210 : vector<16x16xf32>
    %212 = arith.addf %211, %12 : vector<16x16xf32>
    %cst_87 = arith.constant dense<0xFF800000> : vector<16xf32>
    %213 = vector.multi_reduction <maximumf>, %212, %cst_87 [1] : vector<16x16xf32> to vector<16xf32>
    %214 = vector.shape_cast %213 : vector<16xf32> to vector<16x1xf32>
    %215 = vector.broadcast %214 : vector<16x1xf32> to vector<16x16xf32>
    %216 = arith.subf %212, %215 : vector<16x16xf32>
    %217 = math.exp %216 : vector<16x16xf32>
    %cst_88 = arith.constant dense<0.000000e+00> : vector<16xf32>
    %218 = vector.multi_reduction <add>, %217, %cst_88 [1] : vector<16x16xf32> to vector<16xf32>
    %219 = vector.shape_cast %218 : vector<16xf32> to vector<16x1xf32>
    %cst_89 = arith.constant dense<0.000000e+00> : vector<16x8xf32>
    %220 = tpu.matmul %217, %208, %cst_89 {dimension_numbers = #tpu.dot_dimension_numbers<[1], [0], [0], [1], [0, 0, 1, 1], [], []>} : vector<16x16xf32>, vector<16x8xf32>, vector<16x8xf32> -> vector<16x8xf32>
    %221 = vector.broadcast %219 : vector<16x1xf32> to vector<16x8xf32>
    %222 = arith.divf %220, %221 : vector<16x8xf32>
    %223 = vector.extract_strided_slice %167 {offsets = [0, 24], sizes = [16, 8], strides = [1, 1]} : vector<16x32xf32> to vector<16x8xf32>
    %224 = vector.extract_strided_slice %171 {offsets = [0, 24], sizes = [16, 8], strides = [1, 1]} : vector<16x32xf32> to vector<16x8xf32>
    %225 = vector.extract_strided_slice %163 {offsets = [0, 24], sizes = [16, 8], strides = [1, 1]} : vector<16x32xf32> to vector<16x8xf32>
    %cst_90 = arith.constant dense<0.000000e+00> : vector<16x16xf32>
    %226 = tpu.matmul %223, %224, %cst_90 {dimension_numbers = #tpu.dot_dimension_numbers<[1], [1], [0], [0], [0, 0, 1, 0], [], []>} : vector<16x8xf32>, vector<16x8xf32>, vector<16x16xf32> -> vector<16x16xf32>
    %cst_91 = arith.constant 0.353553385 : f32
    %227 = vector.broadcast %cst_91 : f32 to vector<16x16xf32>
    %228 = arith.mulf %226, %227 : vector<16x16xf32>
    %229 = arith.addf %228, %12 : vector<16x16xf32>
    %cst_92 = arith.constant dense<0xFF800000> : vector<16xf32>
    %230 = vector.multi_reduction <maximumf>, %229, %cst_92 [1] : vector<16x16xf32> to vector<16xf32>
    %231 = vector.shape_cast %230 : vector<16xf32> to vector<16x1xf32>
    %232 = vector.broadcast %231 : vector<16x1xf32> to vector<16x16xf32>
    %233 = arith.subf %229, %232 : vector<16x16xf32>
    %234 = math.exp %233 : vector<16x16xf32>
    %cst_93 = arith.constant dense<0.000000e+00> : vector<16xf32>
    %235 = vector.multi_reduction <add>, %234, %cst_93 [1] : vector<16x16xf32> to vector<16xf32>
    %236 = vector.shape_cast %235 : vector<16xf32> to vector<16x1xf32>
    %cst_94 = arith.constant dense<0.000000e+00> : vector<16x8xf32>
    %237 = tpu.matmul %234, %225, %cst_94 {dimension_numbers = #tpu.dot_dimension_numbers<[1], [0], [0], [1], [0, 0, 1, 1], [], []>} : vector<16x16xf32>, vector<16x8xf32>, vector<16x8xf32> -> vector<16x8xf32>
    %238 = vector.broadcast %236 : vector<16x1xf32> to vector<16x8xf32>
    %239 = arith.divf %237, %238 : vector<16x8xf32>
    %240 = tpu.concatenate %188, %205, %222, %239 in 1 : vector<16x8xf32>, vector<16x8xf32>, vector<16x8xf32>, vector<16x8xf32> -> vector<16x32xf32>
    %c1_95 = arith.constant 1 : index
    %c0_96 = arith.constant 0 : index
    %c0_97 = arith.constant 0 : index
    %241 = vector.load %arg10[%c1_95, %c0_96, %c0_97] : memref<2x32x32xf32, #tpu.memory_space<vmem>>, vector<1x32x32xf32>
    %242 = vector.shape_cast %241 : vector<1x32x32xf32> to vector<32x32xf32>
    %cst_98 = arith.constant dense<0.000000e+00> : vector<16x32xf32>
    %243 = tpu.matmul %240, %242, %cst_98 {dimension_numbers = #tpu.dot_dimension_numbers<[1], [1], [0], [0], [0, 0, 1, 0], [], []>} : vector<16x32xf32>, vector<32x32xf32>, vector<16x32xf32> -> vector<16x32xf32>
    %244 = arith.addf %143, %243 : vector<16x32xf32>
    %c1_99 = arith.constant 1 : index
    %c0_100 = arith.constant 0 : index
    %c0_101 = arith.constant 0 : index
    %245 = vector.load %arg11[%c1_99, %c0_100, %c0_101] : memref<2x1x32xf32, #tpu.memory_space<vmem>>, vector<1x1x32xf32>
    %246 = vector.shape_cast %245 : vector<1x1x32xf32> to vector<1x32xf32>
    %247 = arith.mulf %244, %244 : vector<16x32xf32>
    %cst_102 = arith.constant dense<0.000000e+00> : vector<16xf32>
    %248 = vector.multi_reduction <add>, %247, %cst_102 [1] : vector<16x32xf32> to vector<16xf32>
    %249 = vector.shape_cast %248 : vector<16xf32> to vector<16x1xf32>
    %cst_103 = arith.constant 3.200000e+01 : f32
    %250 = vector.broadcast %cst_103 : f32 to vector<16x1xf32>
    %251 = arith.divf %249, %250 : vector<16x1xf32>
    %cst_104 = arith.constant 9.99999997E-7 : f32
    %252 = vector.broadcast %cst_104 : f32 to vector<16x1xf32>
    %253 = arith.addf %251, %252 : vector<16x1xf32>
    %254 = math.rsqrt %253 : vector<16x1xf32>
    %255 = vector.broadcast %254 : vector<16x1xf32> to vector<16x32xf32>
    %256 = arith.mulf %244, %255 : vector<16x32xf32>
    %257 = vector.broadcast %246 : vector<1x32xf32> to vector<16x32xf32>
    %258 = arith.mulf %256, %257 : vector<16x32xf32>
    %c1_105 = arith.constant 1 : index
    %c0_106 = arith.constant 0 : index
    %c0_107 = arith.constant 0 : index
    %259 = vector.load %arg12[%c1_105, %c0_106, %c0_107] : memref<2x256x32xf32, #tpu.memory_space<vmem>>, vector<1x256x32xf32>
    %260 = vector.shape_cast %259 : vector<1x256x32xf32> to vector<256x32xf32>
    %cst_108 = arith.constant dense<0.000000e+00> : vector<16x256xf32>
    %261 = tpu.matmul %258, %260, %cst_108 {dimension_numbers = #tpu.dot_dimension_numbers<[1], [1], [0], [0], [0, 0, 1, 0], [], []>} : vector<16x32xf32>, vector<256x32xf32>, vector<16x256xf32> -> vector<16x256xf32>
    %262 = vector.extract_strided_slice %261 {offsets = [0, 0], sizes = [16, 128], strides = [1, 1]} : vector<16x256xf32> to vector<16x128xf32>
    %263 = vector.extract_strided_slice %261 {offsets = [0, 128], sizes = [16, 128], strides = [1, 1]} : vector<16x256xf32> to vector<16x128xf32>
    %264 = arith.negf %262 : vector<16x128xf32>
    %265 = math.exp %264 : vector<16x128xf32>
    %cst_109 = arith.constant 1.000000e+00 : f32
    %266 = vector.broadcast %cst_109 : f32 to vector<16x128xf32>
    %267 = arith.addf %266, %265 : vector<16x128xf32>
    %268 = arith.divf %266, %267 : vector<16x128xf32>
    %269 = arith.mulf %262, %268 : vector<16x128xf32>
    %270 = arith.mulf %269, %263 : vector<16x128xf32>
    %c1_110 = arith.constant 1 : index
    %c0_111 = arith.constant 0 : index
    %c0_112 = arith.constant 0 : index
    %271 = vector.load %arg13[%c1_110, %c0_111, %c0_112] : memref<2x32x128xf32, #tpu.memory_space<vmem>>, vector<1x32x128xf32>
    %272 = vector.shape_cast %271 : vector<1x32x128xf32> to vector<32x128xf32>
    %cst_113 = arith.constant dense<0.000000e+00> : vector<16x32xf32>
    %273 = tpu.matmul %270, %272, %cst_113 {dimension_numbers = #tpu.dot_dimension_numbers<[1], [1], [0], [0], [0, 0, 1, 0], [], []>} : vector<16x128xf32>, vector<32x128xf32>, vector<16x32xf32> -> vector<16x32xf32>
    %274 = arith.addf %244, %273 : vector<16x32xf32>
    %c0_114 = arith.constant 0 : index
    %c0_115 = arith.constant 0 : index
    %275 = vector.load %arg14[%c0_114, %c0_115] : memref<1x32xf32, #tpu.memory_space<vmem>>, vector<1x32xf32>
    %276 = arith.mulf %274, %274 : vector<16x32xf32>
    %cst_116 = arith.constant dense<0.000000e+00> : vector<16xf32>
    %277 = vector.multi_reduction <add>, %276, %cst_116 [1] : vector<16x32xf32> to vector<16xf32>
    %278 = vector.shape_cast %277 : vector<16xf32> to vector<16x1xf32>
    %cst_117 = arith.constant 3.200000e+01 : f32
    %279 = vector.broadcast %cst_117 : f32 to vector<16x1xf32>
    %280 = arith.divf %278, %279 : vector<16x1xf32>
    %cst_118 = arith.constant 9.99999997E-7 : f32
    %281 = vector.broadcast %cst_118 : f32 to vector<16x1xf32>
    %282 = arith.addf %280, %281 : vector<16x1xf32>
    %283 = math.rsqrt %282 : vector<16x1xf32>
    %284 = vector.broadcast %283 : vector<16x1xf32> to vector<16x32xf32>
    %285 = arith.mulf %274, %284 : vector<16x32xf32>
    %286 = vector.broadcast %275 : vector<1x32xf32> to vector<16x32xf32>
    %287 = arith.mulf %285, %286 : vector<16x32xf32>
    %c0_119 = arith.constant 0 : index
    %c0_120 = arith.constant 0 : index
    %288 = vector.load %arg7[%c0_119, %c0_120] : memref<16x16xf32, #tpu.memory_space<vmem>>, vector<16x16xf32>
    %cst_121 = arith.constant dense<0.000000e+00> : vector<16x32xf32>
    %289 = tpu.matmul %288, %287, %cst_121 {dimension_numbers = #tpu.dot_dimension_numbers<[1], [0], [0], [1], [0, 0, 1, 1], [], []>} : vector<16x16xf32>, vector<16x32xf32>, vector<16x32xf32> -> vector<16x32xf32>
    %c0_122 = arith.constant 0 : index
    %c0_123 = arith.constant 0 : index
    %c0_124 = arith.constant 0 : index
    %290 = vector.load %arg15[%c0_122, %c0_123, %c0_124] : memref<2x1x32xf32, #tpu.memory_space<vmem>>, vector<1x1x32xf32>
    %291 = vector.shape_cast %290 : vector<1x1x32xf32> to vector<1x32xf32>
    %c0_125 = arith.constant 0 : index
    %c0_126 = arith.constant 0 : index
    %c0_127 = arith.constant 0 : index
    %292 = vector.load %arg16[%c0_125, %c0_126, %c0_127] : memref<2x1x32xf32, #tpu.memory_space<vmem>>, vector<1x1x32xf32>
    %293 = vector.shape_cast %292 : vector<1x1x32xf32> to vector<1x32xf32>
    %cst_128 = arith.constant dense<0.000000e+00> : vector<16xf32>
    %294 = vector.multi_reduction <add>, %289, %cst_128 [1] : vector<16x32xf32> to vector<16xf32>
    %295 = vector.shape_cast %294 : vector<16xf32> to vector<16x1xf32>
    %cst_129 = arith.constant 3.200000e+01 : f32
    %296 = vector.broadcast %cst_129 : f32 to vector<16x1xf32>
    %297 = arith.divf %295, %296 : vector<16x1xf32>
    %298 = vector.broadcast %297 : vector<16x1xf32> to vector<16x32xf32>
    %299 = arith.subf %289, %298 : vector<16x32xf32>
    %300 = arith.mulf %299, %299 : vector<16x32xf32>
    %cst_130 = arith.constant dense<0.000000e+00> : vector<16xf32>
    %301 = vector.multi_reduction <add>, %300, %cst_130 [1] : vector<16x32xf32> to vector<16xf32>
    %302 = vector.shape_cast %301 : vector<16xf32> to vector<16x1xf32>
    %cst_131 = arith.constant 3.200000e+01 : f32
    %303 = vector.broadcast %cst_131 : f32 to vector<16x1xf32>
    %304 = arith.divf %302, %303 : vector<16x1xf32>
    %305 = vector.broadcast %297 : vector<16x1xf32> to vector<16x32xf32>
    %306 = arith.subf %289, %305 : vector<16x32xf32>
    %cst_132 = arith.constant 9.99999974E-6 : f32
    %307 = vector.broadcast %cst_132 : f32 to vector<16x1xf32>
    %308 = arith.addf %304, %307 : vector<16x1xf32>
    %309 = math.rsqrt %308 : vector<16x1xf32>
    %310 = vector.broadcast %309 : vector<16x1xf32> to vector<16x32xf32>
    %311 = arith.mulf %306, %310 : vector<16x32xf32>
    %312 = vector.broadcast %291 : vector<1x32xf32> to vector<16x32xf32>
    %313 = arith.mulf %311, %312 : vector<16x32xf32>
    %314 = vector.broadcast %293 : vector<1x32xf32> to vector<16x32xf32>
    %315 = arith.addf %313, %314 : vector<16x32xf32>
    %c0_133 = arith.constant 0 : index
    %c0_134 = arith.constant 0 : index
    %c0_135 = arith.constant 0 : index
    %316 = vector.load %arg17[%c0_133, %c0_134, %c0_135] : memref<2x16x16xf32, #tpu.memory_space<vmem>>, vector<1x16x16xf32>
    %317 = vector.shape_cast %316 : vector<1x16x16xf32> to vector<16x16xf32>
    %cst_136 = arith.constant dense<0.000000e+00> : vector<16x32xf32>
    %318 = tpu.matmul %317, %315, %cst_136 {dimension_numbers = #tpu.dot_dimension_numbers<[1], [0], [0], [1], [0, 0, 1, 1], [], []>} : vector<16x16xf32>, vector<16x32xf32>, vector<16x32xf32> -> vector<16x32xf32>
    %c0_137 = arith.constant 0 : index
    %c0_138 = arith.constant 0 : index
    %c0_139 = arith.constant 0 : index
    %319 = vector.load %arg18[%c0_137, %c0_138, %c0_139] : memref<2x16x1xf32, #tpu.memory_space<vmem>>, vector<1x16x1xf32>
    %320 = vector.shape_cast %319 : vector<1x16x1xf32> to vector<16x1xf32>
    %321 = vector.broadcast %320 : vector<16x1xf32> to vector<16x32xf32>
    %322 = arith.addf %318, %321 : vector<16x32xf32>
    %323 = arith.addf %322, %289 : vector<16x32xf32>
    %c0_140 = arith.constant 0 : index
    %c0_141 = arith.constant 0 : index
    %c0_142 = arith.constant 0 : index
    %324 = vector.load %arg19[%c0_140, %c0_141, %c0_142] : memref<2x1x32xf32, #tpu.memory_space<vmem>>, vector<1x1x32xf32>
    %325 = vector.shape_cast %324 : vector<1x1x32xf32> to vector<1x32xf32>
    %c0_143 = arith.constant 0 : index
    %c0_144 = arith.constant 0 : index
    %c0_145 = arith.constant 0 : index
    %326 = vector.load %arg20[%c0_143, %c0_144, %c0_145] : memref<2x1x32xf32, #tpu.memory_space<vmem>>, vector<1x1x32xf32>
    %327 = vector.shape_cast %326 : vector<1x1x32xf32> to vector<1x32xf32>
    %cst_146 = arith.constant dense<0.000000e+00> : vector<16xf32>
    %328 = vector.multi_reduction <add>, %323, %cst_146 [1] : vector<16x32xf32> to vector<16xf32>
    %329 = vector.shape_cast %328 : vector<16xf32> to vector<16x1xf32>
    %cst_147 = arith.constant 3.200000e+01 : f32
    %330 = vector.broadcast %cst_147 : f32 to vector<16x1xf32>
    %331 = arith.divf %329, %330 : vector<16x1xf32>
    %332 = vector.broadcast %331 : vector<16x1xf32> to vector<16x32xf32>
    %333 = arith.subf %323, %332 : vector<16x32xf32>
    %334 = arith.mulf %333, %333 : vector<16x32xf32>
    %cst_148 = arith.constant dense<0.000000e+00> : vector<16xf32>
    %335 = vector.multi_reduction <add>, %334, %cst_148 [1] : vector<16x32xf32> to vector<16xf32>
    %336 = vector.shape_cast %335 : vector<16xf32> to vector<16x1xf32>
    %cst_149 = arith.constant 3.200000e+01 : f32
    %337 = vector.broadcast %cst_149 : f32 to vector<16x1xf32>
    %338 = arith.divf %336, %337 : vector<16x1xf32>
    %339 = vector.broadcast %331 : vector<16x1xf32> to vector<16x32xf32>
    %340 = arith.subf %323, %339 : vector<16x32xf32>
    %cst_150 = arith.constant 9.99999974E-6 : f32
    %341 = vector.broadcast %cst_150 : f32 to vector<16x1xf32>
    %342 = arith.addf %338, %341 : vector<16x1xf32>
    %343 = math.rsqrt %342 : vector<16x1xf32>
    %344 = vector.broadcast %343 : vector<16x1xf32> to vector<16x32xf32>
    %345 = arith.mulf %340, %344 : vector<16x32xf32>
    %346 = vector.broadcast %325 : vector<1x32xf32> to vector<16x32xf32>
    %347 = arith.mulf %345, %346 : vector<16x32xf32>
    %348 = vector.broadcast %327 : vector<1x32xf32> to vector<16x32xf32>
    %349 = arith.addf %347, %348 : vector<16x32xf32>
    %c0_151 = arith.constant 0 : index
    %c0_152 = arith.constant 0 : index
    %c0_153 = arith.constant 0 : index
    %350 = vector.load %arg21[%c0_151, %c0_152, %c0_153] : memref<2x128x32xf32, #tpu.memory_space<vmem>>, vector<1x128x32xf32>
    %351 = vector.shape_cast %350 : vector<1x128x32xf32> to vector<128x32xf32>
    %cst_154 = arith.constant dense<0.000000e+00> : vector<16x128xf32>
    %352 = tpu.matmul %349, %351, %cst_154 {dimension_numbers = #tpu.dot_dimension_numbers<[1], [1], [0], [0], [0, 0, 1, 0], [], []>} : vector<16x32xf32>, vector<128x32xf32>, vector<16x128xf32> -> vector<16x128xf32>
    %c0_155 = arith.constant 0 : index
    %c0_156 = arith.constant 0 : index
    %c0_157 = arith.constant 0 : index
    %353 = vector.load %arg22[%c0_155, %c0_156, %c0_157] : memref<2x1x128xf32, #tpu.memory_space<vmem>>, vector<1x1x128xf32>
    %354 = vector.shape_cast %353 : vector<1x1x128xf32> to vector<1x128xf32>
    %355 = vector.broadcast %354 : vector<1x128xf32> to vector<16x128xf32>
    %356 = arith.addf %352, %355 : vector<16x128xf32>
    %cst_158 = arith.constant 5.000000e-01 : f32
    %357 = vector.broadcast %cst_158 : f32 to vector<16x128xf32>
    %358 = arith.mulf %357, %356 : vector<16x128xf32>
    %cst_159 = arith.constant 0.707106769 : f32
    %359 = vector.broadcast %cst_159 : f32 to vector<16x128xf32>
    %360 = arith.mulf %356, %359 : vector<16x128xf32>
    %cst_160 = arith.constant 0.000000e+00 : f32
    %361 = vector.broadcast %cst_160 : f32 to vector<16x128xf32>
    %362 = arith.cmpf oge, %360, %361 : vector<16x128xf32>
    %cst_161 = arith.constant 1.000000e+00 : f32
    %cst_162 = arith.constant -1.000000e+00 : f32
    %363 = vector.broadcast %cst_161 : f32 to vector<16x128xf32>
    %364 = vector.broadcast %cst_162 : f32 to vector<16x128xf32>
    %365 = arith.select %362, %363, %364 : vector<16x128xi1>, vector<16x128xf32>
    %366 = math.absf %360 : vector<16x128xf32>
    %cst_163 = arith.constant 0.327591091 : f32
    %367 = vector.broadcast %cst_163 : f32 to vector<16x128xf32>
    %368 = arith.mulf %367, %366 : vector<16x128xf32>
    %cst_164 = arith.constant 1.000000e+00 : f32
    %369 = vector.broadcast %cst_164 : f32 to vector<16x128xf32>
    %370 = arith.addf %369, %368 : vector<16x128xf32>
    %cst_165 = arith.constant 1.000000e+00 : f32
    %371 = vector.broadcast %cst_165 : f32 to vector<16x128xf32>
    %372 = arith.divf %371, %370 : vector<16x128xf32>
    %cst_166 = arith.constant 1.06140542 : f32
    %373 = vector.broadcast %cst_166 : f32 to vector<16x128xf32>
    %374 = arith.mulf %373, %372 : vector<16x128xf32>
    %cst_167 = arith.constant -1.45315206 : f32
    %375 = vector.broadcast %cst_167 : f32 to vector<16x128xf32>
    %376 = arith.addf %374, %375 : vector<16x128xf32>
    %377 = arith.mulf %376, %372 : vector<16x128xf32>
    %cst_168 = arith.constant 1.42141378 : f32
    %378 = vector.broadcast %cst_168 : f32 to vector<16x128xf32>
    %379 = arith.addf %377, %378 : vector<16x128xf32>
    %380 = arith.mulf %379, %372 : vector<16x128xf32>
    %cst_169 = arith.constant -0.284496725 : f32
    %381 = vector.broadcast %cst_169 : f32 to vector<16x128xf32>
    %382 = arith.addf %380, %381 : vector<16x128xf32>
    %383 = arith.mulf %382, %372 : vector<16x128xf32>
    %cst_170 = arith.constant 0.254829586 : f32
    %384 = vector.broadcast %cst_170 : f32 to vector<16x128xf32>
    %385 = arith.addf %383, %384 : vector<16x128xf32>
    %386 = arith.mulf %385, %372 : vector<16x128xf32>
    %cst_171 = arith.constant 0.000000e+00 : f32
    %387 = vector.broadcast %cst_171 : f32 to vector<16x128xf32>
    %388 = arith.subf %387, %366 : vector<16x128xf32>
    %389 = arith.mulf %388, %366 : vector<16x128xf32>
    %390 = math.exp %389 : vector<16x128xf32>
    %391 = arith.mulf %386, %390 : vector<16x128xf32>
    %cst_172 = arith.constant 1.000000e+00 : f32
    %392 = vector.broadcast %cst_172 : f32 to vector<16x128xf32>
    %393 = arith.subf %392, %391 : vector<16x128xf32>
    %394 = arith.mulf %365, %393 : vector<16x128xf32>
    %cst_173 = arith.constant 1.000000e+00 : f32
    %395 = vector.broadcast %cst_173 : f32 to vector<16x128xf32>
    %396 = arith.addf %395, %394 : vector<16x128xf32>
    %397 = arith.mulf %358, %396 : vector<16x128xf32>
    %c0_174 = arith.constant 0 : index
    %c0_175 = arith.constant 0 : index
    %c0_176 = arith.constant 0 : index
    %398 = vector.load %arg23[%c0_174, %c0_175, %c0_176] : memref<2x32x128xf32, #tpu.memory_space<vmem>>, vector<1x32x128xf32>
    %399 = vector.shape_cast %398 : vector<1x32x128xf32> to vector<32x128xf32>
    %cst_177 = arith.constant dense<0.000000e+00> : vector<16x32xf32>
    %400 = tpu.matmul %397, %399, %cst_177 {dimension_numbers = #tpu.dot_dimension_numbers<[1], [1], [0], [0], [0, 0, 1, 0], [], []>} : vector<16x128xf32>, vector<32x128xf32>, vector<16x32xf32> -> vector<16x32xf32>
    %401 = arith.addf %323, %400 : vector<16x32xf32>
    %c0_178 = arith.constant 0 : index
    %c0_179 = arith.constant 0 : index
    %c0_180 = arith.constant 0 : index
    %402 = vector.load %arg24[%c0_178, %c0_179, %c0_180] : memref<2x1x32xf32, #tpu.memory_space<vmem>>, vector<1x1x32xf32>
    %403 = vector.shape_cast %402 : vector<1x1x32xf32> to vector<1x32xf32>
    %404 = vector.broadcast %403 : vector<1x32xf32> to vector<16x32xf32>
    %405 = arith.addf %401, %404 : vector<16x32xf32>
    %c1_181 = arith.constant 1 : index
    %c0_182 = arith.constant 0 : index
    %c0_183 = arith.constant 0 : index
    %406 = vector.load %arg15[%c1_181, %c0_182, %c0_183] : memref<2x1x32xf32, #tpu.memory_space<vmem>>, vector<1x1x32xf32>
    %407 = vector.shape_cast %406 : vector<1x1x32xf32> to vector<1x32xf32>
    %c1_184 = arith.constant 1 : index
    %c0_185 = arith.constant 0 : index
    %c0_186 = arith.constant 0 : index
    %408 = vector.load %arg16[%c1_184, %c0_185, %c0_186] : memref<2x1x32xf32, #tpu.memory_space<vmem>>, vector<1x1x32xf32>
    %409 = vector.shape_cast %408 : vector<1x1x32xf32> to vector<1x32xf32>
    %cst_187 = arith.constant dense<0.000000e+00> : vector<16xf32>
    %410 = vector.multi_reduction <add>, %405, %cst_187 [1] : vector<16x32xf32> to vector<16xf32>
    %411 = vector.shape_cast %410 : vector<16xf32> to vector<16x1xf32>
    %cst_188 = arith.constant 3.200000e+01 : f32
    %412 = vector.broadcast %cst_188 : f32 to vector<16x1xf32>
    %413 = arith.divf %411, %412 : vector<16x1xf32>
    %414 = vector.broadcast %413 : vector<16x1xf32> to vector<16x32xf32>
    %415 = arith.subf %405, %414 : vector<16x32xf32>
    %416 = arith.mulf %415, %415 : vector<16x32xf32>
    %cst_189 = arith.constant dense<0.000000e+00> : vector<16xf32>
    %417 = vector.multi_reduction <add>, %416, %cst_189 [1] : vector<16x32xf32> to vector<16xf32>
    %418 = vector.shape_cast %417 : vector<16xf32> to vector<16x1xf32>
    %cst_190 = arith.constant 3.200000e+01 : f32
    %419 = vector.broadcast %cst_190 : f32 to vector<16x1xf32>
    %420 = arith.divf %418, %419 : vector<16x1xf32>
    %421 = vector.broadcast %413 : vector<16x1xf32> to vector<16x32xf32>
    %422 = arith.subf %405, %421 : vector<16x32xf32>
    %cst_191 = arith.constant 9.99999974E-6 : f32
    %423 = vector.broadcast %cst_191 : f32 to vector<16x1xf32>
    %424 = arith.addf %420, %423 : vector<16x1xf32>
    %425 = math.rsqrt %424 : vector<16x1xf32>
    %426 = vector.broadcast %425 : vector<16x1xf32> to vector<16x32xf32>
    %427 = arith.mulf %422, %426 : vector<16x32xf32>
    %428 = vector.broadcast %407 : vector<1x32xf32> to vector<16x32xf32>
    %429 = arith.mulf %427, %428 : vector<16x32xf32>
    %430 = vector.broadcast %409 : vector<1x32xf32> to vector<16x32xf32>
    %431 = arith.addf %429, %430 : vector<16x32xf32>
    %c1_192 = arith.constant 1 : index
    %c0_193 = arith.constant 0 : index
    %c0_194 = arith.constant 0 : index
    %432 = vector.load %arg17[%c1_192, %c0_193, %c0_194] : memref<2x16x16xf32, #tpu.memory_space<vmem>>, vector<1x16x16xf32>
    %433 = vector.shape_cast %432 : vector<1x16x16xf32> to vector<16x16xf32>
    %cst_195 = arith.constant dense<0.000000e+00> : vector<16x32xf32>
    %434 = tpu.matmul %433, %431, %cst_195 {dimension_numbers = #tpu.dot_dimension_numbers<[1], [0], [0], [1], [0, 0, 1, 1], [], []>} : vector<16x16xf32>, vector<16x32xf32>, vector<16x32xf32> -> vector<16x32xf32>
    %c1_196 = arith.constant 1 : index
    %c0_197 = arith.constant 0 : index
    %c0_198 = arith.constant 0 : index
    %435 = vector.load %arg18[%c1_196, %c0_197, %c0_198] : memref<2x16x1xf32, #tpu.memory_space<vmem>>, vector<1x16x1xf32>
    %436 = vector.shape_cast %435 : vector<1x16x1xf32> to vector<16x1xf32>
    %437 = vector.broadcast %436 : vector<16x1xf32> to vector<16x32xf32>
    %438 = arith.addf %434, %437 : vector<16x32xf32>
    %439 = arith.addf %438, %405 : vector<16x32xf32>
    %c1_199 = arith.constant 1 : index
    %c0_200 = arith.constant 0 : index
    %c0_201 = arith.constant 0 : index
    %440 = vector.load %arg19[%c1_199, %c0_200, %c0_201] : memref<2x1x32xf32, #tpu.memory_space<vmem>>, vector<1x1x32xf32>
    %441 = vector.shape_cast %440 : vector<1x1x32xf32> to vector<1x32xf32>
    %c1_202 = arith.constant 1 : index
    %c0_203 = arith.constant 0 : index
    %c0_204 = arith.constant 0 : index
    %442 = vector.load %arg20[%c1_202, %c0_203, %c0_204] : memref<2x1x32xf32, #tpu.memory_space<vmem>>, vector<1x1x32xf32>
    %443 = vector.shape_cast %442 : vector<1x1x32xf32> to vector<1x32xf32>
    %cst_205 = arith.constant dense<0.000000e+00> : vector<16xf32>
    %444 = vector.multi_reduction <add>, %439, %cst_205 [1] : vector<16x32xf32> to vector<16xf32>
    %445 = vector.shape_cast %444 : vector<16xf32> to vector<16x1xf32>
    %cst_206 = arith.constant 3.200000e+01 : f32
    %446 = vector.broadcast %cst_206 : f32 to vector<16x1xf32>
    %447 = arith.divf %445, %446 : vector<16x1xf32>
    %448 = vector.broadcast %447 : vector<16x1xf32> to vector<16x32xf32>
    %449 = arith.subf %439, %448 : vector<16x32xf32>
    %450 = arith.mulf %449, %449 : vector<16x32xf32>
    %cst_207 = arith.constant dense<0.000000e+00> : vector<16xf32>
    %451 = vector.multi_reduction <add>, %450, %cst_207 [1] : vector<16x32xf32> to vector<16xf32>
    %452 = vector.shape_cast %451 : vector<16xf32> to vector<16x1xf32>
    %cst_208 = arith.constant 3.200000e+01 : f32
    %453 = vector.broadcast %cst_208 : f32 to vector<16x1xf32>
    %454 = arith.divf %452, %453 : vector<16x1xf32>
    %455 = vector.broadcast %447 : vector<16x1xf32> to vector<16x32xf32>
    %456 = arith.subf %439, %455 : vector<16x32xf32>
    %cst_209 = arith.constant 9.99999974E-6 : f32
    %457 = vector.broadcast %cst_209 : f32 to vector<16x1xf32>
    %458 = arith.addf %454, %457 : vector<16x1xf32>
    %459 = math.rsqrt %458 : vector<16x1xf32>
    %460 = vector.broadcast %459 : vector<16x1xf32> to vector<16x32xf32>
    %461 = arith.mulf %456, %460 : vector<16x32xf32>
    %462 = vector.broadcast %441 : vector<1x32xf32> to vector<16x32xf32>
    %463 = arith.mulf %461, %462 : vector<16x32xf32>
    %464 = vector.broadcast %443 : vector<1x32xf32> to vector<16x32xf32>
    %465 = arith.addf %463, %464 : vector<16x32xf32>
    %c1_210 = arith.constant 1 : index
    %c0_211 = arith.constant 0 : index
    %c0_212 = arith.constant 0 : index
    %466 = vector.load %arg21[%c1_210, %c0_211, %c0_212] : memref<2x128x32xf32, #tpu.memory_space<vmem>>, vector<1x128x32xf32>
    %467 = vector.shape_cast %466 : vector<1x128x32xf32> to vector<128x32xf32>
    %cst_213 = arith.constant dense<0.000000e+00> : vector<16x128xf32>
    %468 = tpu.matmul %465, %467, %cst_213 {dimension_numbers = #tpu.dot_dimension_numbers<[1], [1], [0], [0], [0, 0, 1, 0], [], []>} : vector<16x32xf32>, vector<128x32xf32>, vector<16x128xf32> -> vector<16x128xf32>
    %c1_214 = arith.constant 1 : index
    %c0_215 = arith.constant 0 : index
    %c0_216 = arith.constant 0 : index
    %469 = vector.load %arg22[%c1_214, %c0_215, %c0_216] : memref<2x1x128xf32, #tpu.memory_space<vmem>>, vector<1x1x128xf32>
    %470 = vector.shape_cast %469 : vector<1x1x128xf32> to vector<1x128xf32>
    %471 = vector.broadcast %470 : vector<1x128xf32> to vector<16x128xf32>
    %472 = arith.addf %468, %471 : vector<16x128xf32>
    %cst_217 = arith.constant 5.000000e-01 : f32
    %473 = vector.broadcast %cst_217 : f32 to vector<16x128xf32>
    %474 = arith.mulf %473, %472 : vector<16x128xf32>
    %cst_218 = arith.constant 0.707106769 : f32
    %475 = vector.broadcast %cst_218 : f32 to vector<16x128xf32>
    %476 = arith.mulf %472, %475 : vector<16x128xf32>
    %cst_219 = arith.constant 0.000000e+00 : f32
    %477 = vector.broadcast %cst_219 : f32 to vector<16x128xf32>
    %478 = arith.cmpf oge, %476, %477 : vector<16x128xf32>
    %cst_220 = arith.constant 1.000000e+00 : f32
    %cst_221 = arith.constant -1.000000e+00 : f32
    %479 = vector.broadcast %cst_220 : f32 to vector<16x128xf32>
    %480 = vector.broadcast %cst_221 : f32 to vector<16x128xf32>
    %481 = arith.select %478, %479, %480 : vector<16x128xi1>, vector<16x128xf32>
    %482 = math.absf %476 : vector<16x128xf32>
    %cst_222 = arith.constant 0.327591091 : f32
    %483 = vector.broadcast %cst_222 : f32 to vector<16x128xf32>
    %484 = arith.mulf %483, %482 : vector<16x128xf32>
    %cst_223 = arith.constant 1.000000e+00 : f32
    %485 = vector.broadcast %cst_223 : f32 to vector<16x128xf32>
    %486 = arith.addf %485, %484 : vector<16x128xf32>
    %cst_224 = arith.constant 1.000000e+00 : f32
    %487 = vector.broadcast %cst_224 : f32 to vector<16x128xf32>
    %488 = arith.divf %487, %486 : vector<16x128xf32>
    %cst_225 = arith.constant 1.06140542 : f32
    %489 = vector.broadcast %cst_225 : f32 to vector<16x128xf32>
    %490 = arith.mulf %489, %488 : vector<16x128xf32>
    %cst_226 = arith.constant -1.45315206 : f32
    %491 = vector.broadcast %cst_226 : f32 to vector<16x128xf32>
    %492 = arith.addf %490, %491 : vector<16x128xf32>
    %493 = arith.mulf %492, %488 : vector<16x128xf32>
    %cst_227 = arith.constant 1.42141378 : f32
    %494 = vector.broadcast %cst_227 : f32 to vector<16x128xf32>
    %495 = arith.addf %493, %494 : vector<16x128xf32>
    %496 = arith.mulf %495, %488 : vector<16x128xf32>
    %cst_228 = arith.constant -0.284496725 : f32
    %497 = vector.broadcast %cst_228 : f32 to vector<16x128xf32>
    %498 = arith.addf %496, %497 : vector<16x128xf32>
    %499 = arith.mulf %498, %488 : vector<16x128xf32>
    %cst_229 = arith.constant 0.254829586 : f32
    %500 = vector.broadcast %cst_229 : f32 to vector<16x128xf32>
    %501 = arith.addf %499, %500 : vector<16x128xf32>
    %502 = arith.mulf %501, %488 : vector<16x128xf32>
    %cst_230 = arith.constant 0.000000e+00 : f32
    %503 = vector.broadcast %cst_230 : f32 to vector<16x128xf32>
    %504 = arith.subf %503, %482 : vector<16x128xf32>
    %505 = arith.mulf %504, %482 : vector<16x128xf32>
    %506 = math.exp %505 : vector<16x128xf32>
    %507 = arith.mulf %502, %506 : vector<16x128xf32>
    %cst_231 = arith.constant 1.000000e+00 : f32
    %508 = vector.broadcast %cst_231 : f32 to vector<16x128xf32>
    %509 = arith.subf %508, %507 : vector<16x128xf32>
    %510 = arith.mulf %481, %509 : vector<16x128xf32>
    %cst_232 = arith.constant 1.000000e+00 : f32
    %511 = vector.broadcast %cst_232 : f32 to vector<16x128xf32>
    %512 = arith.addf %511, %510 : vector<16x128xf32>
    %513 = arith.mulf %474, %512 : vector<16x128xf32>
    %c1_233 = arith.constant 1 : index
    %c0_234 = arith.constant 0 : index
    %c0_235 = arith.constant 0 : index
    %514 = vector.load %arg23[%c1_233, %c0_234, %c0_235] : memref<2x32x128xf32, #tpu.memory_space<vmem>>, vector<1x32x128xf32>
    %515 = vector.shape_cast %514 : vector<1x32x128xf32> to vector<32x128xf32>
    %cst_236 = arith.constant dense<0.000000e+00> : vector<16x32xf32>
    %516 = tpu.matmul %513, %515, %cst_236 {dimension_numbers = #tpu.dot_dimension_numbers<[1], [1], [0], [0], [0, 0, 1, 0], [], []>} : vector<16x128xf32>, vector<32x128xf32>, vector<16x32xf32> -> vector<16x32xf32>
    %517 = arith.addf %439, %516 : vector<16x32xf32>
    %c1_237 = arith.constant 1 : index
    %c0_238 = arith.constant 0 : index
    %c0_239 = arith.constant 0 : index
    %518 = vector.load %arg24[%c1_237, %c0_238, %c0_239] : memref<2x1x32xf32, #tpu.memory_space<vmem>>, vector<1x1x32xf32>
    %519 = vector.shape_cast %518 : vector<1x1x32xf32> to vector<1x32xf32>
    %520 = vector.broadcast %519 : vector<1x32xf32> to vector<16x32xf32>
    %521 = arith.addf %517, %520 : vector<16x32xf32>
    %c0_240 = arith.constant 0 : index
    %c0_241 = arith.constant 0 : index
    %522 = vector.load %arg25[%c0_240, %c0_241] : memref<64x32xf32, #tpu.memory_space<vmem>>, vector<64x32xf32>
    %cst_242 = arith.constant dense<0.000000e+00> : vector<16x64xf32>
    %523 = tpu.matmul %521, %522, %cst_242 {dimension_numbers = #tpu.dot_dimension_numbers<[1], [1], [0], [0], [0, 0, 1, 0], [], []>} : vector<16x32xf32>, vector<64x32xf32>, vector<16x64xf32> -> vector<16x64xf32>
    %c0_243 = arith.constant 0 : index
    %c0_244 = arith.constant 0 : index
    %524 = vector.load %arg27[%c0_243, %c0_244] : memref<16x64xf32, #tpu.memory_space<vmem>>, vector<16x64xf32>
    tpu.vector_store %arg27[%c0_243, %c0_244], %523 {strides = array<i32>} : memref<16x64xf32, #tpu.memory_space<vmem>>, vector<16x64xf32>,
    %cst_245 = arith.constant dense<0xFF800000> : vector<16xf32>
    %525 = vector.multi_reduction <maximumf>, %523, %cst_245 [1] : vector<16x64xf32> to vector<16xf32>
    %526 = vector.shape_cast %525 : vector<16xf32> to vector<16x1xf32>
    %527 = vector.broadcast %526 : vector<16x1xf32> to vector<16x64xf32>
    %528 = arith.subf %523, %527 : vector<16x64xf32>
    %529 = math.exp %528 : vector<16x64xf32>
    %cst_246 = arith.constant dense<0.000000e+00> : vector<16xf32>
    %530 = vector.multi_reduction <add>, %529, %cst_246 [1] : vector<16x64xf32> to vector<16xf32>
    %531 = vector.shape_cast %530 : vector<16xf32> to vector<16x1xf32>
    %532 = math.log %531 : vector<16x1xf32>
    %533 = arith.addf %526, %532 : vector<16x1xf32>
    %534 = vector.broadcast %533 : vector<16x1xf32> to vector<16x64xf32>
    %535 = arith.subf %523, %534 : vector<16x64xf32>
    %536 = vector.broadcast %1 : vector<16x1xi32> to vector<16x64xi32>
    %537 = arith.cmpi eq, %2, %536 : vector<16x64xi32>
    %538 = arith.extui %537 : vector<16x64xi1> to vector<16x64xi32>
    %539 = arith.sitofp %538 : vector<16x64xi32> to vector<16x64xf32>
    %540 = arith.mulf %535, %539 : vector<16x64xf32>
    %cst_247 = arith.constant dense<0.000000e+00> : vector<16xf32>
    %541 = vector.multi_reduction <add>, %540, %cst_247 [1] : vector<16x64xf32> to vector<16xf32>
    %542 = vector.shape_cast %541 : vector<16xf32> to vector<16x1xf32>
    %cst_248 = arith.constant 0.000000e+00 : f32
    %543 = vector.broadcast %cst_248 : f32 to vector<16x1xf32>
    %544 = arith.subf %543, %542 : vector<16x1xf32>
    %cst_249 = arith.constant dense<0.000000e+00> : vector<1xf32>
    %545 = vector.multi_reduction <add>, %544, %cst_249 [0] : vector<16x1xf32> to vector<1xf32>
    %546 = vector.shape_cast %545 : vector<1xf32> to vector<1x1xf32>
    %cst_250 = arith.constant 6.250000e-02 : f32
    %547 = vector.broadcast %cst_250 : f32 to vector<1x1xf32>
    %548 = arith.mulf %546, %547 : vector<1x1xf32>
    %c0_251 = arith.constant 0 : index
    %c0_252 = arith.constant 0 : index
    %549 = vector.load %arg26[%c0_251, %c0_252] : memref<1x1xf32, #tpu.memory_space<vmem>>, vector<1x1xf32>
    tpu.vector_store %arg26[%c0_251, %c0_252], %548 {strides = array<i32>} : memref<1x1xf32, #tpu.memory_space<vmem>>, vector<1x1xf32>,
    return
  }
}

</mosaic_0001>

<llo_original>
// kernel: forward.1
$region0: #{forward.1}
  #allocation0 [shape = 'u32[]', space=smem, size = 0x4, offset = 0x4, fixed_abs, tag = 'smem constant byte address 0x4 - core index']
  #allocation1 [shape = 'u32[72,128]{1,0:T(1,128)}', space=vmem, size = 0x9000, scoped, tag = 'internal scratch']
  %s0 = inlined_call_operand.vmem [shape: s32[16,1], index: 0, kind: input, shape index: {}]
  %s1 = inlined_call_operand.vmem [shape: s32[16,1], index: 1, kind: input, shape index: {}]
  %s2 = inlined_call_operand.vmem [shape: f32[64,32], index: 2, kind: input, shape index: {}]
  %s3 = inlined_call_operand.vmem [shape: f32[16,32], index: 3, kind: input, shape index: {}]
  %s4 = inlined_call_operand.vmem [shape: f32[16,32], index: 4, kind: input, shape index: {}]
  %s5 = inlined_call_operand.vmem [shape: f32[32,32], index: 5, kind: input, shape index: {}]
  %s6 = inlined_call_operand.vmem [shape: f32[16,16], index: 6, kind: input, shape index: {}]
  %s7 = inlined_call_operand.vmem [shape: f32[16,16], index: 7, kind: input, shape index: {}]
  %s8 = inlined_call_operand.vmem [shape: f32[2,1,32], index: 8, kind: input, shape index: {}]
  %s9 = inlined_call_operand.vmem [shape: f32[2,96,32], index: 9, kind: input, shape index: {}]
  %s10 = inlined_call_operand.vmem [shape: f32[2,32,32], index: 10, kind: input, shape index: {}]
  %s11 = inlined_call_operand.vmem [shape: f32[2,1,32], index: 11, kind: input, shape index: {}]
  %s12 = inlined_call_operand.vmem [shape: f32[2,256,32], index: 12, kind: input, shape index: {}]
  %s13 = inlined_call_operand.vmem [shape: f32[2,32,128], index: 13, kind: input, shape index: {}]
  %s14 = inlined_call_operand.vmem [shape: f32[1,32], index: 14, kind: input, shape index: {}]
  %s15 = inlined_call_operand.vmem [shape: f32[2,1,32], index: 15, kind: input, shape index: {}]
  %s16 = inlined_call_operand.vmem [shape: f32[2,1,32], index: 16, kind: input, shape index: {}]
  %s17 = inlined_call_operand.vmem [shape: f32[2,16,16], index: 17, kind: input, shape index: {}]
  %s18 = inlined_call_operand.vmem [shape: f32[2,16,1], index: 18, kind: input, shape index: {}]
  %s19 = inlined_call_operand.vmem [shape: f32[2,1,32], index: 19, kind: input, shape index: {}]
  %s20 = inlined_call_operand.vmem [shape: f32[2,1,32], index: 20, kind: input, shape index: {}]
  %s21 = inlined_call_operand.vmem [shape: f32[2,128,32], index: 21, kind: input, shape index: {}]
  %s22 = inlined_call_operand.vmem [shape: f32[2,1,128], index: 22, kind: input, shape index: {}]
  %s23 = inlined_call_operand.vmem [shape: f32[2,32,128], index: 23, kind: input, shape index: {}]
  %s24 = inlined_call_operand.vmem [shape: f32[2,1,32], index: 24, kind: input, shape index: {}]
  %s25 = inlined_call_operand.vmem [shape: f32[64,32], index: 25, kind: input, shape index: {}]
  %s26 = inlined_call_operand.hbm [shape: f32[1,1], index: 26, kind: output, shape index: {0}]
  %s27 = inlined_call_operand.hbm [shape: f32[16,64], index: 27, kind: output, shape index: {1}]
  %28 = xla_tuple %s26, %s27
  %s29 = sld [smem:[#allocation0]]
  $region122: #{forward.1} parent=0
    _
  %s31 = ssub.s32 1, %s29
  %s32 = scalar_select 0, %s31, %s29
  $region1: #{forward.1} parent=0
    #allocation2 [shape = 'u8[512]{0}', space=vmem, size = 0x400, scoped, tag = 'output window, operand 0, single buffered']
    #allocation3 [shape = 's32[1]{0}', space=sflag, size = 0x4, scoped, tag = 'scoped memory for forward.1']
    #allocation4 [shape = 'u8[8192]{0}', space=vmem, size = 0x2000, scoped, tag = 'output window, operand 1, single buffered']
    #allocation5 [shape = 's32[1]{0}', space=sflag, size = 0x4, scoped, tag = 'scoped memory for forward.1']
    %33 = vsyncpa [#allocation3], 0
    %34 = vsyncpa [#allocation5], 0
    // Predicated region
    $region2: #{forward.1} parent=1 // pred_check
      _
    $region3: #{forward.1} parent=1 // pred_check_branch
      %36 = sbr.rel (0) target = $region5
    $region4: #{forward.1} parent=1 // pred_region
      _
    $region5: #{forward.1} parent=1 // pred_fallthru
      _
    // Predicated region
    $region6: #{forward.1} parent=1 // pred_check
      _
    $region7: #{forward.1} parent=1 // pred_check_branch
      %38 = sbr.rel (0) target = $region9
    $region8: #{forward.1} parent=1 // pred_region
      _
    $region9: #{forward.1} parent=1 // pred_fallthru
      _
    // Predicated region
    $region10: #{forward.1} parent=1 // pred_check
      _
    $region11: #{forward.1} parent=1 // pred_check_branch
      %40 = sbr.rel (0) target = $region13
    $region12: #{forward.1} parent=1 // pred_region
      _
    $region13: #{forward.1} parent=1 // pred_fallthru
      _
    // Predicated region
    $region14: #{forward.1} parent=1 // pred_check
      _
    $region15: #{forward.1} parent=1 // pred_check_branch
      %42 = sbr.rel (0) target = $region17
    $region16: #{forward.1} parent=1 // pred_region
      _
    $region17: #{forward.1} parent=1 // pred_fallthru
      _
    // Predicated region
    $region18: #{forward.1} parent=1 // pred_check
      _
    $region19: #{forward.1} parent=1 // pred_check_branch
      %44 = sbr.rel (0) target = $region21
    $region20: #{forward.1} parent=1 // pred_region
      _
    $region21: #{forward.1} parent=1 // pred_fallthru
      _
    // Predicated region
    $region22: #{forward.1} parent=1 // pred_check
      _
    $region23: #{forward.1} parent=1 // pred_check_branch
      %46 = sbr.rel (0) target = $region25
    $region24: #{forward.1} parent=1 // pred_region
      _
    $region25: #{forward.1} parent=1 // pred_fallthru
      _
    // Predicated region
    $region26: #{forward.1} parent=1 // pred_check
      _
    $region27: #{forward.1} parent=1 // pred_check_branch
      %48 = sbr.rel (0) target = $region29
    $region28: #{forward.1} parent=1 // pred_region
      _
    $region29: #{forward.1} parent=1 // pred_fallthru
      _
    // Predicated region
    $region30: #{forward.1} parent=1 // pred_check
      _
    $region31: #{forward.1} parent=1 // pred_check_branch
      %50 = sbr.rel (0) target = $region33
    $region32: #{forward.1} parent=1 // pred_region
      _
    $region33: #{forward.1} parent=1 // pred_fallthru
      _
    // Predicated region
    $region34: #{forward.1} parent=1 // pred_check
      _
    $region35: #{forward.1} parent=1 // pred_check_branch
      %52 = sbr.rel (0) target = $region37
    $region36: #{forward.1} parent=1 // pred_region
      _
    $region37: #{forward.1} parent=1 // pred_fallthru
      _
    // Predicated region
    $region38: #{forward.1} parent=1 // pred_check
      _
    $region39: #{forward.1} parent=1 // pred_check_branch
      %54 = sbr.rel (0) target = $region41
    $region40: #{forward.1} parent=1 // pred_region
      _
    $region41: #{forward.1} parent=1 // pred_fallthru
      _
    // Predicated region
    $region42: #{forward.1} parent=1 // pred_check
      _
    $region43: #{forward.1} parent=1 // pred_check_branch
      %56 = sbr.rel (0) target = $region45
    $region44: #{forward.1} parent=1 // pred_region
      _
    $region45: #{forward.1} parent=1 // pred_fallthru
      _
    // Predicated region
    $region46: #{forward.1} parent=1 // pred_check
      _
    $region47: #{forward.1} parent=1 // pred_check_branch
      %58 = sbr.rel (0) target = $region49
    $region48: #{forward.1} parent=1 // pred_region
      _
    $region49: #{forward.1} parent=1 // pred_fallthru
      _
    // Predicated region
    $region50: #{forward.1} parent=1 // pred_check
      _
    $region51: #{forward.1} parent=1 // pred_check_branch
      %60 = sbr.rel (0) target = $region53
    $region52: #{forward.1} parent=1 // pred_region
      _
    $region53: #{forward.1} parent=1 // pred_fallthru
      _
    // Predicated region
    $region54: #{forward.1} parent=1 // pred_check
      _
    $region55: #{forward.1} parent=1 // pred_check_branch
      %62 = sbr.rel (0) target = $region57
    $region56: #{forward.1} parent=1 // pred_region
      _
    $region57: #{forward.1} parent=1 // pred_fallthru
      _
    // Predicated region
    $region58: #{forward.1} parent=1 // pred_check
      _
    $region59: #{forward.1} parent=1 // pred_check_branch
      %64 = sbr.rel (0) target = $region61
    $region60: #{forward.1} parent=1 // pred_region
      _
    $region61: #{forward.1} parent=1 // pred_fallthru
      _
    // Predicated region
    $region62: #{forward.1} parent=1 // pred_check
      _
    $region63: #{forward.1} parent=1 // pred_check_branch
      %66 = sbr.rel (0) target = $region65
    $region64: #{forward.1} parent=1 // pred_region
      _
    $region65: #{forward.1} parent=1 // pred_fallthru
      _
    // Predicated region
    $region66: #{forward.1} parent=1 // pred_check
      _
    $region67: #{forward.1} parent=1 // pred_check_branch
      %68 = sbr.rel (0) target = $region69
    $region68: #{forward.1} parent=1 // pred_region
      _
    $region69: #{forward.1} parent=1 // pred_fallthru
      _
    // Predicated region
    $region70: #{forward.1} parent=1 // pred_check
      _
    $region71: #{forward.1} parent=1 // pred_check_branch
      %70 = sbr.rel (0) target = $region73
    $region72: #{forward.1} parent=1 // pred_region
      _
    $region73: #{forward.1} parent=1 // pred_fallthru
      _
    // Predicated region
    $region74: #{forward.1} parent=1 // pred_check
      _
    $region75: #{forward.1} parent=1 // pred_check_branch
      %72 = sbr.rel (0) target = $region77
    $region76: #{forward.1} parent=1 // pred_region
      _
    $region77: #{forward.1} parent=1 // pred_fallthru
      _
    // Predicated region
    $region78: #{forward.1} parent=1 // pred_check
      _
    $region79: #{forward.1} parent=1 // pred_check_branch
      %74 = sbr.rel (0) target = $region81
    $region80: #{forward.1} parent=1 // pred_region
      _
    $region81: #{forward.1} parent=1 // pred_fallthru
      _
    // Predicated region
    $region82: #{forward.1} parent=1 // pred_check
      _
    $region83: #{forward.1} parent=1 // pred_check_branch
      %76 = sbr.rel (0) target = $region85
    $region84: #{forward.1} parent=1 // pred_region
      _
    $region85: #{forward.1} parent=1 // pred_fallthru
      _
    // Predicated region
    $region86: #{forward.1} parent=1 // pred_check
      _
    $region87: #{forward.1} parent=1 // pred_check_branch
      %78 = sbr.rel (0) target = $region89
    $region88: #{forward.1} parent=1 // pred_region
      _
    $region89: #{forward.1} parent=1 // pred_fallthru
      _
    // Predicated region
    $region90: #{forward.1} parent=1 // pred_check
      _
    $region91: #{forward.1} parent=1 // pred_check_branch
      %80 = sbr.rel (0) target = $region93
    $region92: #{forward.1} parent=1 // pred_region
      _
    $region93: #{forward.1} parent=1 // pred_fallthru
      _
    // Predicated region
    $region94: #{forward.1} parent=1 // pred_check
      _
    $region95: #{forward.1} parent=1 // pred_check_branch
      %82 = sbr.rel (0) target = $region97
    $region96: #{forward.1} parent=1 // pred_region
      _
    $region97: #{forward.1} parent=1 // pred_fallthru
      _
    // Predicated region
    $region98: #{forward.1} parent=1 // pred_check
      _
    $region99: #{forward.1} parent=1 // pred_check_branch
      %84 = sbr.rel (0) target = $region101
    $region100: #{forward.1} parent=1 // pred_region
      _
    $region101: #{forward.1} parent=1 // pred_fallthru
      _
    // Predicated region
    $region102: #{forward.1} parent=1 // pred_check
      _
    $region103: #{forward.1} parent=1 // pred_check_branch
      %86 = sbr.rel (0) target = $region105
    $region104: #{forward.1} parent=1 // pred_region
      _
    $region105: #{forward.1} parent=1 // pred_fallthru
      _
    %v87 = vld [vmem:[%s0] sm:$0xff]
    %v88 = vld [vmem:[%s0 + $0x8] sm:$0xff]
    %v89 = vld [vmem:[%s1] sm:$0xff]
    %v90 = vld [vmem:[%s1 + $0x8] sm:$0xff]
    %v91 = vlaneseq
    %v92 = vand.u32 %v91, 127
    %93 = vset.pattern.permute.xlu0 0
    %94 = vperm.xlu0 %93, %v87
    %v95 = vpop.permute.xlu0 %94
    %96 = vset.pattern.permute.xlu0 0
    %97 = vperm.xlu0 %96, %v88
    %v98 = vpop.permute.xlu0 %97
    %vm99 = vcmp.eq.s32.totalorder %v92, %v95
    %vm100 = vcmp.eq.s32.totalorder %v92, %v98
    %v101 = vsel %vm99, 1, 0
    %v102 = vsel %vm100, 1, 0
    %v103 = vcvt.s32.f32 %v101
    %v104 = vcvt.s32.f32 %v102
    %v105 = vld [vmem:[%s2] sm:$0xff]
    %v106 = vld [vmem:[%s2 + $0x8] sm:$0xff]
    %v107 = vld [vmem:[%s2 + $0x10] sm:$0xff]
    %v108 = vld [vmem:[%s2 + $0x18] sm:$0xff]
    %v109 = vld [vmem:[%s2 + $0x20] sm:$0xff]
    %v110 = vld [vmem:[%s2 + $0x28] sm:$0xff]
    %v111 = vld [vmem:[%s2 + $0x30] sm:$0xff]
    %v112 = vld [vmem:[%s2 + $0x38] sm:$0xff]
    %vm113 = vcmask 523264
    %v115 = vsel %vm113, %v103, 0
    %v118 = vsel %vm113, %v104, 0
    %120 = vmatpush.msra.mxu0 0.0
    %121 = vmatpush.msra.mxu0 0.0
    %122 = vmatpush.msra.mxu0 0.0
    %123 = vmatpush.msra.mxu0 0.0
    %124 = vmatpush.msra.mxu0 0.0
    %125 = vmatpush.msra.mxu0 0.0
    %126 = vmatpush.msra.mxu0 0.0
    %127 = vmatpush.msra.mxu0 0.0
    %128 = vmatpush.msra.mxu0 %v112
    %129 = vmatpush.msra.mxu0 %v111
    %130 = vmatpush.msra.mxu0 %v110
    %131 = vmatpush.msra.mxu0 %v109
    %132 = vmatpush.msra.mxu0 %v108
    %133 = vmatpush.msra.mxu0 %v107
    %134 = vmatpush.msra.mxu0 %v106
    %135 = vmatpush.msra.mxu0 %v105
    %136 = vmatmul.f32.gmra.mxu0 %v115
    %v137 = vpop.f32.mrf.mxu0
    %v138 = vadd.f32 0.0, %v137
    %139 = vmatmul.f32.gmra.mxu0 %v118
    %v140 = vpop.f32.mrf.mxu0
    %v141 = vadd.f32 0.0, %v140
    %142 = vdwg.mxu0
    %v143 = vld [vmem:[%s3] sm:$0xff]
    %v144 = vld [vmem:[%s3 + $0x8] sm:$0xff]
    %v145 = vld [vmem:[%s4] sm:$0xff]
    %v146 = vld [vmem:[%s4 + $0x8] sm:$0xff]
    %v147 = vld [vmem:[%s5] sm:$0xff]
    %v148 = vld [vmem:[%s5 + $0x8] sm:$0xff]
    %v149 = vld [vmem:[%s5 + $0x10] sm:$0xff]
    %v150 = vld [vmem:[%s5 + $0x18] sm:$0xff]
    %v151 = vld [vmem:[%s6] sm:$0xff]
    %v152 = vld [vmem:[%s6 + $0x8] sm:$0xff]
    %v153 = vld [vmem:[%s8] sm:$0x1]
    %v154 = vmul.f32 %v138, %v138
    %v155 = vmul.f32 %v141, %v141
    %vm156 = vcmask 261120
    %v157 = vsel %vm156, %v154, 0.0
    %158 = vadd.xlane.f32.xlu0 %v157
    %v159 = vpop.xlane.xlu0 %158
    %v160 = vsel %vm156, %v155, 0.0
    %161 = vadd.xlane.f32.xlu0 %v160
    %v162 = vpop.xlane.xlu0 %161
    %v163 = vrcp.pop 32.0
    %v164 = vmul.f32 32.0, %v163
    %v165 = vsub.f32 1.0, %v164
    %v166 = vmul.f32 %v163, %v165
    %v167 = vadd.f32 %v163, %v166
    %vm168 = vweird.f32 %v163
    %v169 = vsel %vm168, %v163, %v167
    %v170 = vmul.f32 %v159, %v169
    %v171 = vmul.f32 %v162, %v169
    %v172 = vadd.f32 %v170, 1e-06
    %v173 = vadd.f32 %v171, 1e-06
    %v174 = vrsqrt.pop %v172
    %v175 = vmul.f32 %v174, %v172
    %v176 = vmul.f32 %v175, %v174
    %v177 = vmul.f32 0.5, %v176
    %v178 = vsub.f32 1.5, %v177
    %v179 = vmul.f32 %v174, %v178
    %vm180 = vweird.f32 %v172
    %vm181 = vweird.f32 %v174
    %vm182 = vmor %vm180, %vm181
    %v183 = vsel %vm182, %v174, %v179
    %v184 = vrsqrt.pop %v173
    %v185 = vmul.f32 %v184, %v173
    %v186 = vmul.f32 %v185, %v184
    %v187 = vmul.f32 0.5, %v186
    %v188 = vsub.f32 1.5, %v187
    %v189 = vmul.f32 %v184, %v188
    %vm190 = vweird.f32 %v173
    %vm191 = vweird.f32 %v184
    %vm192 = vmor %vm190, %vm191
    %v193 = vsel %vm192, %v184, %v189
    %v194 = vmul.f32 %v138, %v183
    %v195 = vmul.f32 %v141, %v193
    %v197 = vperm.slane %v153, 0
    %v199 = vmul.f32 %v194, %v197
    %v200 = vmul.f32 %v195, %v197
    %v201 = vld [vmem:[%s9] sm:$0xff]
    %v202 = vld [vmem:[%s9 + $0x8] sm:$0xff]
    %v203 = vld [vmem:[%s9 + $0x10] sm:$0xff]
    %v204 = vld [vmem:[%s9 + $0x18] sm:$0xff]
    %v205 = vld [vmem:[%s9 + $0x20] sm:$0xff]
    %v206 = vld [vmem:[%s9 + $0x28] sm:$0xff]
    %v207 = vld [vmem:[%s9 + $0x30] sm:$0xff]
    %v208 = vld [vmem:[%s9 + $0x38] sm:$0xff]
    %v209 = vld [vmem:[%s9 + $0x40] sm:$0xff]
    %v210 = vld [vmem:[%s9 + $0x48] sm:$0xff]
    %v211 = vld [vmem:[%s9 + $0x50] sm:$0xff]
    %v212 = vld [vmem:[%s9 + $0x58] sm:$0xff]
    %v214 = vsel %vm156, %v199, 0
    %v217 = vsel %vm156, %v200, 0
    %v220 = vsel %vm156, %v201, 0
    %v223 = vsel %vm156, %v202, 0
    %v226 = vsel %vm156, %v203, 0
    %v229 = vsel %vm156, %v204, 0
    %v232 = vsel %vm156, %v205, 0
    %v235 = vsel %vm156, %v206, 0
    %v238 = vsel %vm156, %v207, 0
    %v241 = vsel %vm156, %v208, 0
    %v244 = vsel %vm156, %v209, 0
    %v247 = vsel %vm156, %v210, 0
    %v250 = vsel %vm156, %v211, 0
    %v253 = vsel %vm156, %v212, 0
    %255 = vmatpush.xpose.msra.mxu0 0.0
    %256 = vmatpush.xpose.msra.mxu0 0.0
    %257 = vmatpush.xpose.msra.mxu0 0.0
    %258 = vmatpush.xpose.msra.mxu0 0.0
    %259 = vmatpush.xpose.msra.mxu0 %v253
    %260 = vmatpush.xpose.msra.mxu0 %v250
    %261 = vmatpush.xpose.msra.mxu0 %v247
    %262 = vmatpush.xpose.msra.mxu0 %v244
    %263 = vmatpush.xpose.msra.mxu0 %v241
    %264 = vmatpush.xpose.msra.mxu0 %v238
    %265 = vmatpush.xpose.msra.mxu0 %v235
    %266 = vmatpush.xpose.msra.mxu0 %v232
    %267 = vmatpush.xpose.msra.mxu0 %v229
    %268 = vmatpush.xpose.msra.mxu0 %v226
    %269 = vmatpush.xpose.msra.mxu0 %v223
    %270 = vmatpush.xpose.msra.mxu0 %v220
    %271 = vmatmul.f32.gmra.mxu0 %v214
    %v272 = vpop.f32.mrf.mxu0
    %v273 = vadd.f32 0.0, %v272
    %274 = vmatmul.f32.gmra.mxu0 %v217
    %v275 = vpop.f32.mrf.mxu0
    %v276 = vadd.f32 0.0, %v275
    %277 = vdwg.mxu0
    %v278 = vmul.f32 %v273, %v143
    %v279 = vmul.f32 %v276, %v144
    %v281 = vsel %vm156, %v273, 0
    %v284 = vsel %vm156, %v276, 0
    %286 = vmatpush.msra.mxu0 0.0
    %287 = vmatpush.msra.mxu0 0.0
    %288 = vmatpush.msra.mxu0 0.0
    %289 = vmatpush.msra.mxu0 0.0
    %290 = vmatpush.msra.mxu0 0.0
    %291 = vmatpush.msra.mxu0 0.0
    %292 = vmatpush.msra.mxu0 0.0
    %293 = vmatpush.msra.mxu0 0.0
    %294 = vmatpush.msra.mxu0 0.0
    %295 = vmatpush.msra.mxu0 0.0
    %296 = vmatpush.msra.mxu0 0.0
    %297 = vmatpush.msra.mxu0 0.0
    %298 = vmatpush.msra.mxu0 %v150
    %299 = vmatpush.msra.mxu0 %v149
    %300 = vmatpush.msra.mxu0 %v148
    %301 = vmatpush.msra.mxu0 %v147
    %302 = vmatmul.f32.gmra.mxu0 %v281
    %v303 = vpop.f32.mrf.mxu0
    %v304 = vadd.f32 0.0, %v303
    %305 = vmatmul.f32.gmra.mxu0 %v284
    %v306 = vpop.f32.mrf.mxu0
    %v307 = vadd.f32 0.0, %v306
    %308 = vdwg.mxu0
    %v309 = vmul.f32 %v304, %v145
    %v310 = vmul.f32 %v307, %v146
    %v311 = vadd.f32 %v278, %v309
    %v312 = vadd.f32 %v279, %v310
    %315 = vrot.lane.b32.xlu0 %v143, 32
    %v316 = vpop.permute.xlu0 %315
    %317 = vrot.lane.b32.xlu0 %v144, 32
    %v318 = vpop.permute.xlu0 %317
    %v321 = vmul.f32 %v273, %v316
    %v322 = vmul.f32 %v276, %v318
    %323 = vrot.lane.b32.xlu0 %v273, 96
    %v324 = vpop.permute.xlu0 %323
    %325 = vrot.lane.b32.xlu0 %v276, 96
    %v326 = vpop.permute.xlu0 %325
    %v327 = vsel %vm156, %v324, 0
    %v329 = vsel %vm156, %v326, 0
    %331 = vmatpush.msra.mxu0 0.0
    %332 = vmatpush.msra.mxu0 0.0
    %333 = vmatpush.msra.mxu0 0.0
    %334 = vmatpush.msra.mxu0 0.0
    %335 = vmatpush.msra.mxu0 0.0
    %336 = vmatpush.msra.mxu0 0.0
    %337 = vmatpush.msra.mxu0 0.0
    %338 = vmatpush.msra.mxu0 0.0
    %339 = vmatpush.msra.mxu0 0.0
    %340 = vmatpush.msra.mxu0 0.0
    %341 = vmatpush.msra.mxu0 0.0
    %342 = vmatpush.msra.mxu0 0.0
    %343 = vmatpush.msra.mxu0 %v150
    %344 = vmatpush.msra.mxu0 %v149
    %345 = vmatpush.msra.mxu0 %v148
    %346 = vmatpush.msra.mxu0 %v147
    %347 = vmatmul.f32.gmra.mxu0 %v327
    %v348 = vpop.f32.mrf.mxu0
    %v349 = vadd.f32 0.0, %v348
    %350 = vmatmul.f32.gmra.mxu0 %v329
    %v351 = vpop.f32.mrf.mxu0
    %v352 = vadd.f32 0.0, %v351
    %353 = vdwg.mxu0
    %v354 = vmul.f32 %v349, %v145
    %v355 = vmul.f32 %v352, %v146
    %358 = vrot.lane.b32.xlu0 %v354, 32
    %v359 = vpop.permute.xlu0 %358
    %360 = vrot.lane.b32.xlu0 %v355, 32
    %v361 = vpop.permute.xlu0 %360
    %v364 = vadd.f32 %v321, %v359
    %v365 = vadd.f32 %v322, %v361
    %368 = vrot.lane.b32.xlu0 %v364, 96
    %v369 = vpop.permute.xlu0 %368
    %370 = vrot.lane.b32.xlu0 %v365, 96
    %v371 = vpop.permute.xlu0 %370
    %vm372 = vcmask 64512
    %v374 = vsel %vm372, %v311, 0
    %v377 = vsel %vm372, %v312, 0
    %v379 = vsel %vm372, %v369, 0
    %v381 = vsel %vm372, %v371, 0
    %383 = vmatpush.xpose.msra.mxu0 0.0
    %384 = vmatpush.xpose.msra.mxu0 0.0
    %385 = vmatpush.xpose.msra.mxu0 0.0
    %386 = vmatpush.xpose.msra.mxu0 0.0
    %387 = vmatpush.xpose.msra.mxu0 0.0
    %388 = vmatpush.xpose.msra.mxu0 0.0
    %389 = vmatpush.xpose.msra.mxu0 0.0
    %390 = vmatpush.xpose.msra.mxu0 0.0
    %391 = vmatpush.xpose.msra.mxu0 0.0
    %392 = vmatpush.xpose.msra.mxu0 0.0
    %393 = vmatpush.xpose.msra.mxu0 0.0
    %394 = vmatpush.xpose.msra.mxu0 0.0
    %395 = vmatpush.xpose.msra.mxu0 0.0
    %396 = vmatpush.xpose.msra.mxu0 0.0
    %397 = vmatpush.xpose.msra.mxu0 %v381
    %398 = vmatpush.xpose.msra.mxu0 %v379
    %399 = vmatmul.f32.gmra.mxu0 %v374
    %v400 = vpop.f32.mrf.mxu0
    %v401 = vadd.f32 0.0, %v400
    %402 = vmatmul.f32.gmra.mxu0 %v377
    %v403 = vpop.f32.mrf.mxu0
    %v404 = vadd.f32 0.0, %v403
    %405 = vdwg.mxu0
    %v406 = vmul.f32 %v401, 0.35355338
    %v407 = vmul.f32 %v404, 0.35355338
    %v408 = vadd.f32 %v406, %v151
    %v409 = vadd.f32 %v407, %v152
    %vm410 = vcmask 130048
    %v411 = vsel %vm410, %v408, -inf
    %412 = vmax.xlane.f32.xlu0 %v411
    %v413 = vpop.xlane.xlu0 %412
    %v414 = vsel %vm410, %v409, -inf
    %415 = vmax.xlane.f32.xlu0 %v414
    %v416 = vpop.xlane.xlu0 %415
    %v417 = vsub.f32 %v408, %v413
    %v418 = vsub.f32 %v409, %v416
    %v419 = vmul.f32 %v417, 1.442695
    %v420 = vpow.pop %v419
    %v421 = vmul.f32 %v418, 1.442695
    %v422 = vpow.pop %v421
    %v423 = vsel %vm410, %v420, 0.0
    %424 = vadd.xlane.f32.xlu0 %v423
    %v425 = vpop.xlane.xlu0 %424
    %v426 = vsel %vm410, %v422, 0.0
    %427 = vadd.xlane.f32.xlu0 %v426
    %v428 = vpop.xlane.xlu0 %427
    %429 = vrot.lane.b32.xlu0 %v273, 64
    %v430 = vpop.permute.xlu0 %429
    %431 = vrot.lane.b32.xlu0 %v276, 64
    %v432 = vpop.permute.xlu0 %431
    %v436 = vsel %vm410, %v420, 0
    %v439 = vsel %vm410, %v422, 0
    %441 = vmatpush.msra.mxu0 0.0
    %442 = vmatpush.msra.mxu0 0.0
    %443 = vmatpush.msra.mxu0 0.0
    %444 = vmatpush.msra.mxu0 0.0
    %445 = vmatpush.msra.mxu0 0.0
    %446 = vmatpush.msra.mxu0 0.0
    %447 = vmatpush.msra.mxu0 0.0
    %448 = vmatpush.msra.mxu0 0.0
    %449 = vmatpush.msra.mxu0 0.0
    %450 = vmatpush.msra.mxu0 0.0
    %451 = vmatpush.msra.mxu0 0.0
    %452 = vmatpush.msra.mxu0 0.0
    %453 = vmatpush.msra.mxu0 0.0
    %454 = vmatpush.msra.mxu0 0.0
    %455 = vmatpush.msra.mxu0 %v432
    %456 = vmatpush.msra.mxu0 %v430
    %457 = vmatmul.f32.gmra.mxu0 %v436
    %v458 = vpop.f32.mrf.mxu0
    %v459 = vadd.f32 0.0, %v458
    %460 = vmatmul.f32.gmra.mxu0 %v439
    %v461 = vpop.f32.mrf.mxu0
    %v462 = vadd.f32 0.0, %v461
    %463 = vdwg.mxu0
    %v464 = vrcp.pop %v425
    %v465 = vmul.f32 %v425, %v464
    %v466 = vsub.f32 1.0, %v465
    %v467 = vmul.f32 %v464, %v466
    %v468 = vadd.f32 %v464, %v467
    %vm469 = vweird.f32 %v425
    %vm470 = vweird.f32 %v464
    %vm471 = vmor %vm469, %vm470
    %v472 = vsel %vm471, %v464, %v468
    %v473 = vand.u32 2147483647, %v425
    %vm474 = vcmp.eq.f32.partialorder %v473, 8.507059e+37
    %v475 = vand.u32 %v425, 2147483648
    %v476 = vor.u32 1.1754944e-38, %v475
    %v477 = vsel %vm474, %v476, %v472
    %v478 = vmul.f32 %v459, %v477
    %v479 = vrcp.pop %v428
    %v480 = vmul.f32 %v428, %v479
    %v481 = vsub.f32 1.0, %v480
    %v482 = vmul.f32 %v479, %v481
    %v483 = vadd.f32 %v479, %v482
    %vm484 = vweird.f32 %v428
    %vm485 = vweird.f32 %v479
    %vm486 = vmor %vm484, %vm485
    %v487 = vsel %vm486, %v479, %v483
    %v488 = vand.u32 2147483647, %v428
    %vm489 = vcmp.eq.f32.partialorder %v488, 8.507059e+37
    %v490 = vand.u32 %v428, 2147483648
    %v491 = vor.u32 1.1754944e-38, %v490
    %v492 = vsel %vm489, %v491, %v487
    %v493 = vmul.f32 %v462, %v492
    %494 = vrot.lane.b32.xlu0 %v311, 120
    %v495 = vpop.permute.xlu0 %494
    %496 = vrot.lane.b32.xlu0 %v312, 120
    %v497 = vpop.permute.xlu0 %496
    %498 = vrot.lane.b32.xlu0 %v364, 88
    %v499 = vpop.permute.xlu0 %498
    %500 = vrot.lane.b32.xlu0 %v365, 88
    %v501 = vpop.permute.xlu0 %500
    %v502 = vsel %vm372, %v495, 0
    %v504 = vsel %vm372, %v497, 0
    %v506 = vsel %vm372, %v499, 0
    %v508 = vsel %vm372, %v501, 0
    %510 = vmatpush.xpose.msra.mxu0 0.0
    %511 = vmatpush.xpose.msra.mxu0 0.0
    %512 = vmatpush.xpose.msra.mxu0 0.0
    %513 = vmatpush.xpose.msra.mxu0 0.0
    %514 = vmatpush.xpose.msra.mxu0 0.0
    %515 = vmatpush.xpose.msra.mxu0 0.0
    %516 = vmatpush.xpose.msra.mxu0 0.0
    %517 = vmatpush.xpose.msra.mxu0 0.0
    %518 = vmatpush.xpose.msra.mxu0 0.0
    %519 = vmatpush.xpose.msra.mxu0 0.0
    %520 = vmatpush.xpose.msra.mxu0 0.0
    %521 = vmatpush.xpose.msra.mxu0 0.0
    %522 = vmatpush.xpose.msra.mxu0 0.0
    %523 = vmatpush.xpose.msra.mxu0 0.0
    %524 = vmatpush.xpose.msra.mxu0 %v508
    %525 = vmatpush.xpose.msra.mxu0 %v506
    %526 = vmatmul.f32.gmra.mxu0 %v502
    %v527 = vpop.f32.mrf.mxu0
    %v528 = vadd.f32 0.0, %v527
    %529 = vmatmul.f32.gmra.mxu0 %v504
    %v530 = vpop.f32.mrf.mxu0
    %v531 = vadd.f32 0.0, %v530
    %532 = vdwg.mxu0
    %v533 = vmul.f32 %v528, 0.35355338
    %v534 = vmul.f32 %v531, 0.35355338
    %v535 = vadd.f32 %v533, %v151
    %v536 = vadd.f32 %v534, %v152
    %v537 = vsel %vm410, %v535, -inf
    %538 = vmax.xlane.f32.xlu0 %v537
    %v539 = vpop.xlane.xlu0 %538
    %v540 = vsel %vm410, %v536, -inf
    %541 = vmax.xlane.f32.xlu0 %v540
    %v542 = vpop.xlane.xlu0 %541
    %v543 = vsub.f32 %v535, %v539
    %v544 = vsub.f32 %v536, %v542
    %v545 = vmul.f32 %v543, 1.442695
    %v546 = vpow.pop %v545
    %v547 = vmul.f32 %v544, 1.442695
    %v548 = vpow.pop %v547
    %v549 = vsel %vm410, %v546, 0.0
    %550 = vadd.xlane.f32.xlu0 %v549
    %v551 = vpop.xlane.xlu0 %550
    %v552 = vsel %vm410, %v548, 0.0
    %553 = vadd.xlane.f32.xlu0 %v552
    %v554 = vpop.xlane.xlu0 %553
    %555 = vrot.lane.b32.xlu0 %v273, 56
    %v556 = vpop.permute.xlu0 %555
    %557 = vrot.lane.b32.xlu0 %v276, 56
    %v558 = vpop.permute.xlu0 %557
    %v562 = vsel %vm410, %v546, 0
    %v565 = vsel %vm410, %v548, 0
    %567 = vmatpush.msra.mxu0 0.0
    %568 = vmatpush.msra.mxu0 0.0
    %569 = vmatpush.msra.mxu0 0.0
    %570 = vmatpush.msra.mxu0 0.0
    %571 = vmatpush.msra.mxu0 0.0
    %572 = vmatpush.msra.mxu0 0.0
    %573 = vmatpush.msra.mxu0 0.0
    %574 = vmatpush.msra.mxu0 0.0
    %575 = vmatpush.msra.mxu0 0.0
    %576 = vmatpush.msra.mxu0 0.0
    %577 = vmatpush.msra.mxu0 0.0
    %578 = vmatpush.msra.mxu0 0.0
    %579 = vmatpush.msra.mxu0 0.0
    %580 = vmatpush.msra.mxu0 0.0
    %581 = vmatpush.msra.mxu0 %v558
    %582 = vmatpush.msra.mxu0 %v556
    %583 = vmatmul.f32.gmra.mxu0 %v562
    %v584 = vpop.f32.mrf.mxu0
    %v585 = vadd.f32 0.0, %v584
    %586 = vmatmul.f32.gmra.mxu0 %v565
    %v587 = vpop.f32.mrf.mxu0
    %v588 = vadd.f32 0.0, %v587
    %589 = vdwg.mxu0
    %v590 = vrcp.pop %v551
    %v591 = vmul.f32 %v551, %v590
    %v592 = vsub.f32 1.0, %v591
    %v593 = vmul.f32 %v590, %v592
    %v594 = vadd.f32 %v590, %v593
    %vm595 = vweird.f32 %v551
    %vm596 = vweird.f32 %v590
    %vm597 = vmor %vm595, %vm596
    %v598 = vsel %vm597, %v590, %v594
    %v599 = vand.u32 2147483647, %v551
    %vm600 = vcmp.eq.f32.partialorder %v599, 8.507059e+37
    %v601 = vand.u32 %v551, 2147483648
    %v602 = vor.u32 1.1754944e-38, %v601
    %v603 = vsel %vm600, %v602, %v598
    %v604 = vmul.f32 %v585, %v603
    %v605 = vrcp.pop %v554
    %v606 = vmul.f32 %v554, %v605
    %v607 = vsub.f32 1.0, %v606
    %v608 = vmul.f32 %v605, %v607
    %v609 = vadd.f32 %v605, %v608
    %vm610 = vweird.f32 %v554
    %vm611 = vweird.f32 %v605
    %vm612 = vmor %vm610, %vm611
    %v613 = vsel %vm612, %v605, %v609
    %v614 = vand.u32 2147483647, %v554
    %vm615 = vcmp.eq.f32.partialorder %v614, 8.507059e+37
    %v616 = vand.u32 %v554, 2147483648
    %v617 = vor.u32 1.1754944e-38, %v616
    %v618 = vsel %vm615, %v617, %v613
    %v619 = vmul.f32 %v588, %v618
    %620 = vrot.lane.b32.xlu0 %v311, 112
    %v621 = vpop.permute.xlu0 %620
    %622 = vrot.lane.b32.xlu0 %v312, 112
    %v623 = vpop.permute.xlu0 %622
    %624 = vrot.lane.b32.xlu0 %v364, 80
    %v625 = vpop.permute.xlu0 %624
    %626 = vrot.lane.b32.xlu0 %v365, 80
    %v627 = vpop.permute.xlu0 %626
    %v628 = vsel %vm372, %v621, 0
    %v630 = vsel %vm372, %v623, 0
    %v632 = vsel %vm372, %v625, 0
    %v634 = vsel %vm372, %v627, 0
    %636 = vmatpush.xpose.msra.mxu0 0.0
    %637 = vmatpush.xpose.msra.mxu0 0.0
    %638 = vmatpush.xpose.msra.mxu0 0.0
    %639 = vmatpush.xpose.msra.mxu0 0.0
    %640 = vmatpush.xpose.msra.mxu0 0.0
    %641 = vmatpush.xpose.msra.mxu0 0.0
    %642 = vmatpush.xpose.msra.mxu0 0.0
    %643 = vmatpush.xpose.msra.mxu0 0.0
    %644 = vmatpush.xpose.msra.mxu0 0.0
    %645 = vmatpush.xpose.msra.mxu0 0.0
    %646 = vmatpush.xpose.msra.mxu0 0.0
    %647 = vmatpush.xpose.msra.mxu0 0.0
    %648 = vmatpush.xpose.msra.mxu0 0.0
    %649 = vmatpush.xpose.msra.mxu0 0.0
    %650 = vmatpush.xpose.msra.mxu0 %v634
    %651 = vmatpush.xpose.msra.mxu0 %v632
    %652 = vmatmul.f32.gmra.mxu0 %v628
    %v653 = vpop.f32.mrf.mxu0
    %v654 = vadd.f32 0.0, %v653
    %655 = vmatmul.f32.gmra.mxu0 %v630
    %v656 = vpop.f32.mrf.mxu0
    %v657 = vadd.f32 0.0, %v656
    %658 = vdwg.mxu0
    %v659 = vmul.f32 %v654, 0.35355338
    %v660 = vmul.f32 %v657, 0.35355338
    %v661 = vadd.f32 %v659, %v151
    %v662 = vadd.f32 %v660, %v152
    %v663 = vsel %vm410, %v661, -inf
    %664 = vmax.xlane.f32.xlu0 %v663
    %v665 = vpop.xlane.xlu0 %664
    %v666 = vsel %vm410, %v662, -inf
    %667 = vmax.xlane.f32.xlu0 %v666
    %v668 = vpop.xlane.xlu0 %667
    %v669 = vsub.f32 %v661, %v665
    %v670 = vsub.f32 %v662, %v668
    %v671 = vmul.f32 %v669, 1.442695
    %v672 = vpow.pop %v671
    %v673 = vmul.f32 %v670, 1.442695
    %v674 = vpow.pop %v673
    %v675 = vsel %vm410, %v672, 0.0
    %676 = vadd.xlane.f32.xlu0 %v675
    %v677 = vpop.xlane.xlu0 %676
    %v678 = vsel %vm410, %v674, 0.0
    %679 = vadd.xlane.f32.xlu0 %v678
    %v680 = vpop.xlane.xlu0 %679
    %681 = vrot.lane.b32.xlu0 %v273, 48
    %v682 = vpop.permute.xlu0 %681
    %683 = vrot.lane.b32.xlu0 %v276, 48
    %v684 = vpop.permute.xlu0 %683
    %v688 = vsel %vm410, %v672, 0
    %v691 = vsel %vm410, %v674, 0
    %693 = vmatpush.msra.mxu0 0.0
    %694 = vmatpush.msra.mxu0 0.0
    %695 = vmatpush.msra.mxu0 0.0
    %696 = vmatpush.msra.mxu0 0.0
    %697 = vmatpush.msra.mxu0 0.0
    %698 = vmatpush.msra.mxu0 0.0
    %699 = vmatpush.msra.mxu0 0.0
    %700 = vmatpush.msra.mxu0 0.0
    %701 = vmatpush.msra.mxu0 0.0
    %702 = vmatpush.msra.mxu0 0.0
    %703 = vmatpush.msra.mxu0 0.0
    %704 = vmatpush.msra.mxu0 0.0
    %705 = vmatpush.msra.mxu0 0.0
    %706 = vmatpush.msra.mxu0 0.0
    %707 = vmatpush.msra.mxu0 %v684
    %708 = vmatpush.msra.mxu0 %v682
    %709 = vmatmul.f32.gmra.mxu0 %v688
    %v710 = vpop.f32.mrf.mxu0
    %v711 = vadd.f32 0.0, %v710
    %712 = vmatmul.f32.gmra.mxu0 %v691
    %v713 = vpop.f32.mrf.mxu0
    %v714 = vadd.f32 0.0, %v713
    %715 = vdwg.mxu0
    %v716 = vrcp.pop %v677
    %v717 = vmul.f32 %v677, %v716
    %v718 = vsub.f32 1.0, %v717
    %v719 = vmul.f32 %v716, %v718
    %v720 = vadd.f32 %v716, %v719
    %vm721 = vweird.f32 %v677
    %vm722 = vweird.f32 %v716
    %vm723 = vmor %vm721, %vm722
    %v724 = vsel %vm723, %v716, %v720
    %v725 = vand.u32 2147483647, %v677
    %vm726 = vcmp.eq.f32.partialorder %v725, 8.507059e+37
    %v727 = vand.u32 %v677, 2147483648
    %v728 = vor.u32 1.1754944e-38, %v727
    %v729 = vsel %vm726, %v728, %v724
    %v730 = vmul.f32 %v711, %v729
    %v731 = vrcp.pop %v680
    %v732 = vmul.f32 %v680, %v731
    %v733 = vsub.f32 1.0, %v732
    %v734 = vmul.f32 %v731, %v733
    %v735 = vadd.f32 %v731, %v734
    %vm736 = vweird.f32 %v680
    %vm737 = vweird.f32 %v731
    %vm738 = vmor %vm736, %vm737
    %v739 = vsel %vm738, %v731, %v735
    %v740 = vand.u32 2147483647, %v680
    %vm741 = vcmp.eq.f32.partialorder %v740, 8.507059e+37
    %v742 = vand.u32 %v680, 2147483648
    %v743 = vor.u32 1.1754944e-38, %v742
    %v744 = vsel %vm741, %v743, %v739
    %v745 = vmul.f32 %v714, %v744
    %746 = vrot.lane.b32.xlu0 %v311, 104
    %v747 = vpop.permute.xlu0 %746
    %748 = vrot.lane.b32.xlu0 %v312, 104
    %v749 = vpop.permute.xlu0 %748
    %750 = vrot.lane.b32.xlu0 %v364, 72
    %v751 = vpop.permute.xlu0 %750
    %752 = vrot.lane.b32.xlu0 %v365, 72
    %v753 = vpop.permute.xlu0 %752
    %v754 = vsel %vm372, %v747, 0
    %v756 = vsel %vm372, %v749, 0
    %v758 = vsel %vm372, %v751, 0
    %v760 = vsel %vm372, %v753, 0
    %762 = vmatpush.xpose.msra.mxu0 0.0
    %763 = vmatpush.xpose.msra.mxu0 0.0
    %764 = vmatpush.xpose.msra.mxu0 0.0
    %765 = vmatpush.xpose.msra.mxu0 0.0
    %766 = vmatpush.xpose.msra.mxu0 0.0
    %767 = vmatpush.xpose.msra.mxu0 0.0
    %768 = vmatpush.xpose.msra.mxu0 0.0
    %769 = vmatpush.xpose.msra.mxu0 0.0
    %770 = vmatpush.xpose.msra.mxu0 0.0
    %771 = vmatpush.xpose.msra.mxu0 0.0
    %772 = vmatpush.xpose.msra.mxu0 0.0
    %773 = vmatpush.xpose.msra.mxu0 0.0
    %774 = vmatpush.xpose.msra.mxu0 0.0
    %775 = vmatpush.xpose.msra.mxu0 0.0
    %776 = vmatpush.xpose.msra.mxu0 %v760
    %777 = vmatpush.xpose.msra.mxu0 %v758
    %778 = vmatmul.f32.gmra.mxu0 %v754
    %v779 = vpop.f32.mrf.mxu0
    %v780 = vadd.f32 0.0, %v779
    %781 = vmatmul.f32.gmra.mxu0 %v756
    %v782 = vpop.f32.mrf.mxu0
    %v783 = vadd.f32 0.0, %v782
    %784 = vdwg.mxu0
    %v785 = vmul.f32 %v780, 0.35355338
    %v786 = vmul.f32 %v783, 0.35355338
    %v787 = vadd.f32 %v785, %v151
    %v788 = vadd.f32 %v786, %v152
    %v789 = vsel %vm410, %v787, -inf
    %790 = vmax.xlane.f32.xlu0 %v789
    %v791 = vpop.xlane.xlu0 %790
    %v792 = vsel %vm410, %v788, -inf
    %793 = vmax.xlane.f32.xlu0 %v792
    %v794 = vpop.xlane.xlu0 %793
    %v795 = vsub.f32 %v787, %v791
    %v796 = vsub.f32 %v788, %v794
    %v797 = vmul.f32 %v795, 1.442695
    %v798 = vpow.pop %v797
    %v799 = vmul.f32 %v796, 1.442695
    %v800 = vpow.pop %v799
    %v801 = vsel %vm410, %v798, 0.0
    %802 = vadd.xlane.f32.xlu0 %v801
    %v803 = vpop.xlane.xlu0 %802
    %v804 = vsel %vm410, %v800, 0.0
    %805 = vadd.xlane.f32.xlu0 %v804
    %v806 = vpop.xlane.xlu0 %805
    %807 = vrot.lane.b32.xlu0 %v273, 40
    %v808 = vpop.permute.xlu0 %807
    %809 = vrot.lane.b32.xlu0 %v276, 40
    %v810 = vpop.permute.xlu0 %809
    %v814 = vsel %vm410, %v798, 0
    %v817 = vsel %vm410, %v800, 0
    %819 = vmatpush.msra.mxu0 0.0
    %820 = vmatpush.msra.mxu0 0.0
    %821 = vmatpush.msra.mxu0 0.0
    %822 = vmatpush.msra.mxu0 0.0
    %823 = vmatpush.msra.mxu0 0.0
    %824 = vmatpush.msra.mxu0 0.0
    %825 = vmatpush.msra.mxu0 0.0
    %826 = vmatpush.msra.mxu0 0.0
    %827 = vmatpush.msra.mxu0 0.0
    %828 = vmatpush.msra.mxu0 0.0
    %829 = vmatpush.msra.mxu0 0.0
    %830 = vmatpush.msra.mxu0 0.0
    %831 = vmatpush.msra.mxu0 0.0
    %832 = vmatpush.msra.mxu0 0.0
    %833 = vmatpush.msra.mxu0 %v810
    %834 = vmatpush.msra.mxu0 %v808
    %835 = vmatmul.f32.gmra.mxu0 %v814
    %v836 = vpop.f32.mrf.mxu0
    %v837 = vadd.f32 0.0, %v836
    %838 = vmatmul.f32.gmra.mxu0 %v817
    %v839 = vpop.f32.mrf.mxu0
    %v840 = vadd.f32 0.0, %v839
    %841 = vdwg.mxu0
    %v842 = vrcp.pop %v803
    %v843 = vmul.f32 %v803, %v842
    %v844 = vsub.f32 1.0, %v843
    %v845 = vmul.f32 %v842, %v844
    %v846 = vadd.f32 %v842, %v845
    %vm847 = vweird.f32 %v803
    %vm848 = vweird.f32 %v842
    %vm849 = vmor %vm847, %vm848
    %v850 = vsel %vm849, %v842, %v846
    %v851 = vand.u32 2147483647, %v803
    %vm852 = vcmp.eq.f32.partialorder %v851, 8.507059e+37
    %v853 = vand.u32 %v803, 2147483648
    %v854 = vor.u32 1.1754944e-38, %v853
    %v855 = vsel %vm852, %v854, %v850
    %v856 = vmul.f32 %v837, %v855
    %v857 = vrcp.pop %v806
    %v858 = vmul.f32 %v806, %v857
    %v859 = vsub.f32 1.0, %v858
    %v860 = vmul.f32 %v857, %v859
    %v861 = vadd.f32 %v857, %v860
    %vm862 = vweird.f32 %v806
    %vm863 = vweird.f32 %v857
    %vm864 = vmor %vm862, %vm863
    %v865 = vsel %vm864, %v857, %v861
    %v866 = vand.u32 2147483647, %v806
    %vm867 = vcmp.eq.f32.partialorder %v866, 8.507059e+37
    %v868 = vand.u32 %v806, 2147483648
    %v869 = vor.u32 1.1754944e-38, %v868
    %v870 = vsel %vm867, %v869, %v865
    %v871 = vmul.f32 %v840, %v870
    %874 = vrot.lane.b32.xlu0 %v604, 8
    %v875 = vpop.permute.xlu0 %874
    %876 = vrot.lane.b32.xlu0 %v619, 8
    %v877 = vpop.permute.xlu0 %876
    %882 = vrot.lane.b32.xlu0 %v730, 16
    %v883 = vpop.permute.xlu0 %882
    %884 = vrot.lane.b32.xlu0 %v745, 16
    %v885 = vpop.permute.xlu0 %884
    %890 = vrot.lane.b32.xlu0 %v856, 24
    %v891 = vpop.permute.xlu0 %890
    %892 = vrot.lane.b32.xlu0 %v871, 24
    %v893 = vpop.permute.xlu0 %892
    %v896 = vsel %vm372, %v478, %v875
    %v897 = vsel %vm372, %v493, %v877
    %v898 = vsel %vm410, %v896, %v883
    %v899 = vsel %vm410, %v897, %v885
    %vm900 = vcmask 195584
    %v901 = vsel %vm900, %v898, %v891
    %v902 = vsel %vm900, %v899, %v893
    %v903 = vld [vmem:[%s10] sm:$0xff]
    %v904 = vld [vmem:[%s10 + $0x8] sm:$0xff]
    %v905 = vld [vmem:[%s10 + $0x10] sm:$0xff]
    %v906 = vld [vmem:[%s10 + $0x18] sm:$0xff]
    %v908 = vsel %vm156, %v901, 0
    %v911 = vsel %vm156, %v902, 0
    %v914 = vsel %vm156, %v903, 0
    %v917 = vsel %vm156, %v904, 0
    %v920 = vsel %vm156, %v905, 0
    %v923 = vsel %vm156, %v906, 0
    %925 = vmatpush.xpose.msra.mxu0 0.0
    %926 = vmatpush.xpose.msra.mxu0 0.0
    %927 = vmatpush.xpose.msra.mxu0 0.0
    %928 = vmatpush.xpose.msra.mxu0 0.0
    %929 = vmatpush.xpose.msra.mxu0 0.0
    %930 = vmatpush.xpose.msra.mxu0 0.0
    %931 = vmatpush.xpose.msra.mxu0 0.0
    %932 = vmatpush.xpose.msra.mxu0 0.0
    %933 = vmatpush.xpose.msra.mxu0 0.0
    %934 = vmatpush.xpose.msra.mxu0 0.0
    %935 = vmatpush.xpose.msra.mxu0 0.0
    %936 = vmatpush.xpose.msra.mxu0 0.0
    %937 = vmatpush.xpose.msra.mxu0 %v923
    %938 = vmatpush.xpose.msra.mxu0 %v920
    %939 = vmatpush.xpose.msra.mxu0 %v917
    %940 = vmatpush.xpose.msra.mxu0 %v914
    %941 = vmatmul.f32.gmra.mxu0 %v908
    %v942 = vpop.f32.mrf.mxu0
    %v943 = vadd.f32 0.0, %v942
    %944 = vmatmul.f32.gmra.mxu0 %v911
    %v945 = vpop.f32.mrf.mxu0
    %v946 = vadd.f32 0.0, %v945
    %947 = vdwg.mxu0
    %v948 = vadd.f32 %v138, %v943
    %v949 = vadd.f32 %v141, %v946
    %v950 = vld [vmem:[%s11] sm:$0x1]
    %v951 = vmul.f32 %v948, %v948
    %v952 = vmul.f32 %v949, %v949
    %v953 = vsel %vm156, %v951, 0.0
    %954 = vadd.xlane.f32.xlu0 %v953
    %v955 = vpop.xlane.xlu0 %954
    %v956 = vsel %vm156, %v952, 0.0
    %957 = vadd.xlane.f32.xlu0 %v956
    %v958 = vpop.xlane.xlu0 %957
    %v959 = vmul.f32 %v955, %v169
    %v960 = vmul.f32 %v958, %v169
    %v961 = vadd.f32 %v959, 1e-06
    %v962 = vadd.f32 %v960, 1e-06
    %v963 = vrsqrt.pop %v961
    %v964 = vmul.f32 %v963, %v961
    %v965 = vmul.f32 %v964, %v963
    %v966 = vmul.f32 0.5, %v965
    %v967 = vsub.f32 1.5, %v966
    %v968 = vmul.f32 %v963, %v967
    %vm969 = vweird.f32 %v961
    %vm970 = vweird.f32 %v963
    %vm971 = vmor %vm969, %vm970
    %v972 = vsel %vm971, %v963, %v968
    %v973 = vrsqrt.pop %v962
    %v974 = vmul.f32 %v973, %v962
    %v975 = vmul.f32 %v974, %v973
    %v976 = vmul.f32 0.5, %v975
    %v977 = vsub.f32 1.5, %v976
    %v978 = vmul.f32 %v973, %v977
    %vm979 = vweird.f32 %v962
    %vm980 = vweird.f32 %v973
    %vm981 = vmor %vm979, %vm980
    %v982 = vsel %vm981, %v973, %v978
    %v983 = vmul.f32 %v948, %v972
    %v984 = vmul.f32 %v949, %v982
    %v986 = vperm.slane %v950, 0
    %v988 = vmul.f32 %v983, %v986
    %v989 = vmul.f32 %v984, %v986
    %v990 = vld [vmem:[%s12] sm:$0xff]
    %v991 = vld [vmem:[%s12 + $0x8] sm:$0xff]
    %v992 = vld [vmem:[%s12 + $0x10] sm:$0xff]
    %v993 = vld [vmem:[%s12 + $0x18] sm:$0xff]
    %v994 = vld [vmem:[%s12 + $0x20] sm:$0xff]
    %v995 = vld [vmem:[%s12 + $0x28] sm:$0xff]
    %v996 = vld [vmem:[%s12 + $0x30] sm:$0xff]
    %v997 = vld [vmem:[%s12 + $0x38] sm:$0xff]
    %v998 = vld [vmem:[%s12 + $0x40] sm:$0xff]
    %v999 = vld [vmem:[%s12 + $0x48] sm:$0xff]
    %v1000 = vld [vmem:[%s12 + $0x50] sm:$0xff]
    %v1001 = vld [vmem:[%s12 + $0x58] sm:$0xff]
    %v1002 = vld [vmem:[%s12 + $0x60] sm:$0xff]
    %v1003 = vld [vmem:[%s12 + $0x68] sm:$0xff]
    %v1004 = vld [vmem:[%s12 + $0x70] sm:$0xff]
    %v1005 = vld [vmem:[%s12 + $0x78] sm:$0xff]
    %v1006 = vld [vmem:[%s12 + $0x80] sm:$0xff]
    %v1007 = vld [vmem:[%s12 + $0x88] sm:$0xff]
    %v1008 = vld [vmem:[%s12 + $0x90] sm:$0xff]
    %v1009 = vld [vmem:[%s12 + $0x98] sm:$0xff]
    %v1010 = vld [vmem:[%s12 + $0xa0] sm:$0xff]
    %v1011 = vld [vmem:[%s12 + $0xa8] sm:$0xff]
    %v1012 = vld [vmem:[%s12 + $0xb0] sm:$0xff]
    %v1013 = vld [vmem:[%s12 + $0xb8] sm:$0xff]
    %v1014 = vld [vmem:[%s12 + $0xc0] sm:$0xff]
    %v1015 = vld [vmem:[%s12 + $0xc8] sm:$0xff]
    %v1016 = vld [vmem:[%s12 + $0xd0] sm:$0xff]
    %v1017 = vld [vmem:[%s12 + $0xd8] sm:$0xff]
    %v1018 = vld [vmem:[%s12 + $0xe0] sm:$0xff]
    %v1019 = vld [vmem:[%s12 + $0xe8] sm:$0xff]
    %v1020 = vld [vmem:[%s12 + $0xf0] sm:$0xff]
    %v1021 = vld [vmem:[%s12 + $0xf8] sm:$0xff]
    %v1023 = vsel %vm156, %v988, 0
    %v1026 = vsel %vm156, %v989, 0
    %v1029 = vsel %vm156, %v990, 0
    %v1032 = vsel %vm156, %v991, 0
    %v1035 = vsel %vm156, %v992, 0
    %v1038 = vsel %vm156, %v993, 0
    %v1041 = vsel %vm156, %v994, 0
    %v1044 = vsel %vm156, %v995, 0
    %v1047 = vsel %vm156, %v996, 0
    %v1050 = vsel %vm156, %v997, 0
    %v1053 = vsel %vm156, %v998, 0
    %v1056 = vsel %vm156, %v999, 0
    %v1059 = vsel %vm156, %v1000, 0
    %v1062 = vsel %vm156, %v1001, 0
    %v1065 = vsel %vm156, %v1002, 0
    %v1068 = vsel %vm156, %v1003, 0
    %v1071 = vsel %vm156, %v1004, 0
    %v1074 = vsel %vm156, %v1005, 0
    %v1077 = vsel %vm156, %v1006, 0
    %v1080 = vsel %vm156, %v1007, 0
    %v1083 = vsel %vm156, %v1008, 0
    %v1086 = vsel %vm156, %v1009, 0
    %v1089 = vsel %vm156, %v1010, 0
    %v1092 = vsel %vm156, %v1011, 0
    %v1095 = vsel %vm156, %v1012, 0
    %v1098 = vsel %vm156, %v1013, 0
    %v1101 = vsel %vm156, %v1014, 0
    %v1104 = vsel %vm156, %v1015, 0
    %v1107 = vsel %vm156, %v1016, 0
    %v1110 = vsel %vm156, %v1017, 0
    %v1113 = vsel %vm156, %v1018, 0
    %v1116 = vsel %vm156, %v1019, 0
    %v1119 = vsel %vm156, %v1020, 0
    %v1122 = vsel %vm156, %v1021, 0
    %1124 = vmatpush.xpose.msra.mxu0 %v1074
    %1125 = vmatpush.xpose.msra.mxu0 %v1071
    %1126 = vmatpush.xpose.msra.mxu0 %v1068
    %1127 = vmatpush.xpose.msra.mxu0 %v1065
    %1128 = vmatpush.xpose.msra.mxu0 %v1062
    %1129 = vmatpush.xpose.msra.mxu0 %v1059
    %1130 = vmatpush.xpose.msra.mxu0 %v1056
    %1131 = vmatpush.xpose.msra.mxu0 %v1053
    %1132 = vmatpush.xpose.msra.mxu0 %v1050
    %1133 = vmatpush.xpose.msra.mxu0 %v1047
    %1134 = vmatpush.xpose.msra.mxu0 %v1044
    %1135 = vmatpush.xpose.msra.mxu0 %v1041
    %1136 = vmatpush.xpose.msra.mxu0 %v1038
    %1137 = vmatpush.xpose.msra.mxu0 %v1035
    %1138 = vmatpush.xpose.msra.mxu0 %v1032
    %1139 = vmatpush.xpose.msra.mxu0 %v1029
    %1140 = vmatmul.f32.gmra.mxu0 %v1023
    %v1141 = vpop.f32.mrf.mxu0
    %v1142 = vadd.f32 0.0, %v1141
    %1143 = vmatmul.f32.gmra.mxu0 %v1026
    %v1144 = vpop.f32.mrf.mxu0
    %v1145 = vadd.f32 0.0, %v1144
    %1146 = vdwg.mxu0
    %1147 = vmatpush.xpose.msra.mxu0 %v1122
    %1148 = vmatpush.xpose.msra.mxu0 %v1119
    %1149 = vmatpush.xpose.msra.mxu0 %v1116
    %1150 = vmatpush.xpose.msra.mxu0 %v1113
    %1151 = vmatpush.xpose.msra.mxu0 %v1110
    %1152 = vmatpush.xpose.msra.mxu0 %v1107
    %1153 = vmatpush.xpose.msra.mxu0 %v1104
    %1154 = vmatpush.xpose.msra.mxu0 %v1101
    %1155 = vmatpush.xpose.msra.mxu0 %v1098
    %1156 = vmatpush.xpose.msra.mxu0 %v1095
    %1157 = vmatpush.xpose.msra.mxu0 %v1092
    %1158 = vmatpush.xpose.msra.mxu0 %v1089
    %1159 = vmatpush.xpose.msra.mxu0 %v1086
    %1160 = vmatpush.xpose.msra.mxu0 %v1083
    %1161 = vmatpush.xpose.msra.mxu0 %v1080
    %1162 = vmatpush.xpose.msra.mxu0 %v1077
    %1163 = vmatmul.f32.gmra.mxu0 %v1023
    %v1164 = vpop.f32.mrf.mxu0
    %v1165 = vadd.f32 0.0, %v1164
    %1166 = vmatmul.f32.gmra.mxu0 %v1026
    %v1167 = vpop.f32.mrf.mxu0
    %v1168 = vadd.f32 0.0, %v1167
    %1169 = vdwg.mxu0
    %v1170 = vxor.u32 %v1142, 2147483648
    %v1171 = vxor.u32 %v1145, 2147483648
    %v1172 = vmul.f32 %v1170, 1.442695
    %v1173 = vpow.pop %v1172
    %v1174 = vmul.f32 %v1171, 1.442695
    %v1175 = vpow.pop %v1174
    %v1176 = vadd.f32 %v1173, 1.0
    %v1177 = vadd.f32 %v1175, 1.0
    %v1178 = vrcp.pop %v1176
    %v1179 = vmul.f32 %v1176, %v1178
    %v1180 = vsub.f32 1.0, %v1179
    %v1181 = vmul.f32 %v1178, %v1180
    %v1182 = vadd.f32 %v1178, %v1181
    %vm1183 = vweird.f32 %v1176
    %vm1184 = vweird.f32 %v1178
    %vm1185 = vmor %vm1183, %vm1184
    %v1186 = vsel %vm1185, %v1178, %v1182
    %v1187 = vand.u32 2147483647, %v1176
    %vm1188 = vcmp.eq.f32.partialorder %v1187, 8.507059e+37
    %v1189 = vand.u32 %v1176, 2147483648
    %v1190 = vor.u32 1.1754944e-38, %v1189
    %v1191 = vsel %vm1188, %v1190, %v1186
    %v1192 = vmul.f32 1.0, %v1191
    %v1193 = vrcp.pop %v1177
    %v1194 = vmul.f32 %v1177, %v1193
    %v1195 = vsub.f32 1.0, %v1194
    %v1196 = vmul.f32 %v1193, %v1195
    %v1197 = vadd.f32 %v1193, %v1196
    %vm1198 = vweird.f32 %v1177
    %vm1199 = vweird.f32 %v1193
    %vm1200 = vmor %vm1198, %vm1199
    %v1201 = vsel %vm1200, %v1193, %v1197
    %v1202 = vand.u32 2147483647, %v1177
    %vm1203 = vcmp.eq.f32.partialorder %v1202, 8.507059e+37
    %v1204 = vand.u32 %v1177, 2147483648
    %v1205 = vor.u32 1.1754944e-38, %v1204
    %v1206 = vsel %vm1203, %v1205, %v1201
    %v1207 = vmul.f32 1.0, %v1206
    %v1208 = vmul.f32 %v1142, %v1192
    %v1209 = vmul.f32 %v1145, %v1207
    %v1210 = vmul.f32 %v1208, %v1165
    %v1211 = vmul.f32 %v1209, %v1168
    %v1212 = vld [vmem:[%s13] sm:$0xff]
    %v1213 = vld [vmem:[%s13 + $0x8] sm:$0xff]
    %v1214 = vld [vmem:[%s13 + $0x10] sm:$0xff]
    %v1215 = vld [vmem:[%s13 + $0x18] sm:$0xff]
    %1216 = vmatpush.xpose.msra.mxu0 0.0
    %1217 = vmatpush.xpose.msra.mxu0 0.0
    %1218 = vmatpush.xpose.msra.mxu0 0.0
    %1219 = vmatpush.xpose.msra.mxu0 0.0
    %1220 = vmatpush.xpose.msra.mxu0 0.0
    %1221 = vmatpush.xpose.msra.mxu0 0.0
    %1222 = vmatpush.xpose.msra.mxu0 0.0
    %1223 = vmatpush.xpose.msra.mxu0 0.0
    %1224 = vmatpush.xpose.msra.mxu0 0.0
    %1225 = vmatpush.xpose.msra.mxu0 0.0
    %1226 = vmatpush.xpose.msra.mxu0 0.0
    %1227 = vmatpush.xpose.msra.mxu0 0.0
    %1228 = vmatpush.xpose.msra.mxu0 %v1215
    %1229 = vmatpush.xpose.msra.mxu0 %v1214
    %1230 = vmatpush.xpose.msra.mxu0 %v1213
    %1231 = vmatpush.xpose.msra.mxu0 %v1212
    %1232 = vmatmul.f32.gmra.mxu0 %v1210
    %v1233 = vpop.f32.mrf.mxu0
    %v1234 = vadd.f32 0.0, %v1233
    %1235 = vmatmul.f32.gmra.mxu0 %v1211
    %v1236 = vpop.f32.mrf.mxu0
    %v1237 = vadd.f32 0.0, %v1236
    %1238 = vdwg.mxu0
    %v1239 = vadd.f32 %v948, %v1234
    %v1240 = vadd.f32 %v949, %v1237
    %s1241 = scalar_lea.vmem %s8, 1
    %v1242 = vld [vmem:[%s1241] sm:$0x1]
    %v1243 = vmul.f32 %v1239, %v1239
    %v1244 = vmul.f32 %v1240, %v1240
    %v1245 = vsel %vm156, %v1243, 0.0
    %1246 = vadd.xlane.f32.xlu0 %v1245
    %v1247 = vpop.xlane.xlu0 %1246
    %v1248 = vsel %vm156, %v1244, 0.0
    %1249 = vadd.xlane.f32.xlu0 %v1248
    %v1250 = vpop.xlane.xlu0 %1249
    %v1251 = vmul.f32 %v1247, %v169
    %v1252 = vmul.f32 %v1250, %v169
    %v1253 = vadd.f32 %v1251, 1e-06
    %v1254 = vadd.f32 %v1252, 1e-06
    %v1255 = vrsqrt.pop %v1253
    %v1256 = vmul.f32 %v1255, %v1253
    %v1257 = vmul.f32 %v1256, %v1255
    %v1258 = vmul.f32 0.5, %v1257
    %v1259 = vsub.f32 1.5, %v1258
    %v1260 = vmul.f32 %v1255, %v1259
    %vm1261 = vweird.f32 %v1253
    %vm1262 = vweird.f32 %v1255
    %vm1263 = vmor %vm1261, %vm1262
    %v1264 = vsel %vm1263, %v1255, %v1260
    %v1265 = vrsqrt.pop %v1254
    %v1266 = vmul.f32 %v1265, %v1254
    %v1267 = vmul.f32 %v1266, %v1265
    %v1268 = vmul.f32 0.5, %v1267
    %v1269 = vsub.f32 1.5, %v1268
    %v1270 = vmul.f32 %v1265, %v1269
    %vm1271 = vweird.f32 %v1254
    %vm1272 = vweird.f32 %v1265
    %vm1273 = vmor %vm1271, %vm1272
    %v1274 = vsel %vm1273, %v1265, %v1270
    %v1275 = vmul.f32 %v1239, %v1264
    %v1276 = vmul.f32 %v1240, %v1274
    %v1278 = vperm.slane %v1242, 0
    %v1280 = vmul.f32 %v1275, %v1278
    %v1281 = vmul.f32 %v1276, %v1278
    %s1282 = scalar_lea.vmem %s9, 96
    %v1283 = vld [vmem:[%s1282] sm:$0xff]
    %v1284 = vld [vmem:[%s1282 + $0x8] sm:$0xff]
    %v1285 = vld [vmem:[%s1282 + $0x10] sm:$0xff]
    %v1286 = vld [vmem:[%s1282 + $0x18] sm:$0xff]
    %v1287 = vld [vmem:[%s1282 + $0x20] sm:$0xff]
    %v1288 = vld [vmem:[%s1282 + $0x28] sm:$0xff]
    %v1289 = vld [vmem:[%s1282 + $0x30] sm:$0xff]
    %v1290 = vld [vmem:[%s1282 + $0x38] sm:$0xff]
    %v1291 = vld [vmem:[%s1282 + $0x40] sm:$0xff]
    %v1292 = vld [vmem:[%s1282 + $0x48] sm:$0xff]
    %v1293 = vld [vmem:[%s1282 + $0x50] sm:$0xff]
    %v1294 = vld [vmem:[%s1282 + $0x58] sm:$0xff]
    %v1296 = vsel %vm156, %v1280, 0
    %v1299 = vsel %vm156, %v1281, 0
    %v1302 = vsel %vm156, %v1283, 0
    %v1305 = vsel %vm156, %v1284, 0
    %v1308 = vsel %vm156, %v1285, 0
    %v1311 = vsel %vm156, %v1286, 0
    %v1314 = vsel %vm156, %v1287, 0
    %v1317 = vsel %vm156, %v1288, 0
    %v1320 = vsel %vm156, %v1289, 0
    %v1323 = vsel %vm156, %v1290, 0
    %v1326 = vsel %vm156, %v1291, 0
    %v1329 = vsel %vm156, %v1292, 0
    %v1332 = vsel %vm156, %v1293, 0
    %v1335 = vsel %vm156, %v1294, 0
    %1337 = vmatpush.xpose.msra.mxu0 0.0
    %1338 = vmatpush.xpose.msra.mxu0 0.0
    %1339 = vmatpush.xpose.msra.mxu0 0.0
    %1340 = vmatpush.xpose.msra.mxu0 0.0
    %1341 = vmatpush.xpose.msra.mxu0 %v1335
    %1342 = vmatpush.xpose.msra.mxu0 %v1332
    %1343 = vmatpush.xpose.msra.mxu0 %v1329
    %1344 = vmatpush.xpose.msra.mxu0 %v1326
    %1345 = vmatpush.xpose.msra.mxu0 %v1323
    %1346 = vmatpush.xpose.msra.mxu0 %v1320
    %1347 = vmatpush.xpose.msra.mxu0 %v1317
    %1348 = vmatpush.xpose.msra.mxu0 %v1314
    %1349 = vmatpush.xpose.msra.mxu0 %v1311
    %1350 = vmatpush.xpose.msra.mxu0 %v1308
    %1351 = vmatpush.xpose.msra.mxu0 %v1305
    %1352 = vmatpush.xpose.msra.mxu0 %v1302
    %1353 = vmatmul.f32.gmra.mxu0 %v1296
    %v1354 = vpop.f32.mrf.mxu0
    %v1355 = vadd.f32 0.0, %v1354
    %1356 = vmatmul.f32.gmra.mxu0 %v1299
    %v1357 = vpop.f32.mrf.mxu0
    %v1358 = vadd.f32 0.0, %v1357
    %1359 = vdwg.mxu0
    %v1360 = vmul.f32 %v1355, %v143
    %v1361 = vmul.f32 %v1358, %v144
    %v1363 = vsel %vm156, %v1355, 0
    %v1366 = vsel %vm156, %v1358, 0
    %1368 = vmatpush.msra.mxu0 0.0
    %1369 = vmatpush.msra.mxu0 0.0
    %1370 = vmatpush.msra.mxu0 0.0
    %1371 = vmatpush.msra.mxu0 0.0
    %1372 = vmatpush.msra.mxu0 0.0
    %1373 = vmatpush.msra.mxu0 0.0
    %1374 = vmatpush.msra.mxu0 0.0
    %1375 = vmatpush.msra.mxu0 0.0
    %1376 = vmatpush.msra.mxu0 0.0
    %1377 = vmatpush.msra.mxu0 0.0
    %1378 = vmatpush.msra.mxu0 0.0
    %1379 = vmatpush.msra.mxu0 0.0
    %1380 = vmatpush.msra.mxu0 %v150
    %1381 = vmatpush.msra.mxu0 %v149
    %1382 = vmatpush.msra.mxu0 %v148
    %1383 = vmatpush.msra.mxu0 %v147
    %1384 = vmatmul.f32.gmra.mxu0 %v1363
    %v1385 = vpop.f32.mrf.mxu0
    %v1386 = vadd.f32 0.0, %v1385
    %1387 = vmatmul.f32.gmra.mxu0 %v1366
    %v1388 = vpop.f32.mrf.mxu0
    %v1389 = vadd.f32 0.0, %v1388
    %1390 = vdwg.mxu0
    %v1391 = vmul.f32 %v1386, %v145
    %v1392 = vmul.f32 %v1389, %v146
    %v1393 = vadd.f32 %v1360, %v1391
    %v1394 = vadd.f32 %v1361, %v1392
    %v1395 = vmul.f32 %v1355, %v316
    %v1396 = vmul.f32 %v1358, %v318
    %1397 = vrot.lane.b32.xlu0 %v1355, 96
    %v1398 = vpop.permute.xlu0 %1397
    %1399 = vrot.lane.b32.xlu0 %v1358, 96
    %v1400 = vpop.permute.xlu0 %1399
    %v1401 = vsel %vm156, %v1398, 0
    %v1403 = vsel %vm156, %v1400, 0
    %1405 = vmatpush.msra.mxu0 0.0
    %1406 = vmatpush.msra.mxu0 0.0
    %1407 = vmatpush.msra.mxu0 0.0
    %1408 = vmatpush.msra.mxu0 0.0
    %1409 = vmatpush.msra.mxu0 0.0
    %1410 = vmatpush.msra.mxu0 0.0
    %1411 = vmatpush.msra.mxu0 0.0
    %1412 = vmatpush.msra.mxu0 0.0
    %1413 = vmatpush.msra.mxu0 0.0
    %1414 = vmatpush.msra.mxu0 0.0
    %1415 = vmatpush.msra.mxu0 0.0
    %1416 = vmatpush.msra.mxu0 0.0
    %1417 = vmatpush.msra.mxu0 %v150
    %1418 = vmatpush.msra.mxu0 %v149
    %1419 = vmatpush.msra.mxu0 %v148
    %1420 = vmatpush.msra.mxu0 %v147
    %1421 = vmatmul.f32.gmra.mxu0 %v1401
    %v1422 = vpop.f32.mrf.mxu0
    %v1423 = vadd.f32 0.0, %v1422
    %1424 = vmatmul.f32.gmra.mxu0 %v1403
    %v1425 = vpop.f32.mrf.mxu0
    %v1426 = vadd.f32 0.0, %v1425
    %1427 = vdwg.mxu0
    %v1428 = vmul.f32 %v1423, %v145
    %v1429 = vmul.f32 %v1426, %v146
    %1432 = vrot.lane.b32.xlu0 %v1428, 32
    %v1433 = vpop.permute.xlu0 %1432
    %1434 = vrot.lane.b32.xlu0 %v1429, 32
    %v1435 = vpop.permute.xlu0 %1434
    %v1438 = vadd.f32 %v1395, %v1433
    %v1439 = vadd.f32 %v1396, %v1435
    %1442 = vrot.lane.b32.xlu0 %v1438, 96
    %v1443 = vpop.permute.xlu0 %1442
    %1444 = vrot.lane.b32.xlu0 %v1439, 96
    %v1445 = vpop.permute.xlu0 %1444
    %v1447 = vsel %vm372, %v1393, 0
    %v1450 = vsel %vm372, %v1394, 0
    %v1452 = vsel %vm372, %v1443, 0
    %v1454 = vsel %vm372, %v1445, 0
    %1456 = vmatpush.xpose.msra.mxu0 0.0
    %1457 = vmatpush.xpose.msra.mxu0 0.0
    %1458 = vmatpush.xpose.msra.mxu0 0.0
    %1459 = vmatpush.xpose.msra.mxu0 0.0
    %1460 = vmatpush.xpose.msra.mxu0 0.0
    %1461 = vmatpush.xpose.msra.mxu0 0.0
    %1462 = vmatpush.xpose.msra.mxu0 0.0
    %1463 = vmatpush.xpose.msra.mxu0 0.0
    %1464 = vmatpush.xpose.msra.mxu0 0.0
    %1465 = vmatpush.xpose.msra.mxu0 0.0
    %1466 = vmatpush.xpose.msra.mxu0 0.0
    %1467 = vmatpush.xpose.msra.mxu0 0.0
    %1468 = vmatpush.xpose.msra.mxu0 0.0
    %1469 = vmatpush.xpose.msra.mxu0 0.0
    %1470 = vmatpush.xpose.msra.mxu0 %v1454
    %1471 = vmatpush.xpose.msra.mxu0 %v1452
    %1472 = vmatmul.f32.gmra.mxu0 %v1447
    %v1473 = vpop.f32.mrf.mxu0
    %v1474 = vadd.f32 0.0, %v1473
    %1475 = vmatmul.f32.gmra.mxu0 %v1450
    %v1476 = vpop.f32.mrf.mxu0
    %v1477 = vadd.f32 0.0, %v1476
    %1478 = vdwg.mxu0
    %v1479 = vmul.f32 %v1474, 0.35355338
    %v1480 = vmul.f32 %v1477, 0.35355338
    %v1481 = vadd.f32 %v1479, %v151
    %v1482 = vadd.f32 %v1480, %v152
    %v1483 = vsel %vm410, %v1481, -inf
    %1484 = vmax.xlane.f32.xlu0 %v1483
    %v1485 = vpop.xlane.xlu0 %1484
    %v1486 = vsel %vm410, %v1482, -inf
    %1487 = vmax.xlane.f32.xlu0 %v1486
    %v1488 = vpop.xlane.xlu0 %1487
    %v1489 = vsub.f32 %v1481, %v1485
    %v1490 = vsub.f32 %v1482, %v1488
    %v1491 = vmul.f32 %v1489, 1.442695
    %v1492 = vpow.pop %v1491
    %v1493 = vmul.f32 %v1490, 1.442695
    %v1494 = vpow.pop %v1493
    %v1495 = vsel %vm410, %v1492, 0.0
    %1496 = vadd.xlane.f32.xlu0 %v1495
    %v1497 = vpop.xlane.xlu0 %1496
    %v1498 = vsel %vm410, %v1494, 0.0
    %1499 = vadd.xlane.f32.xlu0 %v1498
    %v1500 = vpop.xlane.xlu0 %1499
    %1501 = vrot.lane.b32.xlu0 %v1355, 64
    %v1502 = vpop.permute.xlu0 %1501
    %1503 = vrot.lane.b32.xlu0 %v1358, 64
    %v1504 = vpop.permute.xlu0 %1503
    %v1508 = vsel %vm410, %v1492, 0
    %v1511 = vsel %vm410, %v1494, 0
    %1513 = vmatpush.msra.mxu0 0.0
    %1514 = vmatpush.msra.mxu0 0.0
    %1515 = vmatpush.msra.mxu0 0.0
    %1516 = vmatpush.msra.mxu0 0.0
    %1517 = vmatpush.msra.mxu0 0.0
    %1518 = vmatpush.msra.mxu0 0.0
    %1519 = vmatpush.msra.mxu0 0.0
    %1520 = vmatpush.msra.mxu0 0.0
    %1521 = vmatpush.msra.mxu0 0.0
    %1522 = vmatpush.msra.mxu0 0.0
    %1523 = vmatpush.msra.mxu0 0.0
    %1524 = vmatpush.msra.mxu0 0.0
    %1525 = vmatpush.msra.mxu0 0.0
    %1526 = vmatpush.msra.mxu0 0.0
    %1527 = vmatpush.msra.mxu0 %v1504
    %1528 = vmatpush.msra.mxu0 %v1502
    %1529 = vmatmul.f32.gmra.mxu0 %v1508
    %v1530 = vpop.f32.mrf.mxu0
    %v1531 = vadd.f32 0.0, %v1530
    %1532 = vmatmul.f32.gmra.mxu0 %v1511
    %v1533 = vpop.f32.mrf.mxu0
    %v1534 = vadd.f32 0.0, %v1533
    %1535 = vdwg.mxu0
    %v1536 = vrcp.pop %v1497
    %v1537 = vmul.f32 %v1497, %v1536
    %v1538 = vsub.f32 1.0, %v1537
    %v1539 = vmul.f32 %v1536, %v1538
    %v1540 = vadd.f32 %v1536, %v1539
    %vm1541 = vweird.f32 %v1497
    %vm1542 = vweird.f32 %v1536
    %vm1543 = vmor %vm1541, %vm1542
    %v1544 = vsel %vm1543, %v1536, %v1540
    %v1545 = vand.u32 2147483647, %v1497
    %vm1546 = vcmp.eq.f32.partialorder %v1545, 8.507059e+37
    %v1547 = vand.u32 %v1497, 2147483648
    %v1548 = vor.u32 1.1754944e-38, %v1547
    %v1549 = vsel %vm1546, %v1548, %v1544
    %v1550 = vmul.f32 %v1531, %v1549
    %v1551 = vrcp.pop %v1500
    %v1552 = vmul.f32 %v1500, %v1551
    %v1553 = vsub.f32 1.0, %v1552
    %v1554 = vmul.f32 %v1551, %v1553
    %v1555 = vadd.f32 %v1551, %v1554
    %vm1556 = vweird.f32 %v1500
    %vm1557 = vweird.f32 %v1551
    %vm1558 = vmor %vm1556, %vm1557
    %v1559 = vsel %vm1558, %v1551, %v1555
    %v1560 = vand.u32 2147483647, %v1500
    %vm1561 = vcmp.eq.f32.partialorder %v1560, 8.507059e+37
    %v1562 = vand.u32 %v1500, 2147483648
    %v1563 = vor.u32 1.1754944e-38, %v1562
    %v1564 = vsel %vm1561, %v1563, %v1559
    %v1565 = vmul.f32 %v1534, %v1564
    %1566 = vrot.lane.b32.xlu0 %v1393, 120
    %v1567 = vpop.permute.xlu0 %1566
    %1568 = vrot.lane.b32.xlu0 %v1394, 120
    %v1569 = vpop.permute.xlu0 %1568
    %1570 = vrot.lane.b32.xlu0 %v1438, 88
    %v1571 = vpop.permute.xlu0 %1570
    %1572 = vrot.lane.b32.xlu0 %v1439, 88
    %v1573 = vpop.permute.xlu0 %1572
    %v1574 = vsel %vm372, %v1567, 0
    %v1576 = vsel %vm372, %v1569, 0
    %v1578 = vsel %vm372, %v1571, 0
    %v1580 = vsel %vm372, %v1573, 0
    %1582 = vmatpush.xpose.msra.mxu0 0.0
    %1583 = vmatpush.xpose.msra.mxu0 0.0
    %1584 = vmatpush.xpose.msra.mxu0 0.0
    %1585 = vmatpush.xpose.msra.mxu0 0.0
    %1586 = vmatpush.xpose.msra.mxu0 0.0
    %1587 = vmatpush.xpose.msra.mxu0 0.0
    %1588 = vmatpush.xpose.msra.mxu0 0.0
    %1589 = vmatpush.xpose.msra.mxu0 0.0
    %1590 = vmatpush.xpose.msra.mxu0 0.0
    %1591 = vmatpush.xpose.msra.mxu0 0.0
    %1592 = vmatpush.xpose.msra.mxu0 0.0
    %1593 = vmatpush.xpose.msra.mxu0 0.0
    %1594 = vmatpush.xpose.msra.mxu0 0.0
    %1595 = vmatpush.xpose.msra.mxu0 0.0
    %1596 = vmatpush.xpose.msra.mxu0 %v1580
    %1597 = vmatpush.xpose.msra.mxu0 %v1578
    %1598 = vmatmul.f32.gmra.mxu0 %v1574
    %v1599 = vpop.f32.mrf.mxu0
    %v1600 = vadd.f32 0.0, %v1599
    %1601 = vmatmul.f32.gmra.mxu0 %v1576
    %v1602 = vpop.f32.mrf.mxu0
    %v1603 = vadd.f32 0.0, %v1602
    %1604 = vdwg.mxu0
    %v1605 = vmul.f32 %v1600, 0.35355338
    %v1606 = vmul.f32 %v1603, 0.35355338
    %v1607 = vadd.f32 %v1605, %v151
    %v1608 = vadd.f32 %v1606, %v152
    %v1609 = vsel %vm410, %v1607, -inf
    %1610 = vmax.xlane.f32.xlu0 %v1609
    %v1611 = vpop.xlane.xlu0 %1610
    %v1612 = vsel %vm410, %v1608, -inf
    %1613 = vmax.xlane.f32.xlu0 %v1612
    %v1614 = vpop.xlane.xlu0 %1613
    %v1615 = vsub.f32 %v1607, %v1611
    %v1616 = vsub.f32 %v1608, %v1614
    %v1617 = vmul.f32 %v1615, 1.442695
    %v1618 = vpow.pop %v1617
    %v1619 = vmul.f32 %v1616, 1.442695
    %v1620 = vpow.pop %v1619
    %v1621 = vsel %vm410, %v1618, 0.0
    %1622 = vadd.xlane.f32.xlu0 %v1621
    %v1623 = vpop.xlane.xlu0 %1622
    %v1624 = vsel %vm410, %v1620, 0.0
    %1625 = vadd.xlane.f32.xlu0 %v1624
    %v1626 = vpop.xlane.xlu0 %1625
    %1627 = vrot.lane.b32.xlu0 %v1355, 56
    %v1628 = vpop.permute.xlu0 %1627
    %1629 = vrot.lane.b32.xlu0 %v1358, 56
    %v1630 = vpop.permute.xlu0 %1629
    %v1634 = vsel %vm410, %v1618, 0
    %v1637 = vsel %vm410, %v1620, 0
    %1639 = vmatpush.msra.mxu0 0.0
    %1640 = vmatpush.msra.mxu0 0.0
    %1641 = vmatpush.msra.mxu0 0.0
    %1642 = vmatpush.msra.mxu0 0.0
    %1643 = vmatpush.msra.mxu0 0.0
    %1644 = vmatpush.msra.mxu0 0.0
    %1645 = vmatpush.msra.mxu0 0.0
    %1646 = vmatpush.msra.mxu0 0.0
    %1647 = vmatpush.msra.mxu0 0.0
    %1648 = vmatpush.msra.mxu0 0.0
    %1649 = vmatpush.msra.mxu0 0.0
    %1650 = vmatpush.msra.mxu0 0.0
    %1651 = vmatpush.msra.mxu0 0.0
    %1652 = vmatpush.msra.mxu0 0.0
    %1653 = vmatpush.msra.mxu0 %v1630
    %1654 = vmatpush.msra.mxu0 %v1628
    %1655 = vmatmul.f32.gmra.mxu0 %v1634
    %v1656 = vpop.f32.mrf.mxu0
    %v1657 = vadd.f32 0.0, %v1656
    %1658 = vmatmul.f32.gmra.mxu0 %v1637
    %v1659 = vpop.f32.mrf.mxu0
    %v1660 = vadd.f32 0.0, %v1659
    %1661 = vdwg.mxu0
    %v1662 = vrcp.pop %v1623
    %v1663 = vmul.f32 %v1623, %v1662
    %v1664 = vsub.f32 1.0, %v1663
    %v1665 = vmul.f32 %v1662, %v1664
    %v1666 = vadd.f32 %v1662, %v1665
    %vm1667 = vweird.f32 %v1623
    %vm1668 = vweird.f32 %v1662
    %vm1669 = vmor %vm1667, %vm1668
    %v1670 = vsel %vm1669, %v1662, %v1666
    %v1671 = vand.u32 2147483647, %v1623
    %vm1672 = vcmp.eq.f32.partialorder %v1671, 8.507059e+37
    %v1673 = vand.u32 %v1623, 2147483648
    %v1674 = vor.u32 1.1754944e-38, %v1673
    %v1675 = vsel %vm1672, %v1674, %v1670
    %v1676 = vmul.f32 %v1657, %v1675
    %v1677 = vrcp.pop %v1626
    %v1678 = vmul.f32 %v1626, %v1677
    %v1679 = vsub.f32 1.0, %v1678
    %v1680 = vmul.f32 %v1677, %v1679
    %v1681 = vadd.f32 %v1677, %v1680
    %vm1682 = vweird.f32 %v1626
    %vm1683 = vweird.f32 %v1677
    %vm1684 = vmor %vm1682, %vm1683
    %v1685 = vsel %vm1684, %v1677, %v1681
    %v1686 = vand.u32 2147483647, %v1626
    %vm1687 = vcmp.eq.f32.partialorder %v1686, 8.507059e+37
    %v1688 = vand.u32 %v1626, 2147483648
    %v1689 = vor.u32 1.1754944e-38, %v1688
    %v1690 = vsel %vm1687, %v1689, %v1685
    %v1691 = vmul.f32 %v1660, %v1690
    %1692 = vrot.lane.b32.xlu0 %v1393, 112
    %v1693 = vpop.permute.xlu0 %1692
    %1694 = vrot.lane.b32.xlu0 %v1394, 112
    %v1695 = vpop.permute.xlu0 %1694
    %1696 = vrot.lane.b32.xlu0 %v1438, 80
    %v1697 = vpop.permute.xlu0 %1696
    %1698 = vrot.lane.b32.xlu0 %v1439, 80
    %v1699 = vpop.permute.xlu0 %1698
    %v1700 = vsel %vm372, %v1693, 0
    %v1702 = vsel %vm372, %v1695, 0
    %v1704 = vsel %vm372, %v1697, 0
    %v1706 = vsel %vm372, %v1699, 0
    %1708 = vmatpush.xpose.msra.mxu0 0.0
    %1709 = vmatpush.xpose.msra.mxu0 0.0
    %1710 = vmatpush.xpose.msra.mxu0 0.0
    %1711 = vmatpush.xpose.msra.mxu0 0.0
    %1712 = vmatpush.xpose.msra.mxu0 0.0
    %1713 = vmatpush.xpose.msra.mxu0 0.0
    %1714 = vmatpush.xpose.msra.mxu0 0.0
    %1715 = vmatpush.xpose.msra.mxu0 0.0
    %1716 = vmatpush.xpose.msra.mxu0 0.0
    %1717 = vmatpush.xpose.msra.mxu0 0.0
    %1718 = vmatpush.xpose.msra.mxu0 0.0
    %1719 = vmatpush.xpose.msra.mxu0 0.0
    %1720 = vmatpush.xpose.msra.mxu0 0.0
    %1721 = vmatpush.xpose.msra.mxu0 0.0
    %1722 = vmatpush.xpose.msra.mxu0 %v1706
    %1723 = vmatpush.xpose.msra.mxu0 %v1704
    %1724 = vmatmul.f32.gmra.mxu0 %v1700
    %v1725 = vpop.f32.mrf.mxu0
    %v1726 = vadd.f32 0.0, %v1725
    %1727 = vmatmul.f32.gmra.mxu0 %v1702
    %v1728 = vpop.f32.mrf.mxu0
    %v1729 = vadd.f32 0.0, %v1728
    %1730 = vdwg.mxu0
    %v1731 = vmul.f32 %v1726, 0.35355338
    %v1732 = vmul.f32 %v1729, 0.35355338
    %v1733 = vadd.f32 %v1731, %v151
    %v1734 = vadd.f32 %v1732, %v152
    %v1735 = vsel %vm410, %v1733, -inf
    %1736 = vmax.xlane.f32.xlu0 %v1735
    %v1737 = vpop.xlane.xlu0 %1736
    %v1738 = vsel %vm410, %v1734, -inf
    %1739 = vmax.xlane.f32.xlu0 %v1738
    %v1740 = vpop.xlane.xlu0 %1739
    %v1741 = vsub.f32 %v1733, %v1737
    %v1742 = vsub.f32 %v1734, %v1740
    %v1743 = vmul.f32 %v1741, 1.442695
    %v1744 = vpow.pop %v1743
    %v1745 = vmul.f32 %v1742, 1.442695
    %v1746 = vpow.pop %v1745
    %v1747 = vsel %vm410, %v1744, 0.0
    %1748 = vadd.xlane.f32.xlu0 %v1747
    %v1749 = vpop.xlane.xlu0 %1748
    %v1750 = vsel %vm410, %v1746, 0.0
    %1751 = vadd.xlane.f32.xlu0 %v1750
    %v1752 = vpop.xlane.xlu0 %1751
    %1753 = vrot.lane.b32.xlu0 %v1355, 48
    %v1754 = vpop.permute.xlu0 %1753
    %1755 = vrot.lane.b32.xlu0 %v1358, 48
    %v1756 = vpop.permute.xlu0 %1755
    %v1760 = vsel %vm410, %v1744, 0
    %v1763 = vsel %vm410, %v1746, 0
    %1765 = vmatpush.msra.mxu0 0.0
    %1766 = vmatpush.msra.mxu0 0.0
    %1767 = vmatpush.msra.mxu0 0.0
    %1768 = vmatpush.msra.mxu0 0.0
    %1769 = vmatpush.msra.mxu0 0.0
    %1770 = vmatpush.msra.mxu0 0.0
    %1771 = vmatpush.msra.mxu0 0.0
    %1772 = vmatpush.msra.mxu0 0.0
    %1773 = vmatpush.msra.mxu0 0.0
    %1774 = vmatpush.msra.mxu0 0.0
    %1775 = vmatpush.msra.mxu0 0.0
    %1776 = vmatpush.msra.mxu0 0.0
    %1777 = vmatpush.msra.mxu0 0.0
    %1778 = vmatpush.msra.mxu0 0.0
    %1779 = vmatpush.msra.mxu0 %v1756
    %1780 = vmatpush.msra.mxu0 %v1754
    %1781 = vmatmul.f32.gmra.mxu0 %v1760
    %v1782 = vpop.f32.mrf.mxu0
    %v1783 = vadd.f32 0.0, %v1782
    %1784 = vmatmul.f32.gmra.mxu0 %v1763
    %v1785 = vpop.f32.mrf.mxu0
    %v1786 = vadd.f32 0.0, %v1785
    %1787 = vdwg.mxu0
    %v1788 = vrcp.pop %v1749
    %v1789 = vmul.f32 %v1749, %v1788
    %v1790 = vsub.f32 1.0, %v1789
    %v1791 = vmul.f32 %v1788, %v1790
    %v1792 = vadd.f32 %v1788, %v1791
    %vm1793 = vweird.f32 %v1749
    %vm1794 = vweird.f32 %v1788
    %vm1795 = vmor %vm1793, %vm1794
    %v1796 = vsel %vm1795, %v1788, %v1792
    %v1797 = vand.u32 2147483647, %v1749
    %vm1798 = vcmp.eq.f32.partialorder %v1797, 8.507059e+37
    %v1799 = vand.u32 %v1749, 2147483648
    %v1800 = vor.u32 1.1754944e-38, %v1799
    %v1801 = vsel %vm1798, %v1800, %v1796
    %v1802 = vmul.f32 %v1783, %v1801
    %v1803 = vrcp.pop %v1752
    %v1804 = vmul.f32 %v1752, %v1803
    %v1805 = vsub.f32 1.0, %v1804
    %v1806 = vmul.f32 %v1803, %v1805
    %v1807 = vadd.f32 %v1803, %v1806
    %vm1808 = vweird.f32 %v1752
    %vm1809 = vweird.f32 %v1803
    %vm1810 = vmor %vm1808, %vm1809
    %v1811 = vsel %vm1810, %v1803, %v1807
    %v1812 = vand.u32 2147483647, %v1752
    %vm1813 = vcmp.eq.f32.partialorder %v1812, 8.507059e+37
    %v1814 = vand.u32 %v1752, 2147483648
    %v1815 = vor.u32 1.1754944e-38, %v1814
    %v1816 = vsel %vm1813, %v1815, %v1811
    %v1817 = vmul.f32 %v1786, %v1816
    %1818 = vrot.lane.b32.xlu0 %v1393, 104
    %v1819 = vpop.permute.xlu0 %1818
    %1820 = vrot.lane.b32.xlu0 %v1394, 104
    %v1821 = vpop.permute.xlu0 %1820
    %1822 = vrot.lane.b32.xlu0 %v1438, 72
    %v1823 = vpop.permute.xlu0 %1822
    %1824 = vrot.lane.b32.xlu0 %v1439, 72
    %v1825 = vpop.permute.xlu0 %1824
    %v1826 = vsel %vm372, %v1819, 0
    %v1828 = vsel %vm372, %v1821, 0
    %v1830 = vsel %vm372, %v1823, 0
    %v1832 = vsel %vm372, %v1825, 0
    %1834 = vmatpush.xpose.msra.mxu0 0.0
    %1835 = vmatpush.xpose.msra.mxu0 0.0
    %1836 = vmatpush.xpose.msra.mxu0 0.0
    %1837 = vmatpush.xpose.msra.mxu0 0.0
    %1838 = vmatpush.xpose.msra.mxu0 0.0
    %1839 = vmatpush.xpose.msra.mxu0 0.0
    %1840 = vmatpush.xpose.msra.mxu0 0.0
    %1841 = vmatpush.xpose.msra.mxu0 0.0
    %1842 = vmatpush.xpose.msra.mxu0 0.0
    %1843 = vmatpush.xpose.msra.mxu0 0.0
    %1844 = vmatpush.xpose.msra.mxu0 0.0
    %1845 = vmatpush.xpose.msra.mxu0 0.0
    %1846 = vmatpush.xpose.msra.mxu0 0.0
    %1847 = vmatpush.xpose.msra.mxu0 0.0
    %1848 = vmatpush.xpose.msra.mxu0 %v1832
    %1849 = vmatpush.xpose.msra.mxu0 %v1830
    %1850 = vmatmul.f32.gmra.mxu0 %v1826
    %v1851 = vpop.f32.mrf.mxu0
    %v1852 = vadd.f32 0.0, %v1851
    %1853 = vmatmul.f32.gmra.mxu0 %v1828
    %v1854 = vpop.f32.mrf.mxu0
    %v1855 = vadd.f32 0.0, %v1854
    %1856 = vdwg.mxu0
    %v1857 = vmul.f32 %v1852, 0.35355338
    %v1858 = vmul.f32 %v1855, 0.35355338
    %v1859 = vadd.f32 %v1857, %v151
    %v1860 = vadd.f32 %v1858, %v152
    %v1861 = vsel %vm410, %v1859, -inf
    %1862 = vmax.xlane.f32.xlu0 %v1861
    %v1863 = vpop.xlane.xlu0 %1862
    %v1864 = vsel %vm410, %v1860, -inf
    %1865 = vmax.xlane.f32.xlu0 %v1864
    %v1866 = vpop.xlane.xlu0 %1865
    %v1867 = vsub.f32 %v1859, %v1863
    %v1868 = vsub.f32 %v1860, %v1866
    %v1869 = vmul.f32 %v1867, 1.442695
    %v1870 = vpow.pop %v1869
    %v1871 = vmul.f32 %v1868, 1.442695
    %v1872 = vpow.pop %v1871
    %v1873 = vsel %vm410, %v1870, 0.0
    %1874 = vadd.xlane.f32.xlu0 %v1873
    %v1875 = vpop.xlane.xlu0 %1874
    %v1876 = vsel %vm410, %v1872, 0.0
    %1877 = vadd.xlane.f32.xlu0 %v1876
    %v1878 = vpop.xlane.xlu0 %1877
    %1879 = vrot.lane.b32.xlu0 %v1355, 40
    %v1880 = vpop.permute.xlu0 %1879
    %1881 = vrot.lane.b32.xlu0 %v1358, 40
    %v1882 = vpop.permute.xlu0 %1881
    %v1886 = vsel %vm410, %v1870, 0
    %v1889 = vsel %vm410, %v1872, 0
    %1891 = vmatpush.msra.mxu0 0.0
    %1892 = vmatpush.msra.mxu0 0.0
    %1893 = vmatpush.msra.mxu0 0.0
    %1894 = vmatpush.msra.mxu0 0.0
    %1895 = vmatpush.msra.mxu0 0.0
    %1896 = vmatpush.msra.mxu0 0.0
    %1897 = vmatpush.msra.mxu0 0.0
    %1898 = vmatpush.msra.mxu0 0.0
    %1899 = vmatpush.msra.mxu0 0.0
    %1900 = vmatpush.msra.mxu0 0.0
    %1901 = vmatpush.msra.mxu0 0.0
    %1902 = vmatpush.msra.mxu0 0.0
    %1903 = vmatpush.msra.mxu0 0.0
    %1904 = vmatpush.msra.mxu0 0.0
    %1905 = vmatpush.msra.mxu0 %v1882
    %1906 = vmatpush.msra.mxu0 %v1880
    %1907 = vmatmul.f32.gmra.mxu0 %v1886
    %v1908 = vpop.f32.mrf.mxu0
    %v1909 = vadd.f32 0.0, %v1908
    %1910 = vmatmul.f32.gmra.mxu0 %v1889
    %v1911 = vpop.f32.mrf.mxu0
    %v1912 = vadd.f32 0.0, %v1911
    %1913 = vdwg.mxu0
    %v1914 = vrcp.pop %v1875
    %v1915 = vmul.f32 %v1875, %v1914
    %v1916 = vsub.f32 1.0, %v1915
    %v1917 = vmul.f32 %v1914, %v1916
    %v1918 = vadd.f32 %v1914, %v1917
    %vm1919 = vweird.f32 %v1875
    %vm1920 = vweird.f32 %v1914
    %vm1921 = vmor %vm1919, %vm1920
    %v1922 = vsel %vm1921, %v1914, %v1918
    %v1923 = vand.u32 2147483647, %v1875
    %vm1924 = vcmp.eq.f32.partialorder %v1923, 8.507059e+37
    %v1925 = vand.u32 %v1875, 2147483648
    %v1926 = vor.u32 1.1754944e-38, %v1925
    %v1927 = vsel %vm1924, %v1926, %v1922
    %v1928 = vmul.f32 %v1909, %v1927
    %v1929 = vrcp.pop %v1878
    %v1930 = vmul.f32 %v1878, %v1929
    %v1931 = vsub.f32 1.0, %v1930
    %v1932 = vmul.f32 %v1929, %v1931
    %v1933 = vadd.f32 %v1929, %v1932
    %vm1934 = vweird.f32 %v1878
    %vm1935 = vweird.f32 %v1929
    %vm1936 = vmor %vm1934, %vm1935
    %v1937 = vsel %vm1936, %v1929, %v1933
    %v1938 = vand.u32 2147483647, %v1878
    %vm1939 = vcmp.eq.f32.partialorder %v1938, 8.507059e+37
    %v1940 = vand.u32 %v1878, 2147483648
    %v1941 = vor.u32 1.1754944e-38, %v1940
    %v1942 = vsel %vm1939, %v1941, %v1937
    %v1943 = vmul.f32 %v1912, %v1942
    %1946 = vrot.lane.b32.xlu0 %v1676, 8
    %v1947 = vpop.permute.xlu0 %1946
    %1948 = vrot.lane.b32.xlu0 %v1691, 8
    %v1949 = vpop.permute.xlu0 %1948
    %1954 = vrot.lane.b32.xlu0 %v1802, 16
    %v1955 = vpop.permute.xlu0 %1954
    %1956 = vrot.lane.b32.xlu0 %v1817, 16
    %v1957 = vpop.permute.xlu0 %1956
    %1962 = vrot.lane.b32.xlu0 %v1928, 24
    %v1963 = vpop.permute.xlu0 %1962
    %1964 = vrot.lane.b32.xlu0 %v1943, 24
    %v1965 = vpop.permute.xlu0 %1964
    %v1968 = vsel %vm372, %v1550, %v1947
    %v1969 = vsel %vm372, %v1565, %v1949
    %v1970 = vsel %vm410, %v1968, %v1955
    %v1971 = vsel %vm410, %v1969, %v1957
    %v1972 = vsel %vm900, %v1970, %v1963
    %v1973 = vsel %vm900, %v1971, %v1965
    %s1974 = scalar_lea.vmem %s10, 32
    %v1975 = vld [vmem:[%s1974] sm:$0xff]
    %v1976 = vld [vmem:[%s1974 + $0x8] sm:$0xff]
    %v1977 = vld [vmem:[%s1974 + $0x10] sm:$0xff]
    %v1978 = vld [vmem:[%s1974 + $0x18] sm:$0xff]
    %v1980 = vsel %vm156, %v1972, 0
    %v1983 = vsel %vm156, %v1973, 0
    %v1986 = vsel %vm156, %v1975, 0
    %v1989 = vsel %vm156, %v1976, 0
    %v1992 = vsel %vm156, %v1977, 0
    %v1995 = vsel %vm156, %v1978, 0
    %1997 = vmatpush.xpose.msra.mxu0 0.0
    %1998 = vmatpush.xpose.msra.mxu0 0.0
    %1999 = vmatpush.xpose.msra.mxu0 0.0
    %2000 = vmatpush.xpose.msra.mxu0 0.0
    %2001 = vmatpush.xpose.msra.mxu0 0.0
    %2002 = vmatpush.xpose.msra.mxu0 0.0
    %2003 = vmatpush.xpose.msra.mxu0 0.0
    %2004 = vmatpush.xpose.msra.mxu0 0.0
    %2005 = vmatpush.xpose.msra.mxu0 0.0
    %2006 = vmatpush.xpose.msra.mxu0 0.0
    %2007 = vmatpush.xpose.msra.mxu0 0.0
    %2008 = vmatpush.xpose.msra.mxu0 0.0
    %2009 = vmatpush.xpose.msra.mxu0 %v1995
    %2010 = vmatpush.xpose.msra.mxu0 %v1992
    %2011 = vmatpush.xpose.msra.mxu0 %v1989
    %2012 = vmatpush.xpose.msra.mxu0 %v1986
    %2013 = vmatmul.f32.gmra.mxu0 %v1980
    %v2014 = vpop.f32.mrf.mxu0
    %v2015 = vadd.f32 0.0, %v2014
    %2016 = vmatmul.f32.gmra.mxu0 %v1983
    %v2017 = vpop.f32.mrf.mxu0
    %v2018 = vadd.f32 0.0, %v2017
    %2019 = vdwg.mxu0
    %v2020 = vadd.f32 %v1239, %v2015
    %v2021 = vadd.f32 %v1240, %v2018
    %s2022 = scalar_lea.vmem %s11, 1
    %v2023 = vld [vmem:[%s2022] sm:$0x1]
    %v2024 = vmul.f32 %v2020, %v2020
    %v2025 = vmul.f32 %v2021, %v2021
    %v2026 = vsel %vm156, %v2024, 0.0
    %2027 = vadd.xlane.f32.xlu0 %v2026
    %v2028 = vpop.xlane.xlu0 %2027
    %v2029 = vsel %vm156, %v2025, 0.0
    %2030 = vadd.xlane.f32.xlu0 %v2029
    %v2031 = vpop.xlane.xlu0 %2030
    %v2032 = vmul.f32 %v2028, %v169
    %v2033 = vmul.f32 %v2031, %v169
    %v2034 = vadd.f32 %v2032, 1e-06
    %v2035 = vadd.f32 %v2033, 1e-06
    %v2036 = vrsqrt.pop %v2034
    %v2037 = vmul.f32 %v2036, %v2034
    %v2038 = vmul.f32 %v2037, %v2036
    %v2039 = vmul.f32 0.5, %v2038
    %v2040 = vsub.f32 1.5, %v2039
    %v2041 = vmul.f32 %v2036, %v2040
    %vm2042 = vweird.f32 %v2034
    %vm2043 = vweird.f32 %v2036
    %vm2044 = vmor %vm2042, %vm2043
    %v2045 = vsel %vm2044, %v2036, %v2041
    %v2046 = vrsqrt.pop %v2035
    %v2047 = vmul.f32 %v2046, %v2035
    %v2048 = vmul.f32 %v2047, %v2046
    %v2049 = vmul.f32 0.5, %v2048
    %v2050 = vsub.f32 1.5, %v2049
    %v2051 = vmul.f32 %v2046, %v2050
    %vm2052 = vweird.f32 %v2035
    %vm2053 = vweird.f32 %v2046
    %vm2054 = vmor %vm2052, %vm2053
    %v2055 = vsel %vm2054, %v2046, %v2051
    %v2056 = vmul.f32 %v2020, %v2045
    %v2057 = vmul.f32 %v2021, %v2055
    %v2059 = vperm.slane %v2023, 0
    %v2061 = vmul.f32 %v2056, %v2059
    %v2062 = vmul.f32 %v2057, %v2059
    %s2063 = scalar_lea.vmem %s12, 256
    %v2064 = vld [vmem:[%s2063] sm:$0xff]
    %v2065 = vld [vmem:[%s2063 + $0x8] sm:$0xff]
    %v2066 = vld [vmem:[%s2063 + $0x10] sm:$0xff]
    %v2067 = vld [vmem:[%s2063 + $0x18] sm:$0xff]
    %v2068 = vld [vmem:[%s2063 + $0x20] sm:$0xff]
    %v2069 = vld [vmem:[%s2063 + $0x28] sm:$0xff]
    %v2070 = vld [vmem:[%s2063 + $0x30] sm:$0xff]
    %v2071 = vld [vmem:[%s2063 + $0x38] sm:$0xff]
    %v2072 = vld [vmem:[%s2063 + $0x40] sm:$0xff]
    %v2073 = vld [vmem:[%s2063 + $0x48] sm:$0xff]
    %v2074 = vld [vmem:[%s2063 + $0x50] sm:$0xff]
    %v2075 = vld [vmem:[%s2063 + $0x58] sm:$0xff]
    %v2076 = vld [vmem:[%s2063 + $0x60] sm:$0xff]
    %v2077 = vld [vmem:[%s2063 + $0x68] sm:$0xff]
    %v2078 = vld [vmem:[%s2063 + $0x70] sm:$0xff]
    %v2079 = vld [vmem:[%s2063 + $0x78] sm:$0xff]
    %v2080 = vld [vmem:[%s2063 + $0x80] sm:$0xff]
    %v2081 = vld [vmem:[%s2063 + $0x88] sm:$0xff]
    %v2082 = vld [vmem:[%s2063 + $0x90] sm:$0xff]
    %v2083 = vld [vmem:[%s2063 + $0x98] sm:$0xff]
    %v2084 = vld [vmem:[%s2063 + $0xa0] sm:$0xff]
    %v2085 = vld [vmem:[%s2063 + $0xa8] sm:$0xff]
    %v2086 = vld [vmem:[%s2063 + $0xb0] sm:$0xff]
    %v2087 = vld [vmem:[%s2063 + $0xb8] sm:$0xff]
    %v2088 = vld [vmem:[%s2063 + $0xc0] sm:$0xff]
    %v2089 = vld [vmem:[%s2063 + $0xc8] sm:$0xff]
    %v2090 = vld [vmem:[%s2063 + $0xd0] sm:$0xff]
    %v2091 = vld [vmem:[%s2063 + $0xd8] sm:$0xff]
    %v2092 = vld [vmem:[%s2063 + $0xe0] sm:$0xff]
    %v2093 = vld [vmem:[%s2063 + $0xe8] sm:$0xff]
    %v2094 = vld [vmem:[%s2063 + $0xf0] sm:$0xff]
    %v2095 = vld [vmem:[%s2063 + $0xf8] sm:$0xff]
    %v2097 = vsel %vm156, %v2061, 0
    %v2100 = vsel %vm156, %v2062, 0
    %v2103 = vsel %vm156, %v2064, 0
    %v2106 = vsel %vm156, %v2065, 0
    %v2109 = vsel %vm156, %v2066, 0
    %v2112 = vsel %vm156, %v2067, 0
    %v2115 = vsel %vm156, %v2068, 0
    %v2118 = vsel %vm156, %v2069, 0
    %v2121 = vsel %vm156, %v2070, 0
    %v2124 = vsel %vm156, %v2071, 0
    %v2127 = vsel %vm156, %v2072, 0
    %v2130 = vsel %vm156, %v2073, 0
    %v2133 = vsel %vm156, %v2074, 0
    %v2136 = vsel %vm156, %v2075, 0
    %v2139 = vsel %vm156, %v2076, 0
    %v2142 = vsel %vm156, %v2077, 0
    %v2145 = vsel %vm156, %v2078, 0
    %v2148 = vsel %vm156, %v2079, 0
    %v2151 = vsel %vm156, %v2080, 0
    %v2154 = vsel %vm156, %v2081, 0
    %v2157 = vsel %vm156, %v2082, 0
    %v2160 = vsel %vm156, %v2083, 0
    %v2163 = vsel %vm156, %v2084, 0
    %v2166 = vsel %vm156, %v2085, 0
    %v2169 = vsel %vm156, %v2086, 0
    %v2172 = vsel %vm156, %v2087, 0
    %v2175 = vsel %vm156, %v2088, 0
    %v2178 = vsel %vm156, %v2089, 0
    %v2181 = vsel %vm156, %v2090, 0
    %v2184 = vsel %vm156, %v2091, 0
    %v2187 = vsel %vm156, %v2092, 0
    %v2190 = vsel %vm156, %v2093, 0
    %v2193 = vsel %vm156, %v2094, 0
    %v2196 = vsel %vm156, %v2095, 0
    %2198 = vmatpush.xpose.msra.mxu0 %v2148
    %2199 = vmatpush.xpose.msra.mxu0 %v2145
    %2200 = vmatpush.xpose.msra.mxu0 %v2142
    %2201 = vmatpush.xpose.msra.mxu0 %v2139
    %2202 = vmatpush.xpose.msra.mxu0 %v2136
    %2203 = vmatpush.xpose.msra.mxu0 %v2133
    %2204 = vmatpush.xpose.msra.mxu0 %v2130
    %2205 = vmatpush.xpose.msra.mxu0 %v2127
    %2206 = vmatpush.xpose.msra.mxu0 %v2124
    %2207 = vmatpush.xpose.msra.mxu0 %v2121
    %2208 = vmatpush.xpose.msra.mxu0 %v2118
    %2209 = vmatpush.xpose.msra.mxu0 %v2115
    %2210 = vmatpush.xpose.msra.mxu0 %v2112
    %2211 = vmatpush.xpose.msra.mxu0 %v2109
    %2212 = vmatpush.xpose.msra.mxu0 %v2106
    %2213 = vmatpush.xpose.msra.mxu0 %v2103
    %2214 = vmatmul.f32.gmra.mxu0 %v2097
    %v2215 = vpop.f32.mrf.mxu0
    %v2216 = vadd.f32 0.0, %v2215
    %2217 = vmatmul.f32.gmra.mxu0 %v2100
    %v2218 = vpop.f32.mrf.mxu0
    %v2219 = vadd.f32 0.0, %v2218
    %2220 = vdwg.mxu0
    %2221 = vmatpush.xpose.msra.mxu0 %v2196
    %2222 = vmatpush.xpose.msra.mxu0 %v2193
    %2223 = vmatpush.xpose.msra.mxu0 %v2190
    %2224 = vmatpush.xpose.msra.mxu0 %v2187
    %2225 = vmatpush.xpose.msra.mxu0 %v2184
    %2226 = vmatpush.xpose.msra.mxu0 %v2181
    %2227 = vmatpush.xpose.msra.mxu0 %v2178
    %2228 = vmatpush.xpose.msra.mxu0 %v2175
    %2229 = vmatpush.xpose.msra.mxu0 %v2172
    %2230 = vmatpush.xpose.msra.mxu0 %v2169
    %2231 = vmatpush.xpose.msra.mxu0 %v2166
    %2232 = vmatpush.xpose.msra.mxu0 %v2163
    %2233 = vmatpush.xpose.msra.mxu0 %v2160
    %2234 = vmatpush.xpose.msra.mxu0 %v2157
    %2235 = vmatpush.xpose.msra.mxu0 %v2154
    %2236 = vmatpush.xpose.msra.mxu0 %v2151
    %2237 = vmatmul.f32.gmra.mxu0 %v2097
    %v2238 = vpop.f32.mrf.mxu0
    %v2239 = vadd.f32 0.0, %v2238
    %2240 = vmatmul.f32.gmra.mxu0 %v2100
    %v2241 = vpop.f32.mrf.mxu0
    %v2242 = vadd.f32 0.0, %v2241
    %2243 = vdwg.mxu0
    %v2244 = vxor.u32 %v2216, 2147483648
    %v2245 = vxor.u32 %v2219, 2147483648
    %v2246 = vmul.f32 %v2244, 1.442695
    %v2247 = vpow.pop %v2246
    %v2248 = vmul.f32 %v2245, 1.442695
    %v2249 = vpow.pop %v2248
    %v2250 = vadd.f32 %v2247, 1.0
    %v2251 = vadd.f32 %v2249, 1.0
    %v2252 = vrcp.pop %v2250
    %v2253 = vmul.f32 %v2250, %v2252
    %v2254 = vsub.f32 1.0, %v2253
    %v2255 = vmul.f32 %v2252, %v2254
    %v2256 = vadd.f32 %v2252, %v2255
    %vm2257 = vweird.f32 %v2250
    %vm2258 = vweird.f32 %v2252
    %vm2259 = vmor %vm2257, %vm2258
    %v2260 = vsel %vm2259, %v2252, %v2256
    %v2261 = vand.u32 2147483647, %v2250
    %vm2262 = vcmp.eq.f32.partialorder %v2261, 8.507059e+37
    %v2263 = vand.u32 %v2250, 2147483648
    %v2264 = vor.u32 1.1754944e-38, %v2263
    %v2265 = vsel %vm2262, %v2264, %v2260
    %v2266 = vmul.f32 1.0, %v2265
    %v2267 = vrcp.pop %v2251
    %v2268 = vmul.f32 %v2251, %v2267
    %v2269 = vsub.f32 1.0, %v2268
    %v2270 = vmul.f32 %v2267, %v2269
    %v2271 = vadd.f32 %v2267, %v2270
    %vm2272 = vweird.f32 %v2251
    %vm2273 = vweird.f32 %v2267
    %vm2274 = vmor %vm2272, %vm2273
    %v2275 = vsel %vm2274, %v2267, %v2271
    %v2276 = vand.u32 2147483647, %v2251
    %vm2277 = vcmp.eq.f32.partialorder %v2276, 8.507059e+37
    %v2278 = vand.u32 %v2251, 2147483648
    %v2279 = vor.u32 1.1754944e-38, %v2278
    %v2280 = vsel %vm2277, %v2279, %v2275
    %v2281 = vmul.f32 1.0, %v2280
    %v2282 = vmul.f32 %v2216, %v2266
    %v2283 = vmul.f32 %v2219, %v2281
    %v2284 = vmul.f32 %v2282, %v2239
    %v2285 = vmul.f32 %v2283, %v2242
    %s2286 = scalar_lea.vmem %s13, 32
    %v2287 = vld [vmem:[%s2286] sm:$0xff]
    %v2288 = vld [vmem:[%s2286 + $0x8] sm:$0xff]
    %v2289 = vld [vmem:[%s2286 + $0x10] sm:$0xff]
    %v2290 = vld [vmem:[%s2286 + $0x18] sm:$0xff]
    %2291 = vmatpush.xpose.msra.mxu0 0.0
    %2292 = vmatpush.xpose.msra.mxu0 0.0
    %2293 = vmatpush.xpose.msra.mxu0 0.0
    %2294 = vmatpush.xpose.msra.mxu0 0.0
    %2295 = vmatpush.xpose.msra.mxu0 0.0
    %2296 = vmatpush.xpose.msra.mxu0 0.0
    %2297 = vmatpush.xpose.msra.mxu0 0.0
    %2298 = vmatpush.xpose.msra.mxu0 0.0
    %2299 = vmatpush.xpose.msra.mxu0 0.0
    %2300 = vmatpush.xpose.msra.mxu0 0.0
    %2301 = vmatpush.xpose.msra.mxu0 0.0
    %2302 = vmatpush.xpose.msra.mxu0 0.0
    %2303 = vmatpush.xpose.msra.mxu0 %v2290
    %2304 = vmatpush.xpose.msra.mxu0 %v2289
    %2305 = vmatpush.xpose.msra.mxu0 %v2288
    %2306 = vmatpush.xpose.msra.mxu0 %v2287
    %2307 = vmatmul.f32.gmra.mxu0 %v2284
    %v2308 = vpop.f32.mrf.mxu0
    %v2309 = vadd.f32 0.0, %v2308
    %2310 = vmatmul.f32.gmra.mxu0 %v2285
    %v2311 = vpop.f32.mrf.mxu0
    %v2312 = vadd.f32 0.0, %v2311
    %2313 = vdwg.mxu0
    %v2314 = vadd.f32 %v2020, %v2309
    %v2315 = vadd.f32 %v2021, %v2312
    %v2316 = vld [vmem:[%s14] sm:$0x1]
    %v2317 = vmul.f32 %v2314, %v2314
    %v2318 = vmul.f32 %v2315, %v2315
    %v2319 = vsel %vm156, %v2317, 0.0
    %2320 = vadd.xlane.f32.xlu0 %v2319
    %v2321 = vpop.xlane.xlu0 %2320
    %v2322 = vsel %vm156, %v2318, 0.0
    %2323 = vadd.xlane.f32.xlu0 %v2322
    %v2324 = vpop.xlane.xlu0 %2323
    %v2325 = vmul.f32 %v2321, %v169
    %v2326 = vmul.f32 %v2324, %v169
    %v2327 = vadd.f32 %v2325, 1e-06
    %v2328 = vadd.f32 %v2326, 1e-06
    %v2329 = vrsqrt.pop %v2327
    %v2330 = vmul.f32 %v2329, %v2327
    %v2331 = vmul.f32 %v2330, %v2329
    %v2332 = vmul.f32 0.5, %v2331
    %v2333 = vsub.f32 1.5, %v2332
    %v2334 = vmul.f32 %v2329, %v2333
    %vm2335 = vweird.f32 %v2327
    %vm2336 = vweird.f32 %v2329
    %vm2337 = vmor %vm2335, %vm2336
    %v2338 = vsel %vm2337, %v2329, %v2334
    %v2339 = vrsqrt.pop %v2328
    %v2340 = vmul.f32 %v2339, %v2328
    %v2341 = vmul.f32 %v2340, %v2339
    %v2342 = vmul.f32 0.5, %v2341
    %v2343 = vsub.f32 1.5, %v2342
    %v2344 = vmul.f32 %v2339, %v2343
    %vm2345 = vweird.f32 %v2328
    %vm2346 = vweird.f32 %v2339
    %vm2347 = vmor %vm2345, %vm2346
    %v2348 = vsel %vm2347, %v2339, %v2344
    %v2349 = vmul.f32 %v2314, %v2338
    %v2350 = vmul.f32 %v2315, %v2348
    %v2352 = vperm.slane %v2316, 0
    %v2354 = vmul.f32 %v2349, %v2352
    %v2355 = vmul.f32 %v2350, %v2352
    %v2356 = vld [vmem:[%s7] sm:$0xff]
    %v2357 = vld [vmem:[%s7 + $0x8] sm:$0xff]
    %v2359 = vsel %vm410, %v2356, 0
    %v2362 = vsel %vm410, %v2357, 0
    %2364 = vmatpush.msra.mxu0 0.0
    %2365 = vmatpush.msra.mxu0 0.0
    %2366 = vmatpush.msra.mxu0 0.0
    %2367 = vmatpush.msra.mxu0 0.0
    %2368 = vmatpush.msra.mxu0 0.0
    %2369 = vmatpush.msra.mxu0 0.0
    %2370 = vmatpush.msra.mxu0 0.0
    %2371 = vmatpush.msra.mxu0 0.0
    %2372 = vmatpush.msra.mxu0 0.0
    %2373 = vmatpush.msra.mxu0 0.0
    %2374 = vmatpush.msra.mxu0 0.0
    %2375 = vmatpush.msra.mxu0 0.0
    %2376 = vmatpush.msra.mxu0 0.0
    %2377 = vmatpush.msra.mxu0 0.0
    %2378 = vmatpush.msra.mxu0 %v2355
    %2379 = vmatpush.msra.mxu0 %v2354
    %2380 = vmatmul.f32.gmra.mxu0 %v2359
    %v2381 = vpop.f32.mrf.mxu0
    %v2382 = vadd.f32 0.0, %v2381
    %2383 = vmatmul.f32.gmra.mxu0 %v2362
    %v2384 = vpop.f32.mrf.mxu0
    %v2385 = vadd.f32 0.0, %v2384
    %2386 = vdwg.mxu0
    %v2387 = vld [vmem:[%s15] sm:$0x1]
    %v2388 = vld [vmem:[%s16] sm:$0x1]
    %v2389 = vsel %vm156, %v2382, 0.0
    %2390 = vadd.xlane.f32.xlu0 %v2389
    %v2391 = vpop.xlane.xlu0 %2390
    %v2392 = vsel %vm156, %v2385, 0.0
    %2393 = vadd.xlane.f32.xlu0 %v2392
    %v2394 = vpop.xlane.xlu0 %2393
    %v2395 = vmul.f32 %v2391, %v169
    %v2396 = vmul.f32 %v2394, %v169
    %v2397 = vsub.f32 %v2382, %v2395
    %v2398 = vsub.f32 %v2385, %v2396
    %v2399 = vmul.f32 %v2397, %v2397
    %v2400 = vmul.f32 %v2398, %v2398
    %v2401 = vsel %vm156, %v2399, 0.0
    %2402 = vadd.xlane.f32.xlu0 %v2401
    %v2403 = vpop.xlane.xlu0 %2402
    %v2404 = vsel %vm156, %v2400, 0.0
    %2405 = vadd.xlane.f32.xlu0 %v2404
    %v2406 = vpop.xlane.xlu0 %2405
    %v2407 = vmul.f32 %v2403, %v169
    %v2408 = vmul.f32 %v2406, %v169
    %v2409 = vadd.f32 %v2407, 1e-05
    %v2410 = vadd.f32 %v2408, 1e-05
    %v2411 = vrsqrt.pop %v2409
    %v2412 = vmul.f32 %v2411, %v2409
    %v2413 = vmul.f32 %v2412, %v2411
    %v2414 = vmul.f32 0.5, %v2413
    %v2415 = vsub.f32 1.5, %v2414
    %v2416 = vmul.f32 %v2411, %v2415
    %vm2417 = vweird.f32 %v2409
    %vm2418 = vweird.f32 %v2411
    %vm2419 = vmor %vm2417, %vm2418
    %v2420 = vsel %vm2419, %v2411, %v2416
    %v2421 = vrsqrt.pop %v2410
    %v2422 = vmul.f32 %v2421, %v2410
    %v2423 = vmul.f32 %v2422, %v2421
    %v2424 = vmul.f32 0.5, %v2423
    %v2425 = vsub.f32 1.5, %v2424
    %v2426 = vmul.f32 %v2421, %v2425
    %vm2427 = vweird.f32 %v2410
    %vm2428 = vweird.f32 %v2421
    %vm2429 = vmor %vm2427, %vm2428
    %v2430 = vsel %vm2429, %v2421, %v2426
    %v2431 = vmul.f32 %v2397, %v2420
    %v2432 = vmul.f32 %v2398, %v2430
    %v2434 = vperm.slane %v2387, 0
    %v2436 = vmul.f32 %v2431, %v2434
    %v2437 = vmul.f32 %v2432, %v2434
    %v2439 = vperm.slane %v2388, 0
    %v2441 = vadd.f32 %v2436, %v2439
    %v2442 = vadd.f32 %v2437, %v2439
    %v2443 = vld [vmem:[%s17] sm:$0xff]
    %v2444 = vld [vmem:[%s17 + $0x8] sm:$0xff]
    %v2445 = vld [vmem:[%s18] sm:$0xff]
    %v2446 = vld [vmem:[%s18 + $0x8] sm:$0xff]
    %2448 = vset.pattern.permute.xlu0 0
    %2449 = vperm.xlu0 %2448, %v2445
    %v2450 = vpop.permute.xlu0 %2449
    %2453 = vset.pattern.permute.xlu0 0
    %2454 = vperm.xlu0 %2453, %v2446
    %v2455 = vpop.permute.xlu0 %2454
    %v2458 = vsel %vm410, %v2443, 0
    %v2461 = vsel %vm410, %v2444, 0
    %2463 = vmatpush.msra.mxu0 0.0
    %2464 = vmatpush.msra.mxu0 0.0
    %2465 = vmatpush.msra.mxu0 0.0
    %2466 = vmatpush.msra.mxu0 0.0
    %2467 = vmatpush.msra.mxu0 0.0
    %2468 = vmatpush.msra.mxu0 0.0
    %2469 = vmatpush.msra.mxu0 0.0
    %2470 = vmatpush.msra.mxu0 0.0
    %2471 = vmatpush.msra.mxu0 0.0
    %2472 = vmatpush.msra.mxu0 0.0
    %2473 = vmatpush.msra.mxu0 0.0
    %2474 = vmatpush.msra.mxu0 0.0
    %2475 = vmatpush.msra.mxu0 0.0
    %2476 = vmatpush.msra.mxu0 0.0
    %2477 = vmatpush.msra.mxu0 %v2442
    %2478 = vmatpush.msra.mxu0 %v2441
    %2479 = vmatmul.f32.gmra.mxu0 %v2458
    %v2480 = vpop.f32.mrf.mxu0
    %v2481 = vadd.f32 %v2450, %v2480
    %2482 = vmatmul.f32.gmra.mxu0 %v2461
    %v2483 = vpop.f32.mrf.mxu0
    %v2484 = vadd.f32 %v2455, %v2483
    %2485 = vdwg.mxu0
    %v2486 = vadd.f32 %v2481, %v2382
    %v2487 = vadd.f32 %v2484, %v2385
    %v2488 = vld [vmem:[%s19] sm:$0x1]
    %v2489 = vld [vmem:[%s20] sm:$0x1]
    %v2490 = vsel %vm156, %v2486, 0.0
    %2491 = vadd.xlane.f32.xlu0 %v2490
    %v2492 = vpop.xlane.xlu0 %2491
    %v2493 = vsel %vm156, %v2487, 0.0
    %2494 = vadd.xlane.f32.xlu0 %v2493
    %v2495 = vpop.xlane.xlu0 %2494
    %v2496 = vmul.f32 %v2492, %v169
    %v2497 = vmul.f32 %v2495, %v169
    %v2498 = vsub.f32 %v2486, %v2496
    %v2499 = vsub.f32 %v2487, %v2497
    %v2500 = vmul.f32 %v2498, %v2498
    %v2501 = vmul.f32 %v2499, %v2499
    %v2502 = vsel %vm156, %v2500, 0.0
    %2503 = vadd.xlane.f32.xlu0 %v2502
    %v2504 = vpop.xlane.xlu0 %2503
    %v2505 = vsel %vm156, %v2501, 0.0
    %2506 = vadd.xlane.f32.xlu0 %v2505
    %v2507 = vpop.xlane.xlu0 %2506
    %v2508 = vmul.f32 %v2504, %v169
    %v2509 = vmul.f32 %v2507, %v169
    %v2510 = vadd.f32 %v2508, 1e-05
    %v2511 = vadd.f32 %v2509, 1e-05
    %v2512 = vrsqrt.pop %v2510
    %v2513 = vmul.f32 %v2512, %v2510
    %v2514 = vmul.f32 %v2513, %v2512
    %v2515 = vmul.f32 0.5, %v2514
    %v2516 = vsub.f32 1.5, %v2515
    %v2517 = vmul.f32 %v2512, %v2516
    %vm2518 = vweird.f32 %v2510
    %vm2519 = vweird.f32 %v2512
    %vm2520 = vmor %vm2518, %vm2519
    %v2521 = vsel %vm2520, %v2512, %v2517
    %v2522 = vrsqrt.pop %v2511
    %v2523 = vmul.f32 %v2522, %v2511
    %v2524 = vmul.f32 %v2523, %v2522
    %v2525 = vmul.f32 0.5, %v2524
    %v2526 = vsub.f32 1.5, %v2525
    %v2527 = vmul.f32 %v2522, %v2526
    %vm2528 = vweird.f32 %v2511
    %vm2529 = vweird.f32 %v2522
    %vm2530 = vmor %vm2528, %vm2529
    %v2531 = vsel %vm2530, %v2522, %v2527
    %v2532 = vmul.f32 %v2498, %v2521
    %v2533 = vmul.f32 %v2499, %v2531
    %v2535 = vperm.slane %v2488, 0
    %v2537 = vmul.f32 %v2532, %v2535
    %v2538 = vmul.f32 %v2533, %v2535
    %v2540 = vperm.slane %v2489, 0
    %v2542 = vadd.f32 %v2537, %v2540
    %v2543 = vadd.f32 %v2538, %v2540
    %v2544 = vld [vmem:[%s21] sm:$0xff]
    %v2545 = vld [vmem:[%s21 + $0x8] sm:$0xff]
    %v2546 = vld [vmem:[%s21 + $0x10] sm:$0xff]
    %v2547 = vld [vmem:[%s21 + $0x18] sm:$0xff]
    %v2548 = vld [vmem:[%s21 + $0x20] sm:$0xff]
    %v2549 = vld [vmem:[%s21 + $0x28] sm:$0xff]
    %v2550 = vld [vmem:[%s21 + $0x30] sm:$0xff]
    %v2551 = vld [vmem:[%s21 + $0x38] sm:$0xff]
    %v2552 = vld [vmem:[%s21 + $0x40] sm:$0xff]
    %v2553 = vld [vmem:[%s21 + $0x48] sm:$0xff]
    %v2554 = vld [vmem:[%s21 + $0x50] sm:$0xff]
    %v2555 = vld [vmem:[%s21 + $0x58] sm:$0xff]
    %v2556 = vld [vmem:[%s21 + $0x60] sm:$0xff]
    %v2557 = vld [vmem:[%s21 + $0x68] sm:$0xff]
    %v2558 = vld [vmem:[%s21 + $0x70] sm:$0xff]
    %v2559 = vld [vmem:[%s21 + $0x78] sm:$0xff]
    %v2560 = vld [vmem:[%s22] sm:$0x1]
    %v2562 = vperm.slane %v2560, 0
    %v2565 = vsel %vm156, %v2542, 0
    %v2568 = vsel %vm156, %v2543, 0
    %v2571 = vsel %vm156, %v2544, 0
    %v2574 = vsel %vm156, %v2545, 0
    %v2577 = vsel %vm156, %v2546, 0
    %v2580 = vsel %vm156, %v2547, 0
    %v2583 = vsel %vm156, %v2548, 0
    %v2586 = vsel %vm156, %v2549, 0
    %v2589 = vsel %vm156, %v2550, 0
    %v2592 = vsel %vm156, %v2551, 0
    %v2595 = vsel %vm156, %v2552, 0
    %v2598 = vsel %vm156, %v2553, 0
    %v2601 = vsel %vm156, %v2554, 0
    %v2604 = vsel %vm156, %v2555, 0
    %v2607 = vsel %vm156, %v2556, 0
    %v2610 = vsel %vm156, %v2557, 0
    %v2613 = vsel %vm156, %v2558, 0
    %v2616 = vsel %vm156, %v2559, 0
    %2618 = vmatpush.xpose.msra.mxu0 %v2616
    %2619 = vmatpush.xpose.msra.mxu0 %v2613
    %2620 = vmatpush.xpose.msra.mxu0 %v2610
    %2621 = vmatpush.xpose.msra.mxu0 %v2607
    %2622 = vmatpush.xpose.msra.mxu0 %v2604
    %2623 = vmatpush.xpose.msra.mxu0 %v2601
    %2624 = vmatpush.xpose.msra.mxu0 %v2598
    %2625 = vmatpush.xpose.msra.mxu0 %v2595
    %2626 = vmatpush.xpose.msra.mxu0 %v2592
    %2627 = vmatpush.xpose.msra.mxu0 %v2589
    %2628 = vmatpush.xpose.msra.mxu0 %v2586
    %2629 = vmatpush.xpose.msra.mxu0 %v2583
    %2630 = vmatpush.xpose.msra.mxu0 %v2580
    %2631 = vmatpush.xpose.msra.mxu0 %v2577
    %2632 = vmatpush.xpose.msra.mxu0 %v2574
    %2633 = vmatpush.xpose.msra.mxu0 %v2571
    %2634 = vmatmul.f32.gmra.mxu0 %v2565
    %v2635 = vpop.f32.mrf.mxu0
    %v2636 = vadd.f32 %v2562, %v2635
    %2637 = vmatmul.f32.gmra.mxu0 %v2568
    %v2638 = vpop.f32.mrf.mxu0
    %v2639 = vadd.f32 %v2562, %v2638
    %2640 = vdwg.mxu0
    %v2641 = vmul.f32 %v2636, 0.5
    %v2642 = vmul.f32 %v2639, 0.5
    %v2643 = vmul.f32 %v2636, 0.70710677
    %v2644 = vmul.f32 %v2639, 0.70710677
    %vm2645 = vcmp.ge.f32.partialorder %v2643, 0.0
    %vm2646 = vcmp.ge.f32.partialorder %v2644, 0.0
    %v2647 = vsel %vm2645, 1.0, -1.0
    %v2648 = vsel %vm2646, 1.0, -1.0
    %v2649 = vand.u32 2147483647, %v2643
    %v2650 = vand.u32 2147483647, %v2644
    %v2651 = vmul.f32 %v2649, 0.3275911
    %v2652 = vmul.f32 %v2650, 0.3275911
    %v2653 = vadd.f32 %v2651, 1.0
    %v2654 = vadd.f32 %v2652, 1.0
    %v2655 = vrcp.pop %v2653
    %v2656 = vmul.f32 %v2653, %v2655
    %v2657 = vsub.f32 1.0, %v2656
    %v2658 = vmul.f32 %v2655, %v2657
    %v2659 = vadd.f32 %v2655, %v2658
    %vm2660 = vweird.f32 %v2653
    %vm2661 = vweird.f32 %v2655
    %vm2662 = vmor %vm2660, %vm2661
    %v2663 = vsel %vm2662, %v2655, %v2659
    %v2664 = vand.u32 2147483647, %v2653
    %vm2665 = vcmp.eq.f32.partialorder %v2664, 8.507059e+37
    %v2666 = vand.u32 %v2653, 2147483648
    %v2667 = vor.u32 1.1754944e-38, %v2666
    %v2668 = vsel %vm2665, %v2667, %v2663
    %v2669 = vmul.f32 1.0, %v2668
    %v2670 = vrcp.pop %v2654
    %v2671 = vmul.f32 %v2654, %v2670
    %v2672 = vsub.f32 1.0, %v2671
    %v2673 = vmul.f32 %v2670, %v2672
    %v2674 = vadd.f32 %v2670, %v2673
    %vm2675 = vweird.f32 %v2654
    %vm2676 = vweird.f32 %v2670
    %vm2677 = vmor %vm2675, %vm2676
    %v2678 = vsel %vm2677, %v2670, %v2674
    %v2679 = vand.u32 2147483647, %v2654
    %vm2680 = vcmp.eq.f32.partialorder %v2679, 8.507059e+37
    %v2681 = vand.u32 %v2654, 2147483648
    %v2682 = vor.u32 1.1754944e-38, %v2681
    %v2683 = vsel %vm2680, %v2682, %v2678
    %v2684 = vmul.f32 1.0, %v2683
    %v2685 = vmul.f32 %v2669, 1.0614054
    %v2686 = vmul.f32 %v2684, 1.0614054
    %v2687 = vadd.f32 %v2685, -1.4531521
    %v2688 = vadd.f32 %v2686, -1.4531521
    %v2689 = vmul.f32 %v2687, %v2669
    %v2690 = vmul.f32 %v2688, %v2684
    %v2691 = vadd.f32 %v2689, 1.4214138
    %v2692 = vadd.f32 %v2690, 1.4214138
    %v2693 = vmul.f32 %v2691, %v2669
    %v2694 = vmul.f32 %v2692, %v2684
    %v2695 = vadd.f32 %v2693, -0.28449672
    %v2696 = vadd.f32 %v2694, -0.28449672
    %v2697 = vmul.f32 %v2695, %v2669
    %v2698 = vmul.f32 %v2696, %v2684
    %v2699 = vadd.f32 %v2697, 0.2548296
    %v2700 = vadd.f32 %v2698, 0.2548296
    %v2701 = vmul.f32 %v2699, %v2669
    %v2702 = vmul.f32 %v2700, %v2684
    %v2703 = vsub.f32 0.0, %v2649
    %v2704 = vsub.f32 0.0, %v2650
    %v2705 = vmul.f32 %v2703, %v2649
    %v2706 = vmul.f32 %v2704, %v2650
    %v2707 = vmul.f32 %v2705, 1.442695
    %v2708 = vpow.pop %v2707
    %v2709 = vmul.f32 %v2706, 1.442695
    %v2710 = vpow.pop %v2709
    %v2711 = vmul.f32 %v2701, %v2708
    %v2712 = vmul.f32 %v2702, %v2710
    %v2713 = vsub.f32 1.0, %v2711
    %v2714 = vsub.f32 1.0, %v2712
    %v2715 = vmul.f32 %v2647, %v2713
    %v2716 = vmul.f32 %v2648, %v2714
    %v2717 = vadd.f32 %v2715, 1.0
    %v2718 = vadd.f32 %v2716, 1.0
    %v2719 = vmul.f32 %v2641, %v2717
    %v2720 = vmul.f32 %v2642, %v2718
    %v2721 = vld [vmem:[%s23] sm:$0xff]
    %v2722 = vld [vmem:[%s23 + $0x8] sm:$0xff]
    %v2723 = vld [vmem:[%s23 + $0x10] sm:$0xff]
    %v2724 = vld [vmem:[%s23 + $0x18] sm:$0xff]
    %2725 = vmatpush.xpose.msra.mxu0 0.0
    %2726 = vmatpush.xpose.msra.mxu0 0.0
    %2727 = vmatpush.xpose.msra.mxu0 0.0
    %2728 = vmatpush.xpose.msra.mxu0 0.0
    %2729 = vmatpush.xpose.msra.mxu0 0.0
    %2730 = vmatpush.xpose.msra.mxu0 0.0
    %2731 = vmatpush.xpose.msra.mxu0 0.0
    %2732 = vmatpush.xpose.msra.mxu0 0.0
    %2733 = vmatpush.xpose.msra.mxu0 0.0
    %2734 = vmatpush.xpose.msra.mxu0 0.0
    %2735 = vmatpush.xpose.msra.mxu0 0.0
    %2736 = vmatpush.xpose.msra.mxu0 0.0
    %2737 = vmatpush.xpose.msra.mxu0 %v2724
    %2738 = vmatpush.xpose.msra.mxu0 %v2723
    %2739 = vmatpush.xpose.msra.mxu0 %v2722
    %2740 = vmatpush.xpose.msra.mxu0 %v2721
    %2741 = vmatmul.f32.gmra.mxu0 %v2719
    %v2742 = vpop.f32.mrf.mxu0
    %v2743 = vadd.f32 0.0, %v2742
    %2744 = vmatmul.f32.gmra.mxu0 %v2720
    %v2745 = vpop.f32.mrf.mxu0
    %v2746 = vadd.f32 0.0, %v2745
    %2747 = vdwg.mxu0
    %v2748 = vadd.f32 %v2486, %v2743
    %v2749 = vadd.f32 %v2487, %v2746
    %v2750 = vld [vmem:[%s24] sm:$0x1]
    %v2752 = vperm.slane %v2750, 0
    %v2754 = vadd.f32 %v2748, %v2752
    %v2755 = vadd.f32 %v2749, %v2752
    %s2756 = scalar_lea.vmem %s15, 1
    %v2757 = vld [vmem:[%s2756] sm:$0x1]
    %s2758 = scalar_lea.vmem %s16, 1
    %v2759 = vld [vmem:[%s2758] sm:$0x1]
    %v2760 = vsel %vm156, %v2754, 0.0
    %2761 = vadd.xlane.f32.xlu0 %v2760
    %v2762 = vpop.xlane.xlu0 %2761
    %v2763 = vsel %vm156, %v2755, 0.0
    %2764 = vadd.xlane.f32.xlu0 %v2763
    %v2765 = vpop.xlane.xlu0 %2764
    %v2766 = vmul.f32 %v2762, %v169
    %v2767 = vmul.f32 %v2765, %v169
    %v2768 = vsub.f32 %v2754, %v2766
    %v2769 = vsub.f32 %v2755, %v2767
    %v2770 = vmul.f32 %v2768, %v2768
    %v2771 = vmul.f32 %v2769, %v2769
    %v2772 = vsel %vm156, %v2770, 0.0
    %2773 = vadd.xlane.f32.xlu0 %v2772
    %v2774 = vpop.xlane.xlu0 %2773
    %v2775 = vsel %vm156, %v2771, 0.0
    %2776 = vadd.xlane.f32.xlu0 %v2775
    %v2777 = vpop.xlane.xlu0 %2776
    %v2778 = vmul.f32 %v2774, %v169
    %v2779 = vmul.f32 %v2777, %v169
    %v2780 = vadd.f32 %v2778, 1e-05
    %v2781 = vadd.f32 %v2779, 1e-05
    %v2782 = vrsqrt.pop %v2780
    %v2783 = vmul.f32 %v2782, %v2780
    %v2784 = vmul.f32 %v2783, %v2782
    %v2785 = vmul.f32 0.5, %v2784
    %v2786 = vsub.f32 1.5, %v2785
    %v2787 = vmul.f32 %v2782, %v2786
    %vm2788 = vweird.f32 %v2780
    %vm2789 = vweird.f32 %v2782
    %vm2790 = vmor %vm2788, %vm2789
    %v2791 = vsel %vm2790, %v2782, %v2787
    %v2792 = vrsqrt.pop %v2781
    %v2793 = vmul.f32 %v2792, %v2781
    %v2794 = vmul.f32 %v2793, %v2792
    %v2795 = vmul.f32 0.5, %v2794
    %v2796 = vsub.f32 1.5, %v2795
    %v2797 = vmul.f32 %v2792, %v2796
    %vm2798 = vweird.f32 %v2781
    %vm2799 = vweird.f32 %v2792
    %vm2800 = vmor %vm2798, %vm2799
    %v2801 = vsel %vm2800, %v2792, %v2797
    %v2802 = vmul.f32 %v2768, %v2791
    %v2803 = vmul.f32 %v2769, %v2801
    %v2805 = vperm.slane %v2757, 0
    %v2807 = vmul.f32 %v2802, %v2805
    %v2808 = vmul.f32 %v2803, %v2805
    %v2810 = vperm.slane %v2759, 0
    %v2812 = vadd.f32 %v2807, %v2810
    %v2813 = vadd.f32 %v2808, %v2810
    %s2814 = scalar_lea.vmem %s17, 16
    %v2815 = vld [vmem:[%s2814] sm:$0xff]
    %v2816 = vld [vmem:[%s2814 + $0x8] sm:$0xff]
    %s2817 = scalar_lea.vmem %s18, 16
    %v2818 = vld [vmem:[%s2817] sm:$0xff]
    %v2819 = vld [vmem:[%s2817 + $0x8] sm:$0xff]
    %2821 = vset.pattern.permute.xlu0 0
    %2822 = vperm.xlu0 %2821, %v2818
    %v2823 = vpop.permute.xlu0 %2822
    %2826 = vset.pattern.permute.xlu0 0
    %2827 = vperm.xlu0 %2826, %v2819
    %v2828 = vpop.permute.xlu0 %2827
    %v2831 = vsel %vm410, %v2815, 0
    %v2834 = vsel %vm410, %v2816, 0
    %2836 = vmatpush.msra.mxu0 0.0
    %2837 = vmatpush.msra.mxu0 0.0
    %2838 = vmatpush.msra.mxu0 0.0
    %2839 = vmatpush.msra.mxu0 0.0
    %2840 = vmatpush.msra.mxu0 0.0
    %2841 = vmatpush.msra.mxu0 0.0
    %2842 = vmatpush.msra.mxu0 0.0
    %2843 = vmatpush.msra.mxu0 0.0
    %2844 = vmatpush.msra.mxu0 0.0
    %2845 = vmatpush.msra.mxu0 0.0
    %2846 = vmatpush.msra.mxu0 0.0
    %2847 = vmatpush.msra.mxu0 0.0
    %2848 = vmatpush.msra.mxu0 0.0
    %2849 = vmatpush.msra.mxu0 0.0
    %2850 = vmatpush.msra.mxu0 %v2813
    %2851 = vmatpush.msra.mxu0 %v2812
    %2852 = vmatmul.f32.gmra.mxu0 %v2831
    %v2853 = vpop.f32.mrf.mxu0
    %v2854 = vadd.f32 %v2823, %v2853
    %2855 = vmatmul.f32.gmra.mxu0 %v2834
    %v2856 = vpop.f32.mrf.mxu0
    %v2857 = vadd.f32 %v2828, %v2856
    %2858 = vdwg.mxu0
    %v2859 = vadd.f32 %v2854, %v2754
    %v2860 = vadd.f32 %v2857, %v2755
    %s2861 = scalar_lea.vmem %s19, 1
    %v2862 = vld [vmem:[%s2861] sm:$0x1]
    %s2863 = scalar_lea.vmem %s20, 1
    %v2864 = vld [vmem:[%s2863] sm:$0x1]
    %v2865 = vsel %vm156, %v2859, 0.0
    %2866 = vadd.xlane.f32.xlu0 %v2865
    %v2867 = vpop.xlane.xlu0 %2866
    %v2868 = vsel %vm156, %v2860, 0.0
    %2869 = vadd.xlane.f32.xlu0 %v2868
    %v2870 = vpop.xlane.xlu0 %2869
    %v2871 = vmul.f32 %v2867, %v169
    %v2872 = vmul.f32 %v2870, %v169
    %v2873 = vsub.f32 %v2859, %v2871
    %v2874 = vsub.f32 %v2860, %v2872
    %v2875 = vmul.f32 %v2873, %v2873
    %v2876 = vmul.f32 %v2874, %v2874
    %v2877 = vsel %vm156, %v2875, 0.0
    %2878 = vadd.xlane.f32.xlu0 %v2877
    %v2879 = vpop.xlane.xlu0 %2878
    %v2880 = vsel %vm156, %v2876, 0.0
    %2881 = vadd.xlane.f32.xlu0 %v2880
    %v2882 = vpop.xlane.xlu0 %2881
    %v2883 = vmul.f32 %v2879, %v169
    %v2884 = vmul.f32 %v2882, %v169
    %v2885 = vadd.f32 %v2883, 1e-05
    %v2886 = vadd.f32 %v2884, 1e-05
    %v2887 = vrsqrt.pop %v2885
    %v2888 = vmul.f32 %v2887, %v2885
    %v2889 = vmul.f32 %v2888, %v2887
    %v2890 = vmul.f32 0.5, %v2889
    %v2891 = vsub.f32 1.5, %v2890
    %v2892 = vmul.f32 %v2887, %v2891
    %vm2893 = vweird.f32 %v2885
    %vm2894 = vweird.f32 %v2887
    %vm2895 = vmor %vm2893, %vm2894
    %v2896 = vsel %vm2895, %v2887, %v2892
    %v2897 = vrsqrt.pop %v2886
    %v2898 = vmul.f32 %v2897, %v2886
    %v2899 = vmul.f32 %v2898, %v2897
    %v2900 = vmul.f32 0.5, %v2899
    %v2901 = vsub.f32 1.5, %v2900
    %v2902 = vmul.f32 %v2897, %v2901
    %vm2903 = vweird.f32 %v2886
    %vm2904 = vweird.f32 %v2897
    %vm2905 = vmor %vm2903, %vm2904
    %v2906 = vsel %vm2905, %v2897, %v2902
    %v2907 = vmul.f32 %v2873, %v2896
    %v2908 = vmul.f32 %v2874, %v2906
    %v2910 = vperm.slane %v2862, 0
    %v2912 = vmul.f32 %v2907, %v2910
    %v2913 = vmul.f32 %v2908, %v2910
    %v2915 = vperm.slane %v2864, 0
    %v2917 = vadd.f32 %v2912, %v2915
    %v2918 = vadd.f32 %v2913, %v2915
    %s2919 = scalar_lea.vmem %s21, 128
    %v2920 = vld [vmem:[%s2919] sm:$0xff]
    %v2921 = vld [vmem:[%s2919 + $0x8] sm:$0xff]
    %v2922 = vld [vmem:[%s2919 + $0x10] sm:$0xff]
    %v2923 = vld [vmem:[%s2919 + $0x18] sm:$0xff]
    %v2924 = vld [vmem:[%s2919 + $0x20] sm:$0xff]
    %v2925 = vld [vmem:[%s2919 + $0x28] sm:$0xff]
    %v2926 = vld [vmem:[%s2919 + $0x30] sm:$0xff]
    %v2927 = vld [vmem:[%s2919 + $0x38] sm:$0xff]
    %v2928 = vld [vmem:[%s2919 + $0x40] sm:$0xff]
    %v2929 = vld [vmem:[%s2919 + $0x48] sm:$0xff]
    %v2930 = vld [vmem:[%s2919 + $0x50] sm:$0xff]
    %v2931 = vld [vmem:[%s2919 + $0x58] sm:$0xff]
    %v2932 = vld [vmem:[%s2919 + $0x60] sm:$0xff]
    %v2933 = vld [vmem:[%s2919 + $0x68] sm:$0xff]
    %v2934 = vld [vmem:[%s2919 + $0x70] sm:$0xff]
    %v2935 = vld [vmem:[%s2919 + $0x78] sm:$0xff]
    %s2936 = scalar_lea.vmem %s22, 1
    %v2937 = vld [vmem:[%s2936] sm:$0x1]
    %v2939 = vperm.slane %v2937, 0
    %v2942 = vsel %vm156, %v2917, 0
    %v2945 = vsel %vm156, %v2918, 0
    %v2948 = vsel %vm156, %v2920, 0
    %v2951 = vsel %vm156, %v2921, 0
    %v2954 = vsel %vm156, %v2922, 0
    %v2957 = vsel %vm156, %v2923, 0
    %v2960 = vsel %vm156, %v2924, 0
    %v2963 = vsel %vm156, %v2925, 0
    %v2966 = vsel %vm156, %v2926, 0
    %v2969 = vsel %vm156, %v2927, 0
    %v2972 = vsel %vm156, %v2928, 0
    %v2975 = vsel %vm156, %v2929, 0
    %v2978 = vsel %vm156, %v2930, 0
    %v2981 = vsel %vm156, %v2931, 0
    %v2984 = vsel %vm156, %v2932, 0
    %v2987 = vsel %vm156, %v2933, 0
    %v2990 = vsel %vm156, %v2934, 0
    %v2993 = vsel %vm156, %v2935, 0
    %2995 = vmatpush.xpose.msra.mxu0 %v2993
    %2996 = vmatpush.xpose.msra.mxu0 %v2990
    %2997 = vmatpush.xpose.msra.mxu0 %v2987
    %2998 = vmatpush.xpose.msra.mxu0 %v2984
    %2999 = vmatpush.xpose.msra.mxu0 %v2981
    %3000 = vmatpush.xpose.msra.mxu0 %v2978
    %3001 = vmatpush.xpose.msra.mxu0 %v2975
    %3002 = vmatpush.xpose.msra.mxu0 %v2972
    %3003 = vmatpush.xpose.msra.mxu0 %v2969
    %3004 = vmatpush.xpose.msra.mxu0 %v2966
    %3005 = vmatpush.xpose.msra.mxu0 %v2963
    %3006 = vmatpush.xpose.msra.mxu0 %v2960
    %3007 = vmatpush.xpose.msra.mxu0 %v2957
    %3008 = vmatpush.xpose.msra.mxu0 %v2954
    %3009 = vmatpush.xpose.msra.mxu0 %v2951
    %3010 = vmatpush.xpose.msra.mxu0 %v2948
    %3011 = vmatmul.f32.gmra.mxu0 %v2942
    %v3012 = vpop.f32.mrf.mxu0
    %v3013 = vadd.f32 %v2939, %v3012
    %3014 = vmatmul.f32.gmra.mxu0 %v2945
    %v3015 = vpop.f32.mrf.mxu0
    %v3016 = vadd.f32 %v2939, %v3015
    %3017 = vdwg.mxu0
    %v3018 = vmul.f32 %v3013, 0.5
    %v3019 = vmul.f32 %v3016, 0.5
    %v3020 = vmul.f32 %v3013, 0.70710677
    %v3021 = vmul.f32 %v3016, 0.70710677
    %vm3022 = vcmp.ge.f32.partialorder %v3020, 0.0
    %vm3023 = vcmp.ge.f32.partialorder %v3021, 0.0
    %v3024 = vsel %vm3022, 1.0, -1.0
    %v3025 = vsel %vm3023, 1.0, -1.0
    %v3026 = vand.u32 2147483647, %v3020
    %v3027 = vand.u32 2147483647, %v3021
    %v3028 = vmul.f32 %v3026, 0.3275911
    %v3029 = vmul.f32 %v3027, 0.3275911
    %v3030 = vadd.f32 %v3028, 1.0
    %v3031 = vadd.f32 %v3029, 1.0
    %v3032 = vrcp.pop %v3030
    %v3033 = vmul.f32 %v3030, %v3032
    %v3034 = vsub.f32 1.0, %v3033
    %v3035 = vmul.f32 %v3032, %v3034
    %v3036 = vadd.f32 %v3032, %v3035
    %vm3037 = vweird.f32 %v3030
    %vm3038 = vweird.f32 %v3032
    %vm3039 = vmor %vm3037, %vm3038
    %v3040 = vsel %vm3039, %v3032, %v3036
    %v3041 = vand.u32 2147483647, %v3030
    %vm3042 = vcmp.eq.f32.partialorder %v3041, 8.507059e+37
    %v3043 = vand.u32 %v3030, 2147483648
    %v3044 = vor.u32 1.1754944e-38, %v3043
    %v3045 = vsel %vm3042, %v3044, %v3040
    %v3046 = vmul.f32 1.0, %v3045
    %v3047 = vrcp.pop %v3031
    %v3048 = vmul.f32 %v3031, %v3047
    %v3049 = vsub.f32 1.0, %v3048
    %v3050 = vmul.f32 %v3047, %v3049
    %v3051 = vadd.f32 %v3047, %v3050
    %vm3052 = vweird.f32 %v3031
    %vm3053 = vweird.f32 %v3047
    %vm3054 = vmor %vm3052, %vm3053
    %v3055 = vsel %vm3054, %v3047, %v3051
    %v3056 = vand.u32 2147483647, %v3031
    %vm3057 = vcmp.eq.f32.partialorder %v3056, 8.507059e+37
    %v3058 = vand.u32 %v3031, 2147483648
    %v3059 = vor.u32 1.1754944e-38, %v3058
    %v3060 = vsel %vm3057, %v3059, %v3055
    %v3061 = vmul.f32 1.0, %v3060
    %v3062 = vmul.f32 %v3046, 1.0614054
    %v3063 = vmul.f32 %v3061, 1.0614054
    %v3064 = vadd.f32 %v3062, -1.4531521
    %v3065 = vadd.f32 %v3063, -1.4531521
    %v3066 = vmul.f32 %v3064, %v3046
    %v3067 = vmul.f32 %v3065, %v3061
    %v3068 = vadd.f32 %v3066, 1.4214138
    %v3069 = vadd.f32 %v3067, 1.4214138
    %v3070 = vmul.f32 %v3068, %v3046
    %v3071 = vmul.f32 %v3069, %v3061
    %v3072 = vadd.f32 %v3070, -0.28449672
    %v3073 = vadd.f32 %v3071, -0.28449672
    %v3074 = vmul.f32 %v3072, %v3046
    %v3075 = vmul.f32 %v3073, %v3061
    %v3076 = vadd.f32 %v3074, 0.2548296
    %v3077 = vadd.f32 %v3075, 0.2548296
    %v3078 = vmul.f32 %v3076, %v3046
    %v3079 = vmul.f32 %v3077, %v3061
    %v3080 = vsub.f32 0.0, %v3026
    %v3081 = vsub.f32 0.0, %v3027
    %v3082 = vmul.f32 %v3080, %v3026
    %v3083 = vmul.f32 %v3081, %v3027
    %v3084 = vmul.f32 %v3082, 1.442695
    %v3085 = vpow.pop %v3084
    %v3086 = vmul.f32 %v3083, 1.442695
    %v3087 = vpow.pop %v3086
    %v3088 = vmul.f32 %v3078, %v3085
    %v3089 = vmul.f32 %v3079, %v3087
    %v3090 = vsub.f32 1.0, %v3088
    %v3091 = vsub.f32 1.0, %v3089
    %v3092 = vmul.f32 %v3024, %v3090
    %v3093 = vmul.f32 %v3025, %v3091
    %v3094 = vadd.f32 %v3092, 1.0
    %v3095 = vadd.f32 %v3093, 1.0
    %v3096 = vmul.f32 %v3018, %v3094
    %v3097 = vmul.f32 %v3019, %v3095
    %s3098 = scalar_lea.vmem %s23, 32
    %v3099 = vld [vmem:[%s3098] sm:$0xff]
    %v3100 = vld [vmem:[%s3098 + $0x8] sm:$0xff]
    %v3101 = vld [vmem:[%s3098 + $0x10] sm:$0xff]
    %v3102 = vld [vmem:[%s3098 + $0x18] sm:$0xff]
    %3103 = vmatpush.xpose.msra.mxu0 0.0
    %3104 = vmatpush.xpose.msra.mxu0 0.0
    %3105 = vmatpush.xpose.msra.mxu0 0.0
    %3106 = vmatpush.xpose.msra.mxu0 0.0
    %3107 = vmatpush.xpose.msra.mxu0 0.0
    %3108 = vmatpush.xpose.msra.mxu0 0.0
    %3109 = vmatpush.xpose.msra.mxu0 0.0
    %3110 = vmatpush.xpose.msra.mxu0 0.0
    %3111 = vmatpush.xpose.msra.mxu0 0.0
    %3112 = vmatpush.xpose.msra.mxu0 0.0
    %3113 = vmatpush.xpose.msra.mxu0 0.0
    %3114 = vmatpush.xpose.msra.mxu0 0.0
    %3115 = vmatpush.xpose.msra.mxu0 %v3102
    %3116 = vmatpush.xpose.msra.mxu0 %v3101
    %3117 = vmatpush.xpose.msra.mxu0 %v3100
    %3118 = vmatpush.xpose.msra.mxu0 %v3099
    %3119 = vmatmul.f32.gmra.mxu0 %v3096
    %v3120 = vpop.f32.mrf.mxu0
    %v3121 = vadd.f32 0.0, %v3120
    %3122 = vmatmul.f32.gmra.mxu0 %v3097
    %v3123 = vpop.f32.mrf.mxu0
    %v3124 = vadd.f32 0.0, %v3123
    %3125 = vdwg.mxu0
    %v3126 = vadd.f32 %v2859, %v3121
    %v3127 = vadd.f32 %v2860, %v3124
    %s3128 = scalar_lea.vmem %s24, 1
    %v3129 = vld [vmem:[%s3128] sm:$0x1]
    %v3131 = vperm.slane %v3129, 0
    %v3133 = vadd.f32 %v3126, %v3131
    %v3134 = vadd.f32 %v3127, %v3131
    %v3135 = vld [vmem:[%s25] sm:$0xff]
    %v3136 = vld [vmem:[%s25 + $0x8] sm:$0xff]
    %v3137 = vld [vmem:[%s25 + $0x10] sm:$0xff]
    %v3138 = vld [vmem:[%s25 + $0x18] sm:$0xff]
    %v3139 = vld [vmem:[%s25 + $0x20] sm:$0xff]
    %v3140 = vld [vmem:[%s25 + $0x28] sm:$0xff]
    %v3141 = vld [vmem:[%s25 + $0x30] sm:$0xff]
    %v3142 = vld [vmem:[%s25 + $0x38] sm:$0xff]
    %v3144 = vsel %vm156, %v3133, 0
    %v3147 = vsel %vm156, %v3134, 0
    %v3150 = vsel %vm156, %v3135, 0
    %v3153 = vsel %vm156, %v3136, 0
    %v3156 = vsel %vm156, %v3137, 0
    %v3159 = vsel %vm156, %v3138, 0
    %v3162 = vsel %vm156, %v3139, 0
    %v3165 = vsel %vm156, %v3140, 0
    %v3168 = vsel %vm156, %v3141, 0
    %v3171 = vsel %vm156, %v3142, 0
    %3173 = vmatpush.xpose.msra.mxu0 0.0
    %3174 = vmatpush.xpose.msra.mxu0 0.0
    %3175 = vmatpush.xpose.msra.mxu0 0.0
    %3176 = vmatpush.xpose.msra.mxu0 0.0
    %3177 = vmatpush.xpose.msra.mxu0 0.0
    %3178 = vmatpush.xpose.msra.mxu0 0.0
    %3179 = vmatpush.xpose.msra.mxu0 0.0
    %3180 = vmatpush.xpose.msra.mxu0 0.0
    %3181 = vmatpush.xpose.msra.mxu0 %v3171
    %3182 = vmatpush.xpose.msra.mxu0 %v3168
    %3183 = vmatpush.xpose.msra.mxu0 %v3165
    %3184 = vmatpush.xpose.msra.mxu0 %v3162
    %3185 = vmatpush.xpose.msra.mxu0 %v3159
    %3186 = vmatpush.xpose.msra.mxu0 %v3156
    %3187 = vmatpush.xpose.msra.mxu0 %v3153
    %3188 = vmatpush.xpose.msra.mxu0 %v3150
    %3189 = vmatmul.f32.gmra.mxu0 %v3144
    %v3190 = vpop.f32.mrf.mxu0
    %v3191 = vadd.f32 0.0, %v3190
    %3192 = vmatmul.f32.gmra.mxu0 %v3147
    %v3193 = vpop.f32.mrf.mxu0
    %v3194 = vadd.f32 0.0, %v3193
    %3195 = vdwg.mxu0
    %3196 = vst.msk [vmem:[#allocation4] sm:$0xff] %vm113, %v3191
    %3197 = vst.msk [vmem:[#allocation4 + $0x8] sm:$0xff] %vm113, %v3194
    %v3198 = vsel %vm113, %v3191, -inf
    %3199 = vmax.xlane.f32.xlu0 %v3198
    %v3200 = vpop.xlane.xlu0 %3199
    %v3201 = vsel %vm113, %v3194, -inf
    %3202 = vmax.xlane.f32.xlu0 %v3201
    %v3203 = vpop.xlane.xlu0 %3202
    %v3204 = vsub.f32 %v3191, %v3200
    %v3205 = vsub.f32 %v3194, %v3203
    %v3206 = vmul.f32 %v3204, 1.442695
    %v3207 = vpow.pop %v3206
    %v3208 = vmul.f32 %v3205, 1.442695
    %v3209 = vpow.pop %v3208
    %v3210 = vsel %vm113, %v3207, 0.0
    %3211 = vadd.xlane.f32.xlu0 %v3210
    %v3212 = vpop.xlane.xlu0 %3211
    %v3213 = vsel %vm113, %v3209, 0.0
    %3214 = vadd.xlane.f32.xlu0 %v3213
    %v3215 = vpop.xlane.xlu0 %3214
    %v3216 = vlog2.pop %v3212
    %v3217 = vmul.f32 %v3216, 0.6931472
    %v3218 = vlog2.pop %v3215
    %v3219 = vmul.f32 %v3218, 0.6931472
    %v3220 = vadd.f32 %v3200, %v3217
    %v3221 = vadd.f32 %v3203, %v3219
    %v3222 = vsub.f32 %v3191, %v3220
    %v3223 = vsub.f32 %v3194, %v3221
    %3224 = vset.pattern.permute.xlu0 0
    %3225 = vperm.xlu0 %3224, %v89
    %v3226 = vpop.permute.xlu0 %3225
    %3227 = vset.pattern.permute.xlu0 0
    %3228 = vperm.xlu0 %3227, %v90
    %v3229 = vpop.permute.xlu0 %3228
    %vm3230 = vcmp.eq.s32.totalorder %v92, %v3226
    %vm3231 = vcmp.eq.s32.totalorder %v92, %v3229
    %v3232 = vsel %vm3230, 1, 0
    %v3233 = vsel %vm3231, 1, 0
    %v3234 = vcvt.s32.f32 %v3232
    %v3235 = vcvt.s32.f32 %v3233
    %v3236 = vmul.f32 %v3222, %v3234
    %v3237 = vmul.f32 %v3223, %v3235
    %v3238 = vsel %vm113, %v3236, 0.0
    %3239 = vadd.xlane.f32.xlu0 %v3238
    %v3240 = vpop.xlane.xlu0 %3239
    %v3241 = vsel %vm113, %v3237, 0.0
    %3242 = vadd.xlane.f32.xlu0 %v3241
    %v3243 = vpop.xlane.xlu0 %3242
    %v3244 = vsub.f32 0.0, %v3240
    %v3245 = vsub.f32 0.0, %v3243
    %v3246 = vadd.f32 %v3244, %v3245
    %v3247 = vrot.slane %v3246, 4
    %v3248 = vadd.f32 %v3246, %v3247
    %v3249 = vrot.slane %v3248, 2
    %v3250 = vadd.f32 %v3248, %v3249
    %v3251 = vrot.slane %v3250, 1
    %v3252 = vadd.f32 %v3250, %v3251
    %v3253 = vmul.f32 %v3252, 0.0625
    %vm3254 = vcmask 0
    %3255 = vst.msk [vmem:[#allocation2] sm:$0x1] %vm3254, %v3253
    // Predicated region
    $region106: #{forward.1} parent=1 // pred_check
      _
    $region107: #{forward.1} parent=1 // pred_check_branch
      %3257 = sbr.rel (0) target = $region109
    $region108: #{forward.1} parent=1 // pred_region
      %3259 = vsyncadd [#allocation3], 0
      %s3261 = sshll.u32 [#allocation2], 4
      %s3262 = int_to_ptr.vmem [resolvable:$true] %s3261
      %s3263 = sshll.u32 %s26, 4
      %s3264 = int_to_ptr.hbm [resolvable:$true] %s3263
      %3266 = dma.vmem_to_hbm [thread:$0]  %s3262, 16, %s3264, [#allocation3]
    $region109: #{forward.1} parent=1 // pred_fallthru
      _
    // Predicated region
    $region110: #{forward.1} parent=1 // pred_check
      _
    $region111: #{forward.1} parent=1 // pred_check_branch
      %3268 = sbr.rel (0) target = $region113
    $region112: #{forward.1} parent=1 // pred_region
      %3270 = vsyncadd [#allocation5], 0
      %s3271 = sshll.u32 [#allocation4], 4
      %s3272 = int_to_ptr.vmem [resolvable:$true] %s3271
      %s3273 = sshll.u32 %s27, 4
      %s3274 = int_to_ptr.hbm [resolvable:$true] %s3273
      %3279 = dma.vmem_to_hbm [thread:$0]  %s3272, 256, %s3274, [#allocation5], 128, 128, 8
    $region113: #{forward.1} parent=1 // pred_fallthru
      _
    // Predicated region
    $region114: #{forward.1} parent=1 // pred_check
      _
    $region115: #{forward.1} parent=1 // pred_check_branch
      %3281 = sbr.rel (0) target = $region117
    $region116: #{forward.1} parent=1 // pred_region
      %3283 = dma.done [#allocation3], 16
    $region117: #{forward.1} parent=1 // pred_fallthru
      _
    // Predicated region
    $region118: #{forward.1} parent=1 // pred_check
      _
    $region119: #{forward.1} parent=1 // pred_check_branch
      %3285 = sbr.rel (0) target = $region121
    $region120: #{forward.1} parent=1 // pred_region
      %3287 = dma.done [#allocation5], 256
    $region121: #{forward.1} parent=1 // pred_fallthru
      _
    %3288 = vsyncpa [#allocation3], 1
    %3289 = vsyncpa [#allocation5], 1

</llo_original>
